<compile_context>
chip_gen: v7x
topology: tpu7x:2x2x1
jax: 0.10.0
libtpu: 0.0.40
codegen_flags: <defaults>
</compile_context>

<pallas_src>
import functools

import jax
import jax.numpy as jnp
from jax.experimental import pallas as pl
from jax.experimental.pallas import tpu as pltpu

DIM = 2   # input features
H = 10    # hidden width


def _round_up(a: int, b: int) -> int:
    return ((a + b - 1) // b) * b


def netf_kernel(x_ref, w1_ref, b1_ref, w2_ref, b2_ref, w3_ref, b3_ref, o_ref):
    """One batch tile, lane-dense layout.

    x_ref : (DIM, TILE_N)   input points, batch on lanes
    w1    : (H, DIM)   b1 : (H, 1)
    w2    : (H, H)     b2 : (H, 1)
    w3    : (H, 1)     b3 : (1, 1)
    o_ref : (1, TILE_N)
    """
    x = x_ref[...]                                              # (DIM, TILE_N)
    w1 = w1_ref[...]                                            # (H, DIM)

    # fc1 + sin.  K=2, so two VPU broadcast-FMAs beat a degenerate MXU matmul.
    h1 = jnp.sin(w1[:, 0:1] * x[0:1, :]
                 + w1[:, 1:2] * x[1:2, :]
                 + b1_ref[...])                                 # (H, TILE_N)

    # fc2 + sin: the only real matmul (10x10) -> MXU, keeping VPU slots free
    # for the sin polynomial evaluation.
    h2 = jnp.sin(
        jnp.dot(w2_ref[...], h1, preferred_element_type=jnp.float32)
        + b2_ref[...])                                          # (H, TILE_N)

    # fc3 with the partial residual out[:, :DIM] += x folded in:
    #   W3 @ (h2 + pad(x)) == W3 @ h2 + W3[:, :DIM] @ x
    # (exact up to fp associativity).  Both terms are cheap sublane reductions.
    w3 = w3_ref[...]                                            # (H, 1)
    y = (jnp.sum(w3 * h2, axis=0, keepdims=True)
         + jnp.sum(w3[0:DIM, :] * x, axis=0, keepdims=True)
         + b3_ref[...])                                         # (1, TILE_N)

    o_ref[...] = y


@functools.partial(jax.jit, static_argnames=("tile_n",))
def netf_forward(x, params, *, tile_n=65536):
    """NETF forward.  x: (N, DIM) f32 -> (N, 1) f32 (matches the PyTorch module).

    tile_n: batch points per grid step.  64K is v7x-safe (64 MiB VMEM); on
    v5e/v6e (128 MiB VMEM) it can be raised to 128K-256K.
    """
    w1, b1, w2, b2, w3, b3 = params      # PyTorch layout: w (out, in), b (out,)
    n = x.shape[0]

    # Batch tile: multiple of 128 lanes, no bigger than the (padded) batch.
    tile_n = min(tile_n, _round_up(n, 128))
    n_pad = _round_up(n, tile_n)         # pad so every store is unmasked
    grid = (n_pad // tile_n,)

    # Lane-dense layout: batch on the last (lane) axis.
    x_t = x.T                            # (DIM, N)
    if n_pad != n:
        x_t = jnp.pad(x_t, ((0, 0), (0, n_pad - n)))

    # Advisory cost hint for the XLA scheduler (per whole call).
    cost = pl.CostEstimate(
        flops=2 * n_pad * (DIM * H + H * H + H + DIM),
        transcendentals=2 * H * n_pad,
        bytes_accessed=4 * (n_pad * (DIM + 1) + H * DIM + H * H + H + 3 * H + 1),
    )

    y_t = pl.pallas_call(
        netf_kernel,
        out_shape=jax.ShapeDtypeStruct((1, n_pad), jnp.float32),
        grid_spec=pltpu.PrefetchScalarGridSpec(
            num_scalar_prefetch=0,
            grid=grid,
            in_specs=[
                # batch tile: new block every grid step
                pl.BlockSpec((DIM, tile_n), lambda i: (0, i)),
                # weights/biases: constant index_map -> DMA'd once, VMEM-resident
                pl.BlockSpec((H, DIM), lambda i: (0, 0)),   # w1
                pl.BlockSpec((H, 1), lambda i: (0, 0)),     # b1
                pl.BlockSpec((H, H), lambda i: (0, 0)),     # w2
                pl.BlockSpec((H, 1), lambda i: (0, 0)),     # b2
                pl.BlockSpec((H, 1), lambda i: (0, 0)),     # w3 (as a column)
                pl.BlockSpec((1, 1), lambda i: (0, 0)),     # b3
            ],
            out_specs=pl.BlockSpec((1, tile_n), lambda i: (0, i)),
        ),
        compiler_params=pltpu.CompilerParams(
            dimension_semantics=("parallel",),   # shard batch tiles over TCs (v7x)
            vmem_limit_bytes=32 * 1024 * 1024,
        ),
        cost_estimate=cost,
    )(x_t, w1, b1.reshape(H, 1), w2, b2.reshape(H, 1),
      w3.reshape(H, 1), b3.reshape(1, 1))

    # (1, n_pad) -> (N, 1): slice off the pad; the "transpose" back is a free
    # reshape ((1, N) and (N, 1) have identical row-major order).
    return y_t[:, :n].reshape(n, 1)


def init_params(key):
    """Deterministic PyTorch-Linear-style init: U(-1/sqrt(fan_in), 1/sqrt(fan_in)).
    Weights stored in PyTorch layout (out_features, in_features)."""
    ks = jax.random.split(key, 6)

    def lin(kw, kb, fan_in, fan_out):
        bound = 1.0 / (fan_in ** 0.5)
        w = jax.random.uniform(kw, (fan_out, fan_in), jnp.float32, -bound, bound)
        b = jax.random.uniform(kb, (fan_out,), jnp.float32, -bound, bound)
        return w, b

    w1, b1 = lin(ks[0], ks[1], DIM, H)
    w2, b2 = lin(ks[2], ks[3], H, H)
    w3, b3 = lin(ks[4], ks[5], H, 1)
    return (w1, b1, w2, b2, w3, b3)


def netf_reference(x, params):
    """Pure-JAX reference mirroring the PyTorch forward (for sanity check)."""
    w1, b1, w2, b2, w3, b3 = params
    out = jnp.sin(x @ w1.T + b1)
    out = jnp.sin(out @ w2.T + b2)
    out = out.at[:, 0:DIM].add(x)
    return out @ w3.T + b3


if __name__ == "__main__":
    key = jax.random.PRNGKey(0)
    kx, kp = jax.random.split(key)

    N = 1000  # small batch of collocation points in R^2 (exercises lane padding)
    x = jax.random.normal(kx, (N, DIM), dtype=jnp.float32)
    params = init_params(kp)

    y = netf_forward(x, params)
    y = jax.block_until_ready(y)

    y_ref = netf_reference(x, params)
    assert y.shape == (N, 1)
    assert jnp.allclose(y, y_ref, atol=1e-4, rtol=1e-4), "mismatch vs reference"

    print("KERNEL_OK")
</pallas_src>

<mosaic_0001>
module attributes {stable_mosaic.version = 11 : i64} {
  func.func @netf_kernel(%arg0: i32, %arg1: memref<2x1024xf32, #tpu.memory_space<vmem>>, %arg2: memref<10x2xf32, #tpu.memory_space<vmem>>, %arg3: memref<10x1xf32, #tpu.memory_space<vmem>>, %arg4: memref<10x10xf32, #tpu.memory_space<vmem>>, %arg5: memref<10x1xf32, #tpu.memory_space<vmem>>, %arg6: memref<10x1xf32, #tpu.memory_space<vmem>>, %arg7: memref<1x1xf32, #tpu.memory_space<vmem>>, %arg8: memref<1x1024xf32, #tpu.memory_space<vmem>>) attributes {dimension_semantics = [#tpu.dimension_semantics<parallel>], iteration_bounds = array<i64: 1>, scalar_prefetch = 0 : i64, scratch_operands = 0 : i64, tpu.core_type = #tpu.core_type<tc>, window_params = [{transform_indices = @transform_0, window_bounds = array<i64: 2, 1024>}, {pipeline_mode = #tpu.pipeline_mode<synchronous>, transform_indices = @transform_1, window_bounds = array<i64: 10, 2>}, {pipeline_mode = #tpu.pipeline_mode<synchronous>, transform_indices = @transform_2, window_bounds = array<i64: 10, 1>}, {pipeline_mode = #tpu.pipeline_mode<synchronous>, transform_indices = @transform_3, window_bounds = array<i64: 10, 10>}, {pipeline_mode = #tpu.pipeline_mode<synchronous>, transform_indices = @transform_4, window_bounds = array<i64: 10, 1>}, {pipeline_mode = #tpu.pipeline_mode<synchronous>, transform_indices = @transform_5, window_bounds = array<i64: 10, 1>}, {pipeline_mode = #tpu.pipeline_mode<synchronous>, transform_indices = @transform_6, window_bounds = array<i64: 1, 1>}, {transform_indices = @transform_7, window_bounds = array<i64: 1, 1024>}]} {
    %c0 = arith.constant 0 : index
    %c0_0 = arith.constant 0 : index
    %0 = vector.load %arg1[%c0, %c0_0] : memref<2x1024xf32, #tpu.memory_space<vmem>>, vector<2x1024xf32>
    %c0_1 = arith.constant 0 : index
    %c0_2 = arith.constant 0 : index
    %1 = vector.load %arg2[%c0_1, %c0_2] : memref<10x2xf32, #tpu.memory_space<vmem>>, vector<10x2xf32>
    %2 = vector.extract_strided_slice %1 {offsets = [0, 0], sizes = [10, 1], strides = [1, 1]} : vector<10x2xf32> to vector<10x1xf32>
    %3 = vector.extract_strided_slice %0 {offsets = [0, 0], sizes = [1, 1024], strides = [1, 1]} : vector<2x1024xf32> to vector<1x1024xf32>
    %4 = vector.broadcast %2 : vector<10x1xf32> to vector<10x1024xf32>
    %5 = vector.broadcast %3 : vector<1x1024xf32> to vector<10x1024xf32>
    %6 = arith.mulf %4, %5 : vector<10x1024xf32>
    %7 = vector.extract_strided_slice %1 {offsets = [0, 1], sizes = [10, 1], strides = [1, 1]} : vector<10x2xf32> to vector<10x1xf32>
    %8 = vector.extract_strided_slice %0 {offsets = [1, 0], sizes = [1, 1024], strides = [1, 1]} : vector<2x1024xf32> to vector<1x1024xf32>
    %9 = vector.broadcast %7 : vector<10x1xf32> to vector<10x1024xf32>
    %10 = vector.broadcast %8 : vector<1x1024xf32> to vector<10x1024xf32>
    %11 = arith.mulf %9, %10 : vector<10x1024xf32>
    %12 = arith.addf %6, %11 : vector<10x1024xf32>
    %c0_3 = arith.constant 0 : index
    %c0_4 = arith.constant 0 : index
    %13 = vector.load %arg3[%c0_3, %c0_4] : memref<10x1xf32, #tpu.memory_space<vmem>>, vector<10x1xf32>
    %14 = vector.broadcast %13 : vector<10x1xf32> to vector<10x1024xf32>
    %15 = arith.addf %12, %14 : vector<10x1024xf32>
    %16 = math.sin %15 : vector<10x1024xf32>
    %c0_5 = arith.constant 0 : index
    %c0_6 = arith.constant 0 : index
    %17 = vector.load %arg4[%c0_5, %c0_6] : memref<10x10xf32, #tpu.memory_space<vmem>>, vector<10x10xf32>
    %cst = arith.constant dense<0.000000e+00> : vector<10x1024xf32>
    %18 = tpu.matmul %17, %16, %cst {dimension_numbers = #tpu.dot_dimension_numbers<[1], [0], [0], [1], [0, 0, 1, 1], [], []>} : vector<10x10xf32>, vector<10x1024xf32>, vector<10x1024xf32> -> vector<10x1024xf32>
    %c0_7 = arith.constant 0 : index
    %c0_8 = arith.constant 0 : index
    %19 = vector.load %arg5[%c0_7, %c0_8] : memref<10x1xf32, #tpu.memory_space<vmem>>, vector<10x1xf32>
    %20 = vector.broadcast %19 : vector<10x1xf32> to vector<10x1024xf32>
    %21 = arith.addf %18, %20 : vector<10x1024xf32>
    %22 = math.sin %21 : vector<10x1024xf32>
    %c0_9 = arith.constant 0 : index
    %c0_10 = arith.constant 0 : index
    %23 = vector.load %arg6[%c0_9, %c0_10] : memref<10x1xf32, #tpu.memory_space<vmem>>, vector<10x1xf32>
    %24 = vector.broadcast %23 : vector<10x1xf32> to vector<10x1024xf32>
    %25 = arith.mulf %24, %22 : vector<10x1024xf32>
    %cst_11 = arith.constant dense<0.000000e+00> : vector<1024xf32>
    %26 = vector.multi_reduction <add>, %25, %cst_11 [0] : vector<10x1024xf32> to vector<1024xf32>
    %27 = vector.shape_cast %26 : vector<1024xf32> to vector<1x1024xf32>
    %28 = vector.extract_strided_slice %23 {offsets = [0, 0], sizes = [2, 1], strides = [1, 1]} : vector<10x1xf32> to vector<2x1xf32>
    %29 = vector.broadcast %28 : vector<2x1xf32> to vector<2x1024xf32>
    %30 = arith.mulf %29, %0 : vector<2x1024xf32>
    %cst_12 = arith.constant dense<0.000000e+00> : vector<1024xf32>
    %31 = vector.multi_reduction <add>, %30, %cst_12 [0] : vector<2x1024xf32> to vector<1024xf32>
    %32 = vector.shape_cast %31 : vector<1024xf32> to vector<1x1024xf32>
    %33 = arith.addf %27, %32 : vector<1x1024xf32>
    %c0_13 = arith.constant 0 : index
    %c0_14 = arith.constant 0 : index
    %34 = vector.load %arg7[%c0_13, %c0_14] : memref<1x1xf32, #tpu.memory_space<vmem>>, vector<1x1xf32>
    %35 = vector.broadcast %34 : vector<1x1xf32> to vector<1x1024xf32>
    %36 = arith.addf %33, %35 : vector<1x1024xf32>
    %c0_15 = arith.constant 0 : index
    %c0_16 = arith.constant 0 : index
    %37 = vector.load %arg8[%c0_15, %c0_16] : memref<1x1024xf32, #tpu.memory_space<vmem>>, vector<1x1024xf32>
    tpu.vector_store %arg8[%c0_15, %c0_16], %36 {strides = array<i32>} : memref<1x1024xf32, #tpu.memory_space<vmem>>, vector<1x1024xf32>,
    return
  }
  func.func @transform_0(%arg0: i32) -> (i32, i32) {
    %c0_i32 = arith.constant 0 : i32
    %c0_i32_0 = arith.constant 0 : i32
    return %c0_i32, %arg0 : i32, i32
  }
  func.func @transform_1(%arg0: i32) -> (i32, i32) {
    %c0_i32 = arith.constant 0 : i32
    %c0_i32_0 = arith.constant 0 : i32
    %c0_i32_1 = arith.constant 0 : i32
    return %c0_i32, %c0_i32_0 : i32, i32
  }
  func.func @transform_2(%arg0: i32) -> (i32, i32) {
    %c0_i32 = arith.constant 0 : i32
    %c0_i32_0 = arith.constant 0 : i32
    %c0_i32_1 = arith.constant 0 : i32
    return %c0_i32, %c0_i32_0 : i32, i32
  }
  func.func @transform_3(%arg0: i32) -> (i32, i32) {
    %c0_i32 = arith.constant 0 : i32
    %c0_i32_0 = arith.constant 0 : i32
    %c0_i32_1 = arith.constant 0 : i32
    return %c0_i32, %c0_i32_0 : i32, i32
  }
  func.func @transform_4(%arg0: i32) -> (i32, i32) {
    %c0_i32 = arith.constant 0 : i32
    %c0_i32_0 = arith.constant 0 : i32
    %c0_i32_1 = arith.constant 0 : i32
    return %c0_i32, %c0_i32_0 : i32, i32
  }
  func.func @transform_5(%arg0: i32) -> (i32, i32) {
    %c0_i32 = arith.constant 0 : i32
    %c0_i32_0 = arith.constant 0 : i32
    %c0_i32_1 = arith.constant 0 : i32
    return %c0_i32, %c0_i32_0 : i32, i32
  }
  func.func @transform_6(%arg0: i32) -> (i32, i32) {
    %c0_i32 = arith.constant 0 : i32
    %c0_i32_0 = arith.constant 0 : i32
    %c0_i32_1 = arith.constant 0 : i32
    return %c0_i32, %c0_i32_0 : i32, i32
  }
  func.func @transform_7(%arg0: i32) -> (i32, i32) {
    %c0_i32 = arith.constant 0 : i32
    %c0_i32_0 = arith.constant 0 : i32
    return %c0_i32, %arg0 : i32, i32
  }
}

</mosaic_0001>

<llo_original>
// kernel: netf_forward.1
$region0: #{netf_forward.1}
  #allocation0 [shape = 'u32[]', space=smem, size = 0x4, offset = 0x4, fixed_abs, tag = 'smem constant byte address 0x4 - core index']
  #allocation1 [shape = 'u32[144,128]{1,0:T(1,128)}', space=vmem, size = 0x12000, scoped, tag = 'internal scratch']
  #allocation2 [shape = 'f32[1,1]{1,0:T(1,128)S(1)}', space=vmem, size = 0x200, scoped, tag = 'scoped memory for netf_forward.1']
  %s0 = inlined_call_operand.vmem [shape: f32[2,1024], index: 0, kind: input, shape index: {}]
  %s1 = inlined_call_operand.vmem [shape: f32[10,2], index: 1, kind: input, shape index: {}]
  %s2 = inlined_call_operand.vmem [shape: f32[10,1], index: 2, kind: input, shape index: {}]
  %s3 = inlined_call_operand.vmem [shape: f32[10,10], index: 3, kind: input, shape index: {}]
  %s4 = inlined_call_operand.vmem [shape: f32[10,1], index: 4, kind: input, shape index: {}]
  %s5 = inlined_call_operand.vmem [shape: f32[10,1], index: 5, kind: input, shape index: {}]
  %s6 = inlined_call_operand.<no memory space> [shape: f32[1,1], index: 6, kind: input, shape index: {}]
  %s7 = inlined_call_operand.vmem [shape: f32[1,1024], index: 7, kind: output, shape index: {}]
  %s8 = sld [smem:[#allocation0]]
  $region38: #{netf_forward.1} parent=0
    _
  %s10 = ssub.s32 1, %s8
  %s11 = scalar_select 0, %s10, %s8
  %v12 = vstv %s6
  %13 = vst [vmem:[#allocation2] sm:$0x1] %v12
  // Predicated region
  $region2: #{netf_forward.1} parent=0 // pred_check
    _
  $region3: #{netf_forward.1} parent=0 // pred_check_branch
    %15 = sbr.rel (0) target = $region5
  $region4: #{netf_forward.1} parent=0 // pred_region
    _
  $region5: #{netf_forward.1} parent=0 // pred_fallthru
    _
  // Predicated region
  $region6: #{netf_forward.1} parent=0 // pred_check
    _
  $region7: #{netf_forward.1} parent=0 // pred_check_branch
    %17 = sbr.rel (0) target = $region9
  $region8: #{netf_forward.1} parent=0 // pred_region
    _
  $region9: #{netf_forward.1} parent=0 // pred_fallthru
    _
  // Predicated region
  $region10: #{netf_forward.1} parent=0 // pred_check
    _
  $region11: #{netf_forward.1} parent=0 // pred_check_branch
    %19 = sbr.rel (0) target = $region13
  $region12: #{netf_forward.1} parent=0 // pred_region
    _
  $region13: #{netf_forward.1} parent=0 // pred_fallthru
    _
  // Predicated region
  $region14: #{netf_forward.1} parent=0 // pred_check
    _
  $region15: #{netf_forward.1} parent=0 // pred_check_branch
    %21 = sbr.rel (0) target = $region17
  $region16: #{netf_forward.1} parent=0 // pred_region
    _
  $region17: #{netf_forward.1} parent=0 // pred_fallthru
    _
  // Predicated region
  $region18: #{netf_forward.1} parent=0 // pred_check
    _
  $region19: #{netf_forward.1} parent=0 // pred_check_branch
    %23 = sbr.rel (0) target = $region21
  $region20: #{netf_forward.1} parent=0 // pred_region
    _
  $region21: #{netf_forward.1} parent=0 // pred_fallthru
    _
  // Predicated region
  $region22: #{netf_forward.1} parent=0 // pred_check
    _
  $region23: #{netf_forward.1} parent=0 // pred_check_branch
    %25 = sbr.rel (0) target = $region25
  $region24: #{netf_forward.1} parent=0 // pred_region
    _
  $region25: #{netf_forward.1} parent=0 // pred_fallthru
    _
  // Predicated region
  $region26: #{netf_forward.1} parent=0 // pred_check
    _
  $region27: #{netf_forward.1} parent=0 // pred_check_branch
    %27 = sbr.rel (0) target = $region29
  $region28: #{netf_forward.1} parent=0 // pred_region
    _
  $region29: #{netf_forward.1} parent=0 // pred_fallthru
    _
  %v28 = vld [vmem:[%s0] sm:$0xff]
  %v29 = vld [vmem:[%s0 + $0x8] sm:$0xff]
  %v30 = vld [vmem:[%s1] sm:$0xff]
  %v31 = vld [vmem:[%s1 + $0x8] sm:$0x3]
  %33 = vset.pattern.permute.xlu0 0
  %34 = vperm.xlu0 %33, %v30
  %v35 = vpop.permute.xlu0 %34
  %38 = vset.pattern.permute.xlu0 0
  %39 = vperm.xlu0 %38, %v31
  %v40 = vpop.permute.xlu0 %39
  %v44 = vlaneseq
  %v45 = vshrl.u32 %v44, 7
  %v46 = vsub.s32 0, %v45
  %v47 = vrot.slane %v28, %v46
  %v48 = vlaneseq
  %v49 = vshrl.u32 %v48, 7
  %v50 = vsub.s32 2, %v49
  %v51 = vrot.slane %v28, %v50
  %v52 = vlaneseq
  %v53 = vshrl.u32 %v52, 7
  %v54 = vsub.s32 4, %v53
  %v55 = vrot.slane %v28, %v54
  %v56 = vlaneseq
  %v57 = vshrl.u32 %v56, 7
  %v58 = vsub.s32 6, %v57
  %v59 = vrot.slane %v28, %v58
  %v60 = vlaneseq
  %v61 = vshrl.u32 %v60, 7
  %v62 = vsub.s32 0, %v61
  %v63 = vrot.slane %v29, %v62
  %v64 = vlaneseq
  %v65 = vshrl.u32 %v64, 7
  %v66 = vsub.s32 2, %v65
  %v67 = vrot.slane %v29, %v66
  %v68 = vlaneseq
  %v69 = vshrl.u32 %v68, 7
  %v70 = vsub.s32 4, %v69
  %v71 = vrot.slane %v29, %v70
  %v72 = vlaneseq
  %v73 = vshrl.u32 %v72, 7
  %v74 = vsub.s32 6, %v73
  %v75 = vrot.slane %v29, %v74
  %v84 = vlaneseq
  %v85 = vshrl.u32 %v84, 7
  %v86 = vsub.s32 0, %v85
  %v87 = vrot.slane %v47, %v86
  %v88 = vlaneseq
  %v89 = vshrl.u32 %v88, 7
  %v90 = vsub.s32 0, %v89
  %v91 = vrot.slane %v51, %v90
  %v92 = vlaneseq
  %v93 = vshrl.u32 %v92, 7
  %v94 = vsub.s32 0, %v93
  %v95 = vrot.slane %v55, %v94
  %v96 = vlaneseq
  %v97 = vshrl.u32 %v96, 7
  %v98 = vsub.s32 0, %v97
  %v99 = vrot.slane %v59, %v98
  %v100 = vlaneseq
  %v101 = vshrl.u32 %v100, 7
  %v102 = vsub.s32 0, %v101
  %v103 = vrot.slane %v63, %v102
  %v104 = vlaneseq
  %v105 = vshrl.u32 %v104, 7
  %v106 = vsub.s32 0, %v105
  %v107 = vrot.slane %v67, %v106
  %v108 = vlaneseq
  %v109 = vshrl.u32 %v108, 7
  %v110 = vsub.s32 0, %v109
  %v111 = vrot.slane %v71, %v110
  %v112 = vlaneseq
  %v113 = vshrl.u32 %v112, 7
  %v114 = vsub.s32 0, %v113
  %v115 = vrot.slane %v75, %v114
  %v116 = vmul.f32 %v35, %v87
  %v117 = vmul.f32 %v35, %v91
  %v118 = vmul.f32 %v35, %v95
  %v119 = vmul.f32 %v35, %v99
  %v120 = vmul.f32 %v35, %v103
  %v121 = vmul.f32 %v35, %v107
  %v122 = vmul.f32 %v35, %v111
  %v123 = vmul.f32 %v35, %v115
  %v124 = vmul.f32 %v40, %v87
  %v125 = vmul.f32 %v40, %v91
  %v126 = vmul.f32 %v40, %v95
  %v127 = vmul.f32 %v40, %v99
  %v128 = vmul.f32 %v40, %v103
  %v129 = vmul.f32 %v40, %v107
  %v130 = vmul.f32 %v40, %v111
  %v131 = vmul.f32 %v40, %v115
  %132 = vset.pattern.permute.xlu0 1
  %133 = vperm.xlu0 %132, %v30
  %v134 = vpop.permute.xlu0 %133
  %136 = vset.pattern.permute.xlu0 1
  %137 = vperm.xlu0 %136, %v31
  %v138 = vpop.permute.xlu0 %137
  %v140 = vlaneseq
  %v141 = vshrl.u32 %v140, 7
  %v142 = vsub.s32 1, %v141
  %v143 = vrot.slane %v28, %v142
  %v144 = vlaneseq
  %v145 = vshrl.u32 %v144, 7
  %v146 = vsub.s32 3, %v145
  %v147 = vrot.slane %v28, %v146
  %v148 = vlaneseq
  %v149 = vshrl.u32 %v148, 7
  %v150 = vsub.s32 5, %v149
  %v151 = vrot.slane %v28, %v150
  %v152 = vlaneseq
  %v153 = vshrl.u32 %v152, 7
  %v154 = vsub.s32 7, %v153
  %v155 = vrot.slane %v28, %v154
  %v156 = vlaneseq
  %v157 = vshrl.u32 %v156, 7
  %v158 = vsub.s32 1, %v157
  %v159 = vrot.slane %v29, %v158
  %v160 = vlaneseq
  %v161 = vshrl.u32 %v160, 7
  %v162 = vsub.s32 3, %v161
  %v163 = vrot.slane %v29, %v162
  %v164 = vlaneseq
  %v165 = vshrl.u32 %v164, 7
  %v166 = vsub.s32 5, %v165
  %v167 = vrot.slane %v29, %v166
  %v168 = vlaneseq
  %v169 = vshrl.u32 %v168, 7
  %v170 = vsub.s32 7, %v169
  %v171 = vrot.slane %v29, %v170
  %v180 = vlaneseq
  %v181 = vshrl.u32 %v180, 7
  %v182 = vsub.s32 1, %v181
  %v183 = vrot.slane %v143, %v182
  %v184 = vlaneseq
  %v185 = vshrl.u32 %v184, 7
  %v186 = vsub.s32 1, %v185
  %v187 = vrot.slane %v147, %v186
  %v188 = vlaneseq
  %v189 = vshrl.u32 %v188, 7
  %v190 = vsub.s32 1, %v189
  %v191 = vrot.slane %v151, %v190
  %v192 = vlaneseq
  %v193 = vshrl.u32 %v192, 7
  %v194 = vsub.s32 1, %v193
  %v195 = vrot.slane %v155, %v194
  %v196 = vlaneseq
  %v197 = vshrl.u32 %v196, 7
  %v198 = vsub.s32 1, %v197
  %v199 = vrot.slane %v159, %v198
  %v200 = vlaneseq
  %v201 = vshrl.u32 %v200, 7
  %v202 = vsub.s32 1, %v201
  %v203 = vrot.slane %v163, %v202
  %v204 = vlaneseq
  %v205 = vshrl.u32 %v204, 7
  %v206 = vsub.s32 1, %v205
  %v207 = vrot.slane %v167, %v206
  %v208 = vlaneseq
  %v209 = vshrl.u32 %v208, 7
  %v210 = vsub.s32 1, %v209
  %v211 = vrot.slane %v171, %v210
  %v212 = vmul.f32 %v134, %v183
  %v213 = vmul.f32 %v134, %v187
  %v214 = vmul.f32 %v134, %v191
  %v215 = vmul.f32 %v134, %v195
  %v216 = vmul.f32 %v134, %v199
  %v217 = vmul.f32 %v134, %v203
  %v218 = vmul.f32 %v134, %v207
  %v219 = vmul.f32 %v134, %v211
  %v220 = vmul.f32 %v138, %v183
  %v221 = vmul.f32 %v138, %v187
  %v222 = vmul.f32 %v138, %v191
  %v223 = vmul.f32 %v138, %v195
  %v224 = vmul.f32 %v138, %v199
  %v225 = vmul.f32 %v138, %v203
  %v226 = vmul.f32 %v138, %v207
  %v227 = vmul.f32 %v138, %v211
  %v228 = vadd.f32 %v116, %v212
  %v229 = vadd.f32 %v117, %v213
  %v230 = vadd.f32 %v118, %v214
  %v231 = vadd.f32 %v119, %v215
  %v232 = vadd.f32 %v120, %v216
  %v233 = vadd.f32 %v121, %v217
  %v234 = vadd.f32 %v122, %v218
  %v235 = vadd.f32 %v123, %v219
  %v236 = vadd.f32 %v124, %v220
  %v237 = vadd.f32 %v125, %v221
  %v238 = vadd.f32 %v126, %v222
  %v239 = vadd.f32 %v127, %v223
  %v240 = vadd.f32 %v128, %v224
  %v241 = vadd.f32 %v129, %v225
  %v242 = vadd.f32 %v130, %v226
  %v243 = vadd.f32 %v131, %v227
  %v244 = vld [vmem:[%s2] sm:$0xff]
  %v245 = vld [vmem:[%s2 + $0x8] sm:$0x3]
  %247 = vset.pattern.permute.xlu0 0
  %248 = vperm.xlu0 %247, %v244
  %v249 = vpop.permute.xlu0 %248
  %252 = vset.pattern.permute.xlu0 0
  %253 = vperm.xlu0 %252, %v245
  %v254 = vpop.permute.xlu0 %253
  %v256 = vadd.f32 %v228, %v249
  %v257 = vadd.f32 %v229, %v249
  %v258 = vadd.f32 %v230, %v249
  %v259 = vadd.f32 %v231, %v249
  %v260 = vadd.f32 %v232, %v249
  %v261 = vadd.f32 %v233, %v249
  %v262 = vadd.f32 %v234, %v249
  %v263 = vadd.f32 %v235, %v249
  %v264 = vadd.f32 %v236, %v254
  %v265 = vadd.f32 %v237, %v254
  %v266 = vadd.f32 %v238, %v254
  %v267 = vadd.f32 %v239, %v254
  %v268 = vadd.f32 %v240, %v254
  %v269 = vadd.f32 %v241, %v254
  %v270 = vadd.f32 %v242, %v254
  %v271 = vadd.f32 %v243, %v254
  %v272 = vand.u32 2147483647, %v256
  %vm273 = vcmp.le.f32.partialorder %v272, 0.7853982
  %vm274 = vcmp.lt.s32.totalorder %v256, 0
  %v275 = vand.u32 %v256, 2139095040
  %v276 = vshrl.u32 %v275, 23
  %v277 = vsub.s32 %v276, 127
  %v278 = vand.u32 2147483647, %v256
  %v279 = vand.u32 %v278, 8388607
  %v280 = vor.u32 %v279, 8388608
  %v281 = vsub.s32 0, %v280
  %v282 = vadd.s32 %v277, 1
  %vm283 = vcmp.gt.s32.totalorder %v282, 0
  %v284 = vsel %vm283, %v282, 0
  %v285 = vshrl.u32 %v284, 5
  %v286 = vand.u32 %v284, 31
  %v287 = vsub.s32 32, %v286
  %v288 = vshrl.u32 683565275, %v287
  %v289 = vshll.u32 683565275, %v286
  %v290 = vshrl.u32 2475754826, %v287
  %v291 = vor.u32 %v289, %v290
  %v292 = vshll.u32 2475754826, %v286
  %v293 = vshrl.u32 2131351028, %v287
  %v294 = vor.u32 %v292, %v293
  %v295 = vshll.u32 2131351028, %v286
  %v296 = vshrl.u32 2102212464, %v287
  %v297 = vor.u32 %v295, %v296
  %v298 = vshll.u32 2102212464, %v286
  %v299 = vshrl.u32 920167782, %v287
  %v300 = vor.u32 %v298, %v299
  %v301 = vshll.u32 920167782, %v286
  %v302 = vshrl.u32 1326507024, %v287
  %v303 = vor.u32 %v301, %v302
  %vm304 = vcmp.lt.s32.totalorder %v285, 1
  %vm305 = vcmp.lt.s32.totalorder %v285, 2
  %vm306 = vcmp.lt.s32.totalorder %v285, 3
  %vm307 = vcmp.lt.s32.totalorder %v285, 4
  %v308 = vsel %vm304, %v288, %v291
  %v309 = vsel %vm307, %v297, 2102212464
  %v310 = vsel %vm306, %v294, %v309
  %v311 = vsel %vm305, %v308, %v310
  %v312 = vsel %vm304, %v291, %v294
  %v313 = vsel %vm307, %v300, 920167782
  %v314 = vsel %vm306, %v297, %v313
  %v315 = vsel %vm305, %v312, %v314
  %v316 = vsel %vm304, %v294, %v297
  %v317 = vsel %vm307, %v303, 1326507024
  %v318 = vsel %vm306, %v300, %v317
  %v319 = vsel %vm305, %v316, %v318
  %v320 = vshll.u32 %v280, 8
  %v321 = vmul.u32.u64.compose %v320, %v319
  %v322 = vextract.low.u32 %v321
  %v323 = vextract.high.u32 %v321
  %v324 = vmul.u32.u64.compose %v320, %v315
  %v325 = vextract.low.u32 %v324
  %v326 = vextract.high.u32 %v324
  %v327 = vmul.u32 %v320, %v311
  %v328 = vadd.s32 %v323, %v325
  %vm329 = vc.u32 %v323, %v325
  %v330 = vadd.s32 %v326, 1
  %v331 = vsel %vm329, %v330, %v326
  %v332 = vadd.s32 %v327, %v331
  %v333 = vadd.s32 %v332, 536870912
  %v334 = vshrl.u32 %v333, 30
  %v335 = vshll.u32 %v334, 30
  %v336 = vsub.s32 %v332, %v335
  %vm337 = vcmp.lt.s32.totalorder %v336, 0
  %v338 = vsub.s32 0, %v336
  %v339 = vsel %vm337, %v338, %v336
  %v340 = vclz %v339
  %v341 = vsub.s32 %v340, 2
  %vm342 = vcmp.gt.s32.totalorder 0, %v341
  %v343 = vsel %vm342, 0, %v341
  %v344 = vsub.s32 32, %v343
  %v345 = vshll.u32 %v336, %v343
  %v346 = vshrl.u32 %v328, %v344
  %v347 = vor.u32 %v345, %v346
  %v348 = vsub.s32 4294967266, %v343
  %v349 = vadd.s32 %v348, 127
  %v350 = vshll.u32 %v349, 23
  %v351 = vor.u32 4788187, %v350
  %v352 = vand.u32 2147483647, %v351
  %v354 = vcvt.s32.f32 %v347
  %v355 = vmul.f32 %v354, %v352
  %v356 = vxor.u32 %v355, 2147483648
  %v357 = vsel %vm274, %v356, %v355
  %v358 = vsub.s32 4, %v334
  %v359 = vsel %vm274, %v358, %v334
  %v360 = vsel %vm273, %v256, %v357
  %v361 = vsel %vm273, 0, %v359
  %v362 = vcosq.f32.pop %v360
  %v363 = vsinq.f32.pop %v360
  %vm364 = vweird.f32 %v256
  %v365 = vadd.s32 %v361, 3
  %v366 = vand.u32 %v365, 3
  %vm367 = vcmp.lt.s32.totalorder %v366, 2
  %vm368 = vcmp.eq.s32.totalorder %v366, 0
  %v369 = vxor.u32 %v363, 2147483648
  %v370 = vsel %vm368, %v362, %v369
  %vm371 = vcmp.eq.s32.totalorder %v366, 2
  %v372 = vxor.u32 %v362, 2147483648
  %v373 = vsel %vm371, %v372, %v363
  %v374 = vsel %vm367, %v370, %v373
  %v375 = vsel %vm364, nan, %v374
  %v376 = vand.u32 2147483647, %v257
  %vm377 = vcmp.le.f32.partialorder %v376, 0.7853982
  %vm378 = vcmp.lt.s32.totalorder %v257, 0
  %v379 = vand.u32 %v257, 2139095040
  %v380 = vshrl.u32 %v379, 23
  %v381 = vsub.s32 %v380, 127
  %v382 = vand.u32 2147483647, %v257
  %v383 = vand.u32 %v382, 8388607
  %v384 = vor.u32 %v383, 8388608
  %v385 = vsub.s32 0, %v384
  %v386 = vadd.s32 %v381, 1
  %vm387 = vcmp.gt.s32.totalorder %v386, 0
  %v388 = vsel %vm387, %v386, 0
  %v389 = vshrl.u32 %v388, 5
  %v390 = vand.u32 %v388, 31
  %v391 = vsub.s32 32, %v390
  %v392 = vshrl.u32 683565275, %v391
  %v393 = vshll.u32 683565275, %v390
  %v394 = vshrl.u32 2475754826, %v391
  %v395 = vor.u32 %v393, %v394
  %v396 = vshll.u32 2475754826, %v390
  %v397 = vshrl.u32 2131351028, %v391
  %v398 = vor.u32 %v396, %v397
  %v399 = vshll.u32 2131351028, %v390
  %v400 = vshrl.u32 2102212464, %v391
  %v401 = vor.u32 %v399, %v400
  %v402 = vshll.u32 2102212464, %v390
  %v403 = vshrl.u32 920167782, %v391
  %v404 = vor.u32 %v402, %v403
  %v405 = vshll.u32 920167782, %v390
  %v406 = vshrl.u32 1326507024, %v391
  %v407 = vor.u32 %v405, %v406
  %vm408 = vcmp.lt.s32.totalorder %v389, 1
  %vm409 = vcmp.lt.s32.totalorder %v389, 2
  %vm410 = vcmp.lt.s32.totalorder %v389, 3
  %vm411 = vcmp.lt.s32.totalorder %v389, 4
  %v412 = vsel %vm408, %v392, %v395
  %v413 = vsel %vm411, %v401, 2102212464
  %v414 = vsel %vm410, %v398, %v413
  %v415 = vsel %vm409, %v412, %v414
  %v416 = vsel %vm408, %v395, %v398
  %v417 = vsel %vm411, %v404, 920167782
  %v418 = vsel %vm410, %v401, %v417
  %v419 = vsel %vm409, %v416, %v418
  %v420 = vsel %vm408, %v398, %v401
  %v421 = vsel %vm411, %v407, 1326507024
  %v422 = vsel %vm410, %v404, %v421
  %v423 = vsel %vm409, %v420, %v422
  %v424 = vshll.u32 %v384, 8
  %v425 = vmul.u32.u64.compose %v424, %v423
  %v426 = vextract.low.u32 %v425
  %v427 = vextract.high.u32 %v425
  %v428 = vmul.u32.u64.compose %v424, %v419
  %v429 = vextract.low.u32 %v428
  %v430 = vextract.high.u32 %v428
  %v431 = vmul.u32 %v424, %v415
  %v432 = vadd.s32 %v427, %v429
  %vm433 = vc.u32 %v427, %v429
  %v434 = vadd.s32 %v430, 1
  %v435 = vsel %vm433, %v434, %v430
  %v436 = vadd.s32 %v431, %v435
  %v437 = vadd.s32 %v436, 536870912
  %v438 = vshrl.u32 %v437, 30
  %v439 = vshll.u32 %v438, 30
  %v440 = vsub.s32 %v436, %v439
  %vm441 = vcmp.lt.s32.totalorder %v440, 0
  %v442 = vsub.s32 0, %v440
  %v443 = vsel %vm441, %v442, %v440
  %v444 = vclz %v443
  %v445 = vsub.s32 %v444, 2
  %vm446 = vcmp.gt.s32.totalorder 0, %v445
  %v447 = vsel %vm446, 0, %v445
  %v448 = vsub.s32 32, %v447
  %v449 = vshll.u32 %v440, %v447
  %v450 = vshrl.u32 %v432, %v448
  %v451 = vor.u32 %v449, %v450
  %v452 = vsub.s32 4294967266, %v447
  %v453 = vadd.s32 %v452, 127
  %v454 = vshll.u32 %v453, 23
  %v455 = vor.u32 4788187, %v454
  %v456 = vand.u32 2147483647, %v455
  %v458 = vcvt.s32.f32 %v451
  %v459 = vmul.f32 %v458, %v456
  %v460 = vxor.u32 %v459, 2147483648
  %v461 = vsel %vm378, %v460, %v459
  %v462 = vsub.s32 4, %v438
  %v463 = vsel %vm378, %v462, %v438
  %v464 = vsel %vm377, %v257, %v461
  %v465 = vsel %vm377, 0, %v463
  %v466 = vcosq.f32.pop %v464
  %v467 = vsinq.f32.pop %v464
  %vm468 = vweird.f32 %v257
  %v469 = vadd.s32 %v465, 3
  %v470 = vand.u32 %v469, 3
  %vm471 = vcmp.lt.s32.totalorder %v470, 2
  %vm472 = vcmp.eq.s32.totalorder %v470, 0
  %v473 = vxor.u32 %v467, 2147483648
  %v474 = vsel %vm472, %v466, %v473
  %vm475 = vcmp.eq.s32.totalorder %v470, 2
  %v476 = vxor.u32 %v466, 2147483648
  %v477 = vsel %vm475, %v476, %v467
  %v478 = vsel %vm471, %v474, %v477
  %v479 = vsel %vm468, nan, %v478
  %v480 = vand.u32 2147483647, %v258
  %vm481 = vcmp.le.f32.partialorder %v480, 0.7853982
  %vm482 = vcmp.lt.s32.totalorder %v258, 0
  %v483 = vand.u32 %v258, 2139095040
  %v484 = vshrl.u32 %v483, 23
  %v485 = vsub.s32 %v484, 127
  %v486 = vand.u32 2147483647, %v258
  %v487 = vand.u32 %v486, 8388607
  %v488 = vor.u32 %v487, 8388608
  %v489 = vsub.s32 0, %v488
  %v490 = vadd.s32 %v485, 1
  %vm491 = vcmp.gt.s32.totalorder %v490, 0
  %v492 = vsel %vm491, %v490, 0
  %v493 = vshrl.u32 %v492, 5
  %v494 = vand.u32 %v492, 31
  %v495 = vsub.s32 32, %v494
  %v496 = vshrl.u32 683565275, %v495
  %v497 = vshll.u32 683565275, %v494
  %v498 = vshrl.u32 2475754826, %v495
  %v499 = vor.u32 %v497, %v498
  %v500 = vshll.u32 2475754826, %v494
  %v501 = vshrl.u32 2131351028, %v495
  %v502 = vor.u32 %v500, %v501
  %v503 = vshll.u32 2131351028, %v494
  %v504 = vshrl.u32 2102212464, %v495
  %v505 = vor.u32 %v503, %v504
  %v506 = vshll.u32 2102212464, %v494
  %v507 = vshrl.u32 920167782, %v495
  %v508 = vor.u32 %v506, %v507
  %v509 = vshll.u32 920167782, %v494
  %v510 = vshrl.u32 1326507024, %v495
  %v511 = vor.u32 %v509, %v510
  %vm512 = vcmp.lt.s32.totalorder %v493, 1
  %vm513 = vcmp.lt.s32.totalorder %v493, 2
  %vm514 = vcmp.lt.s32.totalorder %v493, 3
  %vm515 = vcmp.lt.s32.totalorder %v493, 4
  %v516 = vsel %vm512, %v496, %v499
  %v517 = vsel %vm515, %v505, 2102212464
  %v518 = vsel %vm514, %v502, %v517
  %v519 = vsel %vm513, %v516, %v518
  %v520 = vsel %vm512, %v499, %v502
  %v521 = vsel %vm515, %v508, 920167782
  %v522 = vsel %vm514, %v505, %v521
  %v523 = vsel %vm513, %v520, %v522
  %v524 = vsel %vm512, %v502, %v505
  %v525 = vsel %vm515, %v511, 1326507024
  %v526 = vsel %vm514, %v508, %v525
  %v527 = vsel %vm513, %v524, %v526
  %v528 = vshll.u32 %v488, 8
  %v529 = vmul.u32.u64.compose %v528, %v527
  %v530 = vextract.low.u32 %v529
  %v531 = vextract.high.u32 %v529
  %v532 = vmul.u32.u64.compose %v528, %v523
  %v533 = vextract.low.u32 %v532
  %v534 = vextract.high.u32 %v532
  %v535 = vmul.u32 %v528, %v519
  %v536 = vadd.s32 %v531, %v533
  %vm537 = vc.u32 %v531, %v533
  %v538 = vadd.s32 %v534, 1
  %v539 = vsel %vm537, %v538, %v534
  %v540 = vadd.s32 %v535, %v539
  %v541 = vadd.s32 %v540, 536870912
  %v542 = vshrl.u32 %v541, 30
  %v543 = vshll.u32 %v542, 30
  %v544 = vsub.s32 %v540, %v543
  %vm545 = vcmp.lt.s32.totalorder %v544, 0
  %v546 = vsub.s32 0, %v544
  %v547 = vsel %vm545, %v546, %v544
  %v548 = vclz %v547
  %v549 = vsub.s32 %v548, 2
  %vm550 = vcmp.gt.s32.totalorder 0, %v549
  %v551 = vsel %vm550, 0, %v549
  %v552 = vsub.s32 32, %v551
  %v553 = vshll.u32 %v544, %v551
  %v554 = vshrl.u32 %v536, %v552
  %v555 = vor.u32 %v553, %v554
  %v556 = vsub.s32 4294967266, %v551
  %v557 = vadd.s32 %v556, 127
  %v558 = vshll.u32 %v557, 23
  %v559 = vor.u32 4788187, %v558
  %v560 = vand.u32 2147483647, %v559
  %v562 = vcvt.s32.f32 %v555
  %v563 = vmul.f32 %v562, %v560
  %v564 = vxor.u32 %v563, 2147483648
  %v565 = vsel %vm482, %v564, %v563
  %v566 = vsub.s32 4, %v542
  %v567 = vsel %vm482, %v566, %v542
  %v568 = vsel %vm481, %v258, %v565
  %v569 = vsel %vm481, 0, %v567
  %v570 = vcosq.f32.pop %v568
  %v571 = vsinq.f32.pop %v568
  %vm572 = vweird.f32 %v258
  %v573 = vadd.s32 %v569, 3
  %v574 = vand.u32 %v573, 3
  %vm575 = vcmp.lt.s32.totalorder %v574, 2
  %vm576 = vcmp.eq.s32.totalorder %v574, 0
  %v577 = vxor.u32 %v571, 2147483648
  %v578 = vsel %vm576, %v570, %v577
  %vm579 = vcmp.eq.s32.totalorder %v574, 2
  %v580 = vxor.u32 %v570, 2147483648
  %v581 = vsel %vm579, %v580, %v571
  %v582 = vsel %vm575, %v578, %v581
  %v583 = vsel %vm572, nan, %v582
  %v584 = vand.u32 2147483647, %v259
  %vm585 = vcmp.le.f32.partialorder %v584, 0.7853982
  %vm586 = vcmp.lt.s32.totalorder %v259, 0
  %v587 = vand.u32 %v259, 2139095040
  %v588 = vshrl.u32 %v587, 23
  %v589 = vsub.s32 %v588, 127
  %v590 = vand.u32 2147483647, %v259
  %v591 = vand.u32 %v590, 8388607
  %v592 = vor.u32 %v591, 8388608
  %v593 = vsub.s32 0, %v592
  %v594 = vadd.s32 %v589, 1
  %vm595 = vcmp.gt.s32.totalorder %v594, 0
  %v596 = vsel %vm595, %v594, 0
  %v597 = vshrl.u32 %v596, 5
  %v598 = vand.u32 %v596, 31
  %v599 = vsub.s32 32, %v598
  %v600 = vshrl.u32 683565275, %v599
  %v601 = vshll.u32 683565275, %v598
  %v602 = vshrl.u32 2475754826, %v599
  %v603 = vor.u32 %v601, %v602
  %v604 = vshll.u32 2475754826, %v598
  %v605 = vshrl.u32 2131351028, %v599
  %v606 = vor.u32 %v604, %v605
  %v607 = vshll.u32 2131351028, %v598
  %v608 = vshrl.u32 2102212464, %v599
  %v609 = vor.u32 %v607, %v608
  %v610 = vshll.u32 2102212464, %v598
  %v611 = vshrl.u32 920167782, %v599
  %v612 = vor.u32 %v610, %v611
  %v613 = vshll.u32 920167782, %v598
  %v614 = vshrl.u32 1326507024, %v599
  %v615 = vor.u32 %v613, %v614
  %vm616 = vcmp.lt.s32.totalorder %v597, 1
  %vm617 = vcmp.lt.s32.totalorder %v597, 2
  %vm618 = vcmp.lt.s32.totalorder %v597, 3
  %vm619 = vcmp.lt.s32.totalorder %v597, 4
  %v620 = vsel %vm616, %v600, %v603
  %v621 = vsel %vm619, %v609, 2102212464
  %v622 = vsel %vm618, %v606, %v621
  %v623 = vsel %vm617, %v620, %v622
  %v624 = vsel %vm616, %v603, %v606
  %v625 = vsel %vm619, %v612, 920167782
  %v626 = vsel %vm618, %v609, %v625
  %v627 = vsel %vm617, %v624, %v626
  %v628 = vsel %vm616, %v606, %v609
  %v629 = vsel %vm619, %v615, 1326507024
  %v630 = vsel %vm618, %v612, %v629
  %v631 = vsel %vm617, %v628, %v630
  %v632 = vshll.u32 %v592, 8
  %v633 = vmul.u32.u64.compose %v632, %v631
  %v634 = vextract.low.u32 %v633
  %v635 = vextract.high.u32 %v633
  %v636 = vmul.u32.u64.compose %v632, %v627
  %v637 = vextract.low.u32 %v636
  %v638 = vextract.high.u32 %v636
  %v639 = vmul.u32 %v632, %v623
  %v640 = vadd.s32 %v635, %v637
  %vm641 = vc.u32 %v635, %v637
  %v642 = vadd.s32 %v638, 1
  %v643 = vsel %vm641, %v642, %v638
  %v644 = vadd.s32 %v639, %v643
  %v645 = vadd.s32 %v644, 536870912
  %v646 = vshrl.u32 %v645, 30
  %v647 = vshll.u32 %v646, 30
  %v648 = vsub.s32 %v644, %v647
  %vm649 = vcmp.lt.s32.totalorder %v648, 0
  %v650 = vsub.s32 0, %v648
  %v651 = vsel %vm649, %v650, %v648
  %v652 = vclz %v651
  %v653 = vsub.s32 %v652, 2
  %vm654 = vcmp.gt.s32.totalorder 0, %v653
  %v655 = vsel %vm654, 0, %v653
  %v656 = vsub.s32 32, %v655
  %v657 = vshll.u32 %v648, %v655
  %v658 = vshrl.u32 %v640, %v656
  %v659 = vor.u32 %v657, %v658
  %v660 = vsub.s32 4294967266, %v655
  %v661 = vadd.s32 %v660, 127
  %v662 = vshll.u32 %v661, 23
  %v663 = vor.u32 4788187, %v662
  %v664 = vand.u32 2147483647, %v663
  %v666 = vcvt.s32.f32 %v659
  %v667 = vmul.f32 %v666, %v664
  %v668 = vxor.u32 %v667, 2147483648
  %v669 = vsel %vm586, %v668, %v667
  %v670 = vsub.s32 4, %v646
  %v671 = vsel %vm586, %v670, %v646
  %v672 = vsel %vm585, %v259, %v669
  %v673 = vsel %vm585, 0, %v671
  %v674 = vcosq.f32.pop %v672
  %v675 = vsinq.f32.pop %v672
  %vm676 = vweird.f32 %v259
  %v677 = vadd.s32 %v673, 3
  %v678 = vand.u32 %v677, 3
  %vm679 = vcmp.lt.s32.totalorder %v678, 2
  %vm680 = vcmp.eq.s32.totalorder %v678, 0
  %v681 = vxor.u32 %v675, 2147483648
  %v682 = vsel %vm680, %v674, %v681
  %vm683 = vcmp.eq.s32.totalorder %v678, 2
  %v684 = vxor.u32 %v674, 2147483648
  %v685 = vsel %vm683, %v684, %v675
  %v686 = vsel %vm679, %v682, %v685
  %v687 = vsel %vm676, nan, %v686
  %v688 = vand.u32 2147483647, %v260
  %vm689 = vcmp.le.f32.partialorder %v688, 0.7853982
  %vm690 = vcmp.lt.s32.totalorder %v260, 0
  %v691 = vand.u32 %v260, 2139095040
  %v692 = vshrl.u32 %v691, 23
  %v693 = vsub.s32 %v692, 127
  %v694 = vand.u32 2147483647, %v260
  %v695 = vand.u32 %v694, 8388607
  %v696 = vor.u32 %v695, 8388608
  %v697 = vsub.s32 0, %v696
  %v698 = vadd.s32 %v693, 1
  %vm699 = vcmp.gt.s32.totalorder %v698, 0
  %v700 = vsel %vm699, %v698, 0
  %v701 = vshrl.u32 %v700, 5
  %v702 = vand.u32 %v700, 31
  %v703 = vsub.s32 32, %v702
  %v704 = vshrl.u32 683565275, %v703
  %v705 = vshll.u32 683565275, %v702
  %v706 = vshrl.u32 2475754826, %v703
  %v707 = vor.u32 %v705, %v706
  %v708 = vshll.u32 2475754826, %v702
  %v709 = vshrl.u32 2131351028, %v703
  %v710 = vor.u32 %v708, %v709
  %v711 = vshll.u32 2131351028, %v702
  %v712 = vshrl.u32 2102212464, %v703
  %v713 = vor.u32 %v711, %v712
  %v714 = vshll.u32 2102212464, %v702
  %v715 = vshrl.u32 920167782, %v703
  %v716 = vor.u32 %v714, %v715
  %v717 = vshll.u32 920167782, %v702
  %v718 = vshrl.u32 1326507024, %v703
  %v719 = vor.u32 %v717, %v718
  %vm720 = vcmp.lt.s32.totalorder %v701, 1
  %vm721 = vcmp.lt.s32.totalorder %v701, 2
  %vm722 = vcmp.lt.s32.totalorder %v701, 3
  %vm723 = vcmp.lt.s32.totalorder %v701, 4
  %v724 = vsel %vm720, %v704, %v707
  %v725 = vsel %vm723, %v713, 2102212464
  %v726 = vsel %vm722, %v710, %v725
  %v727 = vsel %vm721, %v724, %v726
  %v728 = vsel %vm720, %v707, %v710
  %v729 = vsel %vm723, %v716, 920167782
  %v730 = vsel %vm722, %v713, %v729
  %v731 = vsel %vm721, %v728, %v730
  %v732 = vsel %vm720, %v710, %v713
  %v733 = vsel %vm723, %v719, 1326507024
  %v734 = vsel %vm722, %v716, %v733
  %v735 = vsel %vm721, %v732, %v734
  %v736 = vshll.u32 %v696, 8
  %v737 = vmul.u32.u64.compose %v736, %v735
  %v738 = vextract.low.u32 %v737
  %v739 = vextract.high.u32 %v737
  %v740 = vmul.u32.u64.compose %v736, %v731
  %v741 = vextract.low.u32 %v740
  %v742 = vextract.high.u32 %v740
  %v743 = vmul.u32 %v736, %v727
  %v744 = vadd.s32 %v739, %v741
  %vm745 = vc.u32 %v739, %v741
  %v746 = vadd.s32 %v742, 1
  %v747 = vsel %vm745, %v746, %v742
  %v748 = vadd.s32 %v743, %v747
  %v749 = vadd.s32 %v748, 536870912
  %v750 = vshrl.u32 %v749, 30
  %v751 = vshll.u32 %v750, 30
  %v752 = vsub.s32 %v748, %v751
  %vm753 = vcmp.lt.s32.totalorder %v752, 0
  %v754 = vsub.s32 0, %v752
  %v755 = vsel %vm753, %v754, %v752
  %v756 = vclz %v755
  %v757 = vsub.s32 %v756, 2
  %vm758 = vcmp.gt.s32.totalorder 0, %v757
  %v759 = vsel %vm758, 0, %v757
  %v760 = vsub.s32 32, %v759
  %v761 = vshll.u32 %v752, %v759
  %v762 = vshrl.u32 %v744, %v760
  %v763 = vor.u32 %v761, %v762
  %v764 = vsub.s32 4294967266, %v759
  %v765 = vadd.s32 %v764, 127
  %v766 = vshll.u32 %v765, 23
  %v767 = vor.u32 4788187, %v766
  %v768 = vand.u32 2147483647, %v767
  %v770 = vcvt.s32.f32 %v763
  %v771 = vmul.f32 %v770, %v768
  %v772 = vxor.u32 %v771, 2147483648
  %v773 = vsel %vm690, %v772, %v771
  %v774 = vsub.s32 4, %v750
  %v775 = vsel %vm690, %v774, %v750
  %v776 = vsel %vm689, %v260, %v773
  %v777 = vsel %vm689, 0, %v775
  %v778 = vcosq.f32.pop %v776
  %v779 = vsinq.f32.pop %v776
  %vm780 = vweird.f32 %v260
  %v781 = vadd.s32 %v777, 3
  %v782 = vand.u32 %v781, 3
  %vm783 = vcmp.lt.s32.totalorder %v782, 2
  %vm784 = vcmp.eq.s32.totalorder %v782, 0
  %v785 = vxor.u32 %v779, 2147483648
  %v786 = vsel %vm784, %v778, %v785
  %vm787 = vcmp.eq.s32.totalorder %v782, 2
  %v788 = vxor.u32 %v778, 2147483648
  %v789 = vsel %vm787, %v788, %v779
  %v790 = vsel %vm783, %v786, %v789
  %v791 = vsel %vm780, nan, %v790
  %v792 = vand.u32 2147483647, %v261
  %vm793 = vcmp.le.f32.partialorder %v792, 0.7853982
  %vm794 = vcmp.lt.s32.totalorder %v261, 0
  %v795 = vand.u32 %v261, 2139095040
  %v796 = vshrl.u32 %v795, 23
  %v797 = vsub.s32 %v796, 127
  %v798 = vand.u32 2147483647, %v261
  %v799 = vand.u32 %v798, 8388607
  %v800 = vor.u32 %v799, 8388608
  %v801 = vsub.s32 0, %v800
  %v802 = vadd.s32 %v797, 1
  %vm803 = vcmp.gt.s32.totalorder %v802, 0
  %v804 = vsel %vm803, %v802, 0
  %v805 = vshrl.u32 %v804, 5
  %v806 = vand.u32 %v804, 31
  %v807 = vsub.s32 32, %v806
  %v808 = vshrl.u32 683565275, %v807
  %v809 = vshll.u32 683565275, %v806
  %v810 = vshrl.u32 2475754826, %v807
  %v811 = vor.u32 %v809, %v810
  %v812 = vshll.u32 2475754826, %v806
  %v813 = vshrl.u32 2131351028, %v807
  %v814 = vor.u32 %v812, %v813
  %v815 = vshll.u32 2131351028, %v806
  %v816 = vshrl.u32 2102212464, %v807
  %v817 = vor.u32 %v815, %v816
  %v818 = vshll.u32 2102212464, %v806
  %v819 = vshrl.u32 920167782, %v807
  %v820 = vor.u32 %v818, %v819
  %v821 = vshll.u32 920167782, %v806
  %v822 = vshrl.u32 1326507024, %v807
  %v823 = vor.u32 %v821, %v822
  %vm824 = vcmp.lt.s32.totalorder %v805, 1
  %vm825 = vcmp.lt.s32.totalorder %v805, 2
  %vm826 = vcmp.lt.s32.totalorder %v805, 3
  %vm827 = vcmp.lt.s32.totalorder %v805, 4
  %v828 = vsel %vm824, %v808, %v811
  %v829 = vsel %vm827, %v817, 2102212464
  %v830 = vsel %vm826, %v814, %v829
  %v831 = vsel %vm825, %v828, %v830
  %v832 = vsel %vm824, %v811, %v814
  %v833 = vsel %vm827, %v820, 920167782
  %v834 = vsel %vm826, %v817, %v833
  %v835 = vsel %vm825, %v832, %v834
  %v836 = vsel %vm824, %v814, %v817
  %v837 = vsel %vm827, %v823, 1326507024
  %v838 = vsel %vm826, %v820, %v837
  %v839 = vsel %vm825, %v836, %v838
  %v840 = vshll.u32 %v800, 8
  %v841 = vmul.u32.u64.compose %v840, %v839
  %v842 = vextract.low.u32 %v841
  %v843 = vextract.high.u32 %v841
  %v844 = vmul.u32.u64.compose %v840, %v835
  %v845 = vextract.low.u32 %v844
  %v846 = vextract.high.u32 %v844
  %v847 = vmul.u32 %v840, %v831
  %v848 = vadd.s32 %v843, %v845
  %vm849 = vc.u32 %v843, %v845
  %v850 = vadd.s32 %v846, 1
  %v851 = vsel %vm849, %v850, %v846
  %v852 = vadd.s32 %v847, %v851
  %v853 = vadd.s32 %v852, 536870912
  %v854 = vshrl.u32 %v853, 30
  %v855 = vshll.u32 %v854, 30
  %v856 = vsub.s32 %v852, %v855
  %vm857 = vcmp.lt.s32.totalorder %v856, 0
  %v858 = vsub.s32 0, %v856
  %v859 = vsel %vm857, %v858, %v856
  %v860 = vclz %v859
  %v861 = vsub.s32 %v860, 2
  %vm862 = vcmp.gt.s32.totalorder 0, %v861
  %v863 = vsel %vm862, 0, %v861
  %v864 = vsub.s32 32, %v863
  %v865 = vshll.u32 %v856, %v863
  %v866 = vshrl.u32 %v848, %v864
  %v867 = vor.u32 %v865, %v866
  %v868 = vsub.s32 4294967266, %v863
  %v869 = vadd.s32 %v868, 127
  %v870 = vshll.u32 %v869, 23
  %v871 = vor.u32 4788187, %v870
  %v872 = vand.u32 2147483647, %v871
  %v874 = vcvt.s32.f32 %v867
  %v875 = vmul.f32 %v874, %v872
  %v876 = vxor.u32 %v875, 2147483648
  %v877 = vsel %vm794, %v876, %v875
  %v878 = vsub.s32 4, %v854
  %v879 = vsel %vm794, %v878, %v854
  %v880 = vsel %vm793, %v261, %v877
  %v881 = vsel %vm793, 0, %v879
  %v882 = vcosq.f32.pop %v880
  %v883 = vsinq.f32.pop %v880
  %vm884 = vweird.f32 %v261
  %v885 = vadd.s32 %v881, 3
  %v886 = vand.u32 %v885, 3
  %vm887 = vcmp.lt.s32.totalorder %v886, 2
  %vm888 = vcmp.eq.s32.totalorder %v886, 0
  %v889 = vxor.u32 %v883, 2147483648
  %v890 = vsel %vm888, %v882, %v889
  %vm891 = vcmp.eq.s32.totalorder %v886, 2
  %v892 = vxor.u32 %v882, 2147483648
  %v893 = vsel %vm891, %v892, %v883
  %v894 = vsel %vm887, %v890, %v893
  %v895 = vsel %vm884, nan, %v894
  %v896 = vand.u32 2147483647, %v262
  %vm897 = vcmp.le.f32.partialorder %v896, 0.7853982
  %vm898 = vcmp.lt.s32.totalorder %v262, 0
  %v899 = vand.u32 %v262, 2139095040
  %v900 = vshrl.u32 %v899, 23
  %v901 = vsub.s32 %v900, 127
  %v902 = vand.u32 2147483647, %v262
  %v903 = vand.u32 %v902, 8388607
  %v904 = vor.u32 %v903, 8388608
  %v905 = vsub.s32 0, %v904
  %v906 = vadd.s32 %v901, 1
  %vm907 = vcmp.gt.s32.totalorder %v906, 0
  %v908 = vsel %vm907, %v906, 0
  %v909 = vshrl.u32 %v908, 5
  %v910 = vand.u32 %v908, 31
  %v911 = vsub.s32 32, %v910
  %v912 = vshrl.u32 683565275, %v911
  %v913 = vshll.u32 683565275, %v910
  %v914 = vshrl.u32 2475754826, %v911
  %v915 = vor.u32 %v913, %v914
  %v916 = vshll.u32 2475754826, %v910
  %v917 = vshrl.u32 2131351028, %v911
  %v918 = vor.u32 %v916, %v917
  %v919 = vshll.u32 2131351028, %v910
  %v920 = vshrl.u32 2102212464, %v911
  %v921 = vor.u32 %v919, %v920
  %v922 = vshll.u32 2102212464, %v910
  %v923 = vshrl.u32 920167782, %v911
  %v924 = vor.u32 %v922, %v923
  %v925 = vshll.u32 920167782, %v910
  %v926 = vshrl.u32 1326507024, %v911
  %v927 = vor.u32 %v925, %v926
  %vm928 = vcmp.lt.s32.totalorder %v909, 1
  %vm929 = vcmp.lt.s32.totalorder %v909, 2
  %vm930 = vcmp.lt.s32.totalorder %v909, 3
  %vm931 = vcmp.lt.s32.totalorder %v909, 4
  %v932 = vsel %vm928, %v912, %v915
  %v933 = vsel %vm931, %v921, 2102212464
  %v934 = vsel %vm930, %v918, %v933
  %v935 = vsel %vm929, %v932, %v934
  %v936 = vsel %vm928, %v915, %v918
  %v937 = vsel %vm931, %v924, 920167782
  %v938 = vsel %vm930, %v921, %v937
  %v939 = vsel %vm929, %v936, %v938
  %v940 = vsel %vm928, %v918, %v921
  %v941 = vsel %vm931, %v927, 1326507024
  %v942 = vsel %vm930, %v924, %v941
  %v943 = vsel %vm929, %v940, %v942
  %v944 = vshll.u32 %v904, 8
  %v945 = vmul.u32.u64.compose %v944, %v943
  %v946 = vextract.low.u32 %v945
  %v947 = vextract.high.u32 %v945
  %v948 = vmul.u32.u64.compose %v944, %v939
  %v949 = vextract.low.u32 %v948
  %v950 = vextract.high.u32 %v948
  %v951 = vmul.u32 %v944, %v935
  %v952 = vadd.s32 %v947, %v949
  %vm953 = vc.u32 %v947, %v949
  %v954 = vadd.s32 %v950, 1
  %v955 = vsel %vm953, %v954, %v950
  %v956 = vadd.s32 %v951, %v955
  %v957 = vadd.s32 %v956, 536870912
  %v958 = vshrl.u32 %v957, 30
  %v959 = vshll.u32 %v958, 30
  %v960 = vsub.s32 %v956, %v959
  %vm961 = vcmp.lt.s32.totalorder %v960, 0
  %v962 = vsub.s32 0, %v960
  %v963 = vsel %vm961, %v962, %v960
  %v964 = vclz %v963
  %v965 = vsub.s32 %v964, 2
  %vm966 = vcmp.gt.s32.totalorder 0, %v965
  %v967 = vsel %vm966, 0, %v965
  %v968 = vsub.s32 32, %v967
  %v969 = vshll.u32 %v960, %v967
  %v970 = vshrl.u32 %v952, %v968
  %v971 = vor.u32 %v969, %v970
  %v972 = vsub.s32 4294967266, %v967
  %v973 = vadd.s32 %v972, 127
  %v974 = vshll.u32 %v973, 23
  %v975 = vor.u32 4788187, %v974
  %v976 = vand.u32 2147483647, %v975
  %v978 = vcvt.s32.f32 %v971
  %v979 = vmul.f32 %v978, %v976
  %v980 = vxor.u32 %v979, 2147483648
  %v981 = vsel %vm898, %v980, %v979
  %v982 = vsub.s32 4, %v958
  %v983 = vsel %vm898, %v982, %v958
  %v984 = vsel %vm897, %v262, %v981
  %v985 = vsel %vm897, 0, %v983
  %v986 = vcosq.f32.pop %v984
  %v987 = vsinq.f32.pop %v984
  %vm988 = vweird.f32 %v262
  %v989 = vadd.s32 %v985, 3
  %v990 = vand.u32 %v989, 3
  %vm991 = vcmp.lt.s32.totalorder %v990, 2
  %vm992 = vcmp.eq.s32.totalorder %v990, 0
  %v993 = vxor.u32 %v987, 2147483648
  %v994 = vsel %vm992, %v986, %v993
  %vm995 = vcmp.eq.s32.totalorder %v990, 2
  %v996 = vxor.u32 %v986, 2147483648
  %v997 = vsel %vm995, %v996, %v987
  %v998 = vsel %vm991, %v994, %v997
  %v999 = vsel %vm988, nan, %v998
  %v1000 = vand.u32 2147483647, %v263
  %vm1001 = vcmp.le.f32.partialorder %v1000, 0.7853982
  %vm1002 = vcmp.lt.s32.totalorder %v263, 0
  %v1003 = vand.u32 %v263, 2139095040
  %v1004 = vshrl.u32 %v1003, 23
  %v1005 = vsub.s32 %v1004, 127
  %v1006 = vand.u32 2147483647, %v263
  %v1007 = vand.u32 %v1006, 8388607
  %v1008 = vor.u32 %v1007, 8388608
  %v1009 = vsub.s32 0, %v1008
  %v1010 = vadd.s32 %v1005, 1
  %vm1011 = vcmp.gt.s32.totalorder %v1010, 0
  %v1012 = vsel %vm1011, %v1010, 0
  %v1013 = vshrl.u32 %v1012, 5
  %v1014 = vand.u32 %v1012, 31
  %v1015 = vsub.s32 32, %v1014
  %v1016 = vshrl.u32 683565275, %v1015
  %v1017 = vshll.u32 683565275, %v1014
  %v1018 = vshrl.u32 2475754826, %v1015
  %v1019 = vor.u32 %v1017, %v1018
  %v1020 = vshll.u32 2475754826, %v1014
  %v1021 = vshrl.u32 2131351028, %v1015
  %v1022 = vor.u32 %v1020, %v1021
  %v1023 = vshll.u32 2131351028, %v1014
  %v1024 = vshrl.u32 2102212464, %v1015
  %v1025 = vor.u32 %v1023, %v1024
  %v1026 = vshll.u32 2102212464, %v1014
  %v1027 = vshrl.u32 920167782, %v1015
  %v1028 = vor.u32 %v1026, %v1027
  %v1029 = vshll.u32 920167782, %v1014
  %v1030 = vshrl.u32 1326507024, %v1015
  %v1031 = vor.u32 %v1029, %v1030
  %vm1032 = vcmp.lt.s32.totalorder %v1013, 1
  %vm1033 = vcmp.lt.s32.totalorder %v1013, 2
  %vm1034 = vcmp.lt.s32.totalorder %v1013, 3
  %vm1035 = vcmp.lt.s32.totalorder %v1013, 4
  %v1036 = vsel %vm1032, %v1016, %v1019
  %v1037 = vsel %vm1035, %v1025, 2102212464
  %v1038 = vsel %vm1034, %v1022, %v1037
  %v1039 = vsel %vm1033, %v1036, %v1038
  %v1040 = vsel %vm1032, %v1019, %v1022
  %v1041 = vsel %vm1035, %v1028, 920167782
  %v1042 = vsel %vm1034, %v1025, %v1041
  %v1043 = vsel %vm1033, %v1040, %v1042
  %v1044 = vsel %vm1032, %v1022, %v1025
  %v1045 = vsel %vm1035, %v1031, 1326507024
  %v1046 = vsel %vm1034, %v1028, %v1045
  %v1047 = vsel %vm1033, %v1044, %v1046
  %v1048 = vshll.u32 %v1008, 8
  %v1049 = vmul.u32.u64.compose %v1048, %v1047
  %v1050 = vextract.low.u32 %v1049
  %v1051 = vextract.high.u32 %v1049
  %v1052 = vmul.u32.u64.compose %v1048, %v1043
  %v1053 = vextract.low.u32 %v1052
  %v1054 = vextract.high.u32 %v1052
  %v1055 = vmul.u32 %v1048, %v1039
  %v1056 = vadd.s32 %v1051, %v1053
  %vm1057 = vc.u32 %v1051, %v1053
  %v1058 = vadd.s32 %v1054, 1
  %v1059 = vsel %vm1057, %v1058, %v1054
  %v1060 = vadd.s32 %v1055, %v1059
  %v1061 = vadd.s32 %v1060, 536870912
  %v1062 = vshrl.u32 %v1061, 30
  %v1063 = vshll.u32 %v1062, 30
  %v1064 = vsub.s32 %v1060, %v1063
  %vm1065 = vcmp.lt.s32.totalorder %v1064, 0
  %v1066 = vsub.s32 0, %v1064
  %v1067 = vsel %vm1065, %v1066, %v1064
  %v1068 = vclz %v1067
  %v1069 = vsub.s32 %v1068, 2
  %vm1070 = vcmp.gt.s32.totalorder 0, %v1069
  %v1071 = vsel %vm1070, 0, %v1069
  %v1072 = vsub.s32 32, %v1071
  %v1073 = vshll.u32 %v1064, %v1071
  %v1074 = vshrl.u32 %v1056, %v1072
  %v1075 = vor.u32 %v1073, %v1074
  %v1076 = vsub.s32 4294967266, %v1071
  %v1077 = vadd.s32 %v1076, 127
  %v1078 = vshll.u32 %v1077, 23
  %v1079 = vor.u32 4788187, %v1078
  %v1080 = vand.u32 2147483647, %v1079
  %v1082 = vcvt.s32.f32 %v1075
  %v1083 = vmul.f32 %v1082, %v1080
  %v1084 = vxor.u32 %v1083, 2147483648
  %v1085 = vsel %vm1002, %v1084, %v1083
  %v1086 = vsub.s32 4, %v1062
  %v1087 = vsel %vm1002, %v1086, %v1062
  %v1088 = vsel %vm1001, %v263, %v1085
  %v1089 = vsel %vm1001, 0, %v1087
  %v1090 = vcosq.f32.pop %v1088
  %v1091 = vsinq.f32.pop %v1088
  %vm1092 = vweird.f32 %v263
  %v1093 = vadd.s32 %v1089, 3
  %v1094 = vand.u32 %v1093, 3
  %vm1095 = vcmp.lt.s32.totalorder %v1094, 2
  %vm1096 = vcmp.eq.s32.totalorder %v1094, 0
  %v1097 = vxor.u32 %v1091, 2147483648
  %v1098 = vsel %vm1096, %v1090, %v1097
  %vm1099 = vcmp.eq.s32.totalorder %v1094, 2
  %v1100 = vxor.u32 %v1090, 2147483648
  %v1101 = vsel %vm1099, %v1100, %v1091
  %v1102 = vsel %vm1095, %v1098, %v1101
  %v1103 = vsel %vm1092, nan, %v1102
  %v1104 = vand.u32 2147483647, %v264
  %vm1105 = vcmp.le.f32.partialorder %v1104, 0.7853982
  %vm1106 = vcmp.lt.s32.totalorder %v264, 0
  %v1107 = vand.u32 %v264, 2139095040
  %v1108 = vshrl.u32 %v1107, 23
  %v1109 = vsub.s32 %v1108, 127
  %v1110 = vand.u32 2147483647, %v264
  %v1111 = vand.u32 %v1110, 8388607
  %v1112 = vor.u32 %v1111, 8388608
  %v1113 = vsub.s32 0, %v1112
  %v1114 = vadd.s32 %v1109, 1
  %vm1115 = vcmp.gt.s32.totalorder %v1114, 0
  %v1116 = vsel %vm1115, %v1114, 0
  %v1117 = vshrl.u32 %v1116, 5
  %v1118 = vand.u32 %v1116, 31
  %v1119 = vsub.s32 32, %v1118
  %v1120 = vshrl.u32 683565275, %v1119
  %v1121 = vshll.u32 683565275, %v1118
  %v1122 = vshrl.u32 2475754826, %v1119
  %v1123 = vor.u32 %v1121, %v1122
  %v1124 = vshll.u32 2475754826, %v1118
  %v1125 = vshrl.u32 2131351028, %v1119
  %v1126 = vor.u32 %v1124, %v1125
  %v1127 = vshll.u32 2131351028, %v1118
  %v1128 = vshrl.u32 2102212464, %v1119
  %v1129 = vor.u32 %v1127, %v1128
  %v1130 = vshll.u32 2102212464, %v1118
  %v1131 = vshrl.u32 920167782, %v1119
  %v1132 = vor.u32 %v1130, %v1131
  %v1133 = vshll.u32 920167782, %v1118
  %v1134 = vshrl.u32 1326507024, %v1119
  %v1135 = vor.u32 %v1133, %v1134
  %vm1136 = vcmp.lt.s32.totalorder %v1117, 1
  %vm1137 = vcmp.lt.s32.totalorder %v1117, 2
  %vm1138 = vcmp.lt.s32.totalorder %v1117, 3
  %vm1139 = vcmp.lt.s32.totalorder %v1117, 4
  %v1140 = vsel %vm1136, %v1120, %v1123
  %v1141 = vsel %vm1139, %v1129, 2102212464
  %v1142 = vsel %vm1138, %v1126, %v1141
  %v1143 = vsel %vm1137, %v1140, %v1142
  %v1144 = vsel %vm1136, %v1123, %v1126
  %v1145 = vsel %vm1139, %v1132, 920167782
  %v1146 = vsel %vm1138, %v1129, %v1145
  %v1147 = vsel %vm1137, %v1144, %v1146
  %v1148 = vsel %vm1136, %v1126, %v1129
  %v1149 = vsel %vm1139, %v1135, 1326507024
  %v1150 = vsel %vm1138, %v1132, %v1149
  %v1151 = vsel %vm1137, %v1148, %v1150
  %v1152 = vshll.u32 %v1112, 8
  %v1153 = vmul.u32.u64.compose %v1152, %v1151
  %v1154 = vextract.low.u32 %v1153
  %v1155 = vextract.high.u32 %v1153
  %v1156 = vmul.u32.u64.compose %v1152, %v1147
  %v1157 = vextract.low.u32 %v1156
  %v1158 = vextract.high.u32 %v1156
  %v1159 = vmul.u32 %v1152, %v1143
  %v1160 = vadd.s32 %v1155, %v1157
  %vm1161 = vc.u32 %v1155, %v1157
  %v1162 = vadd.s32 %v1158, 1
  %v1163 = vsel %vm1161, %v1162, %v1158
  %v1164 = vadd.s32 %v1159, %v1163
  %v1165 = vadd.s32 %v1164, 536870912
  %v1166 = vshrl.u32 %v1165, 30
  %v1167 = vshll.u32 %v1166, 30
  %v1168 = vsub.s32 %v1164, %v1167
  %vm1169 = vcmp.lt.s32.totalorder %v1168, 0
  %v1170 = vsub.s32 0, %v1168
  %v1171 = vsel %vm1169, %v1170, %v1168
  %v1172 = vclz %v1171
  %v1173 = vsub.s32 %v1172, 2
  %vm1174 = vcmp.gt.s32.totalorder 0, %v1173
  %v1175 = vsel %vm1174, 0, %v1173
  %v1176 = vsub.s32 32, %v1175
  %v1177 = vshll.u32 %v1168, %v1175
  %v1178 = vshrl.u32 %v1160, %v1176
  %v1179 = vor.u32 %v1177, %v1178
  %v1180 = vsub.s32 4294967266, %v1175
  %v1181 = vadd.s32 %v1180, 127
  %v1182 = vshll.u32 %v1181, 23
  %v1183 = vor.u32 4788187, %v1182
  %v1184 = vand.u32 2147483647, %v1183
  %v1186 = vcvt.s32.f32 %v1179
  %v1187 = vmul.f32 %v1186, %v1184
  %v1188 = vxor.u32 %v1187, 2147483648
  %v1189 = vsel %vm1106, %v1188, %v1187
  %v1190 = vsub.s32 4, %v1166
  %v1191 = vsel %vm1106, %v1190, %v1166
  %v1192 = vsel %vm1105, %v264, %v1189
  %v1193 = vsel %vm1105, 0, %v1191
  %v1194 = vcosq.f32.pop %v1192
  %v1195 = vsinq.f32.pop %v1192
  %vm1196 = vweird.f32 %v264
  %v1197 = vadd.s32 %v1193, 3
  %v1198 = vand.u32 %v1197, 3
  %vm1199 = vcmp.lt.s32.totalorder %v1198, 2
  %vm1200 = vcmp.eq.s32.totalorder %v1198, 0
  %v1201 = vxor.u32 %v1195, 2147483648
  %v1202 = vsel %vm1200, %v1194, %v1201
  %vm1203 = vcmp.eq.s32.totalorder %v1198, 2
  %v1204 = vxor.u32 %v1194, 2147483648
  %v1205 = vsel %vm1203, %v1204, %v1195
  %v1206 = vsel %vm1199, %v1202, %v1205
  %v1207 = vsel %vm1196, nan, %v1206
  %v1208 = vand.u32 2147483647, %v265
  %vm1209 = vcmp.le.f32.partialorder %v1208, 0.7853982
  %vm1210 = vcmp.lt.s32.totalorder %v265, 0
  %v1211 = vand.u32 %v265, 2139095040
  %v1212 = vshrl.u32 %v1211, 23
  %v1213 = vsub.s32 %v1212, 127
  %v1214 = vand.u32 2147483647, %v265
  %v1215 = vand.u32 %v1214, 8388607
  %v1216 = vor.u32 %v1215, 8388608
  %v1217 = vsub.s32 0, %v1216
  %v1218 = vadd.s32 %v1213, 1
  %vm1219 = vcmp.gt.s32.totalorder %v1218, 0
  %v1220 = vsel %vm1219, %v1218, 0
  %v1221 = vshrl.u32 %v1220, 5
  %v1222 = vand.u32 %v1220, 31
  %v1223 = vsub.s32 32, %v1222
  %v1224 = vshrl.u32 683565275, %v1223
  %v1225 = vshll.u32 683565275, %v1222
  %v1226 = vshrl.u32 2475754826, %v1223
  %v1227 = vor.u32 %v1225, %v1226
  %v1228 = vshll.u32 2475754826, %v1222
  %v1229 = vshrl.u32 2131351028, %v1223
  %v1230 = vor.u32 %v1228, %v1229
  %v1231 = vshll.u32 2131351028, %v1222
  %v1232 = vshrl.u32 2102212464, %v1223
  %v1233 = vor.u32 %v1231, %v1232
  %v1234 = vshll.u32 2102212464, %v1222
  %v1235 = vshrl.u32 920167782, %v1223
  %v1236 = vor.u32 %v1234, %v1235
  %v1237 = vshll.u32 920167782, %v1222
  %v1238 = vshrl.u32 1326507024, %v1223
  %v1239 = vor.u32 %v1237, %v1238
  %vm1240 = vcmp.lt.s32.totalorder %v1221, 1
  %vm1241 = vcmp.lt.s32.totalorder %v1221, 2
  %vm1242 = vcmp.lt.s32.totalorder %v1221, 3
  %vm1243 = vcmp.lt.s32.totalorder %v1221, 4
  %v1244 = vsel %vm1240, %v1224, %v1227
  %v1245 = vsel %vm1243, %v1233, 2102212464
  %v1246 = vsel %vm1242, %v1230, %v1245
  %v1247 = vsel %vm1241, %v1244, %v1246
  %v1248 = vsel %vm1240, %v1227, %v1230
  %v1249 = vsel %vm1243, %v1236, 920167782
  %v1250 = vsel %vm1242, %v1233, %v1249
  %v1251 = vsel %vm1241, %v1248, %v1250
  %v1252 = vsel %vm1240, %v1230, %v1233
  %v1253 = vsel %vm1243, %v1239, 1326507024
  %v1254 = vsel %vm1242, %v1236, %v1253
  %v1255 = vsel %vm1241, %v1252, %v1254
  %v1256 = vshll.u32 %v1216, 8
  %v1257 = vmul.u32.u64.compose %v1256, %v1255
  %v1258 = vextract.low.u32 %v1257
  %v1259 = vextract.high.u32 %v1257
  %v1260 = vmul.u32.u64.compose %v1256, %v1251
  %v1261 = vextract.low.u32 %v1260
  %v1262 = vextract.high.u32 %v1260
  %v1263 = vmul.u32 %v1256, %v1247
  %v1264 = vadd.s32 %v1259, %v1261
  %vm1265 = vc.u32 %v1259, %v1261
  %v1266 = vadd.s32 %v1262, 1
  %v1267 = vsel %vm1265, %v1266, %v1262
  %v1268 = vadd.s32 %v1263, %v1267
  %v1269 = vadd.s32 %v1268, 536870912
  %v1270 = vshrl.u32 %v1269, 30
  %v1271 = vshll.u32 %v1270, 30
  %v1272 = vsub.s32 %v1268, %v1271
  %vm1273 = vcmp.lt.s32.totalorder %v1272, 0
  %v1274 = vsub.s32 0, %v1272
  %v1275 = vsel %vm1273, %v1274, %v1272
  %v1276 = vclz %v1275
  %v1277 = vsub.s32 %v1276, 2
  %vm1278 = vcmp.gt.s32.totalorder 0, %v1277
  %v1279 = vsel %vm1278, 0, %v1277
  %v1280 = vsub.s32 32, %v1279
  %v1281 = vshll.u32 %v1272, %v1279
  %v1282 = vshrl.u32 %v1264, %v1280
  %v1283 = vor.u32 %v1281, %v1282
  %v1284 = vsub.s32 4294967266, %v1279
  %v1285 = vadd.s32 %v1284, 127
  %v1286 = vshll.u32 %v1285, 23
  %v1287 = vor.u32 4788187, %v1286
  %v1288 = vand.u32 2147483647, %v1287
  %v1290 = vcvt.s32.f32 %v1283
  %v1291 = vmul.f32 %v1290, %v1288
  %v1292 = vxor.u32 %v1291, 2147483648
  %v1293 = vsel %vm1210, %v1292, %v1291
  %v1294 = vsub.s32 4, %v1270
  %v1295 = vsel %vm1210, %v1294, %v1270
  %v1296 = vsel %vm1209, %v265, %v1293
  %v1297 = vsel %vm1209, 0, %v1295
  %v1298 = vcosq.f32.pop %v1296
  %v1299 = vsinq.f32.pop %v1296
  %vm1300 = vweird.f32 %v265
  %v1301 = vadd.s32 %v1297, 3
  %v1302 = vand.u32 %v1301, 3
  %vm1303 = vcmp.lt.s32.totalorder %v1302, 2
  %vm1304 = vcmp.eq.s32.totalorder %v1302, 0
  %v1305 = vxor.u32 %v1299, 2147483648
  %v1306 = vsel %vm1304, %v1298, %v1305
  %vm1307 = vcmp.eq.s32.totalorder %v1302, 2
  %v1308 = vxor.u32 %v1298, 2147483648
  %v1309 = vsel %vm1307, %v1308, %v1299
  %v1310 = vsel %vm1303, %v1306, %v1309
  %v1311 = vsel %vm1300, nan, %v1310
  %v1312 = vand.u32 2147483647, %v266
  %vm1313 = vcmp.le.f32.partialorder %v1312, 0.7853982
  %vm1314 = vcmp.lt.s32.totalorder %v266, 0
  %v1315 = vand.u32 %v266, 2139095040
  %v1316 = vshrl.u32 %v1315, 23
  %v1317 = vsub.s32 %v1316, 127
  %v1318 = vand.u32 2147483647, %v266
  %v1319 = vand.u32 %v1318, 8388607
  %v1320 = vor.u32 %v1319, 8388608
  %v1321 = vsub.s32 0, %v1320
  %v1322 = vadd.s32 %v1317, 1
  %vm1323 = vcmp.gt.s32.totalorder %v1322, 0
  %v1324 = vsel %vm1323, %v1322, 0
  %v1325 = vshrl.u32 %v1324, 5
  %v1326 = vand.u32 %v1324, 31
  %v1327 = vsub.s32 32, %v1326
  %v1328 = vshrl.u32 683565275, %v1327
  %v1329 = vshll.u32 683565275, %v1326
  %v1330 = vshrl.u32 2475754826, %v1327
  %v1331 = vor.u32 %v1329, %v1330
  %v1332 = vshll.u32 2475754826, %v1326
  %v1333 = vshrl.u32 2131351028, %v1327
  %v1334 = vor.u32 %v1332, %v1333
  %v1335 = vshll.u32 2131351028, %v1326
  %v1336 = vshrl.u32 2102212464, %v1327
  %v1337 = vor.u32 %v1335, %v1336
  %v1338 = vshll.u32 2102212464, %v1326
  %v1339 = vshrl.u32 920167782, %v1327
  %v1340 = vor.u32 %v1338, %v1339
  %v1341 = vshll.u32 920167782, %v1326
  %v1342 = vshrl.u32 1326507024, %v1327
  %v1343 = vor.u32 %v1341, %v1342
  %vm1344 = vcmp.lt.s32.totalorder %v1325, 1
  %vm1345 = vcmp.lt.s32.totalorder %v1325, 2
  %vm1346 = vcmp.lt.s32.totalorder %v1325, 3
  %vm1347 = vcmp.lt.s32.totalorder %v1325, 4
  %v1348 = vsel %vm1344, %v1328, %v1331
  %v1349 = vsel %vm1347, %v1337, 2102212464
  %v1350 = vsel %vm1346, %v1334, %v1349
  %v1351 = vsel %vm1345, %v1348, %v1350
  %v1352 = vsel %vm1344, %v1331, %v1334
  %v1353 = vsel %vm1347, %v1340, 920167782
  %v1354 = vsel %vm1346, %v1337, %v1353
  %v1355 = vsel %vm1345, %v1352, %v1354
  %v1356 = vsel %vm1344, %v1334, %v1337
  %v1357 = vsel %vm1347, %v1343, 1326507024
  %v1358 = vsel %vm1346, %v1340, %v1357
  %v1359 = vsel %vm1345, %v1356, %v1358
  %v1360 = vshll.u32 %v1320, 8
  %v1361 = vmul.u32.u64.compose %v1360, %v1359
  %v1362 = vextract.low.u32 %v1361
  %v1363 = vextract.high.u32 %v1361
  %v1364 = vmul.u32.u64.compose %v1360, %v1355
  %v1365 = vextract.low.u32 %v1364
  %v1366 = vextract.high.u32 %v1364
  %v1367 = vmul.u32 %v1360, %v1351
  %v1368 = vadd.s32 %v1363, %v1365
  %vm1369 = vc.u32 %v1363, %v1365
  %v1370 = vadd.s32 %v1366, 1
  %v1371 = vsel %vm1369, %v1370, %v1366
  %v1372 = vadd.s32 %v1367, %v1371
  %v1373 = vadd.s32 %v1372, 536870912
  %v1374 = vshrl.u32 %v1373, 30
  %v1375 = vshll.u32 %v1374, 30
  %v1376 = vsub.s32 %v1372, %v1375
  %vm1377 = vcmp.lt.s32.totalorder %v1376, 0
  %v1378 = vsub.s32 0, %v1376
  %v1379 = vsel %vm1377, %v1378, %v1376
  %v1380 = vclz %v1379
  %v1381 = vsub.s32 %v1380, 2
  %vm1382 = vcmp.gt.s32.totalorder 0, %v1381
  %v1383 = vsel %vm1382, 0, %v1381
  %v1384 = vsub.s32 32, %v1383
  %v1385 = vshll.u32 %v1376, %v1383
  %v1386 = vshrl.u32 %v1368, %v1384
  %v1387 = vor.u32 %v1385, %v1386
  %v1388 = vsub.s32 4294967266, %v1383
  %v1389 = vadd.s32 %v1388, 127
  %v1390 = vshll.u32 %v1389, 23
  %v1391 = vor.u32 4788187, %v1390
  %v1392 = vand.u32 2147483647, %v1391
  %v1394 = vcvt.s32.f32 %v1387
  %v1395 = vmul.f32 %v1394, %v1392
  %v1396 = vxor.u32 %v1395, 2147483648
  %v1397 = vsel %vm1314, %v1396, %v1395
  %v1398 = vsub.s32 4, %v1374
  %v1399 = vsel %vm1314, %v1398, %v1374
  %v1400 = vsel %vm1313, %v266, %v1397
  %v1401 = vsel %vm1313, 0, %v1399
  %v1402 = vcosq.f32.pop %v1400
  %v1403 = vsinq.f32.pop %v1400
  %vm1404 = vweird.f32 %v266
  %v1405 = vadd.s32 %v1401, 3
  %v1406 = vand.u32 %v1405, 3
  %vm1407 = vcmp.lt.s32.totalorder %v1406, 2
  %vm1408 = vcmp.eq.s32.totalorder %v1406, 0
  %v1409 = vxor.u32 %v1403, 2147483648
  %v1410 = vsel %vm1408, %v1402, %v1409
  %vm1411 = vcmp.eq.s32.totalorder %v1406, 2
  %v1412 = vxor.u32 %v1402, 2147483648
  %v1413 = vsel %vm1411, %v1412, %v1403
  %v1414 = vsel %vm1407, %v1410, %v1413
  %v1415 = vsel %vm1404, nan, %v1414
  %v1416 = vand.u32 2147483647, %v267
  %vm1417 = vcmp.le.f32.partialorder %v1416, 0.7853982
  %vm1418 = vcmp.lt.s32.totalorder %v267, 0
  %v1419 = vand.u32 %v267, 2139095040
  %v1420 = vshrl.u32 %v1419, 23
  %v1421 = vsub.s32 %v1420, 127
  %v1422 = vand.u32 2147483647, %v267
  %v1423 = vand.u32 %v1422, 8388607
  %v1424 = vor.u32 %v1423, 8388608
  %v1425 = vsub.s32 0, %v1424
  %v1426 = vadd.s32 %v1421, 1
  %vm1427 = vcmp.gt.s32.totalorder %v1426, 0
  %v1428 = vsel %vm1427, %v1426, 0
  %v1429 = vshrl.u32 %v1428, 5
  %v1430 = vand.u32 %v1428, 31
  %v1431 = vsub.s32 32, %v1430
  %v1432 = vshrl.u32 683565275, %v1431
  %v1433 = vshll.u32 683565275, %v1430
  %v1434 = vshrl.u32 2475754826, %v1431
  %v1435 = vor.u32 %v1433, %v1434
  %v1436 = vshll.u32 2475754826, %v1430
  %v1437 = vshrl.u32 2131351028, %v1431
  %v1438 = vor.u32 %v1436, %v1437
  %v1439 = vshll.u32 2131351028, %v1430
  %v1440 = vshrl.u32 2102212464, %v1431
  %v1441 = vor.u32 %v1439, %v1440
  %v1442 = vshll.u32 2102212464, %v1430
  %v1443 = vshrl.u32 920167782, %v1431
  %v1444 = vor.u32 %v1442, %v1443
  %v1445 = vshll.u32 920167782, %v1430
  %v1446 = vshrl.u32 1326507024, %v1431
  %v1447 = vor.u32 %v1445, %v1446
  %vm1448 = vcmp.lt.s32.totalorder %v1429, 1
  %vm1449 = vcmp.lt.s32.totalorder %v1429, 2
  %vm1450 = vcmp.lt.s32.totalorder %v1429, 3
  %vm1451 = vcmp.lt.s32.totalorder %v1429, 4
  %v1452 = vsel %vm1448, %v1432, %v1435
  %v1453 = vsel %vm1451, %v1441, 2102212464
  %v1454 = vsel %vm1450, %v1438, %v1453
  %v1455 = vsel %vm1449, %v1452, %v1454
  %v1456 = vsel %vm1448, %v1435, %v1438
  %v1457 = vsel %vm1451, %v1444, 920167782
  %v1458 = vsel %vm1450, %v1441, %v1457
  %v1459 = vsel %vm1449, %v1456, %v1458
  %v1460 = vsel %vm1448, %v1438, %v1441
  %v1461 = vsel %vm1451, %v1447, 1326507024
  %v1462 = vsel %vm1450, %v1444, %v1461
  %v1463 = vsel %vm1449, %v1460, %v1462
  %v1464 = vshll.u32 %v1424, 8
  %v1465 = vmul.u32.u64.compose %v1464, %v1463
  %v1466 = vextract.low.u32 %v1465
  %v1467 = vextract.high.u32 %v1465
  %v1468 = vmul.u32.u64.compose %v1464, %v1459
  %v1469 = vextract.low.u32 %v1468
  %v1470 = vextract.high.u32 %v1468
  %v1471 = vmul.u32 %v1464, %v1455
  %v1472 = vadd.s32 %v1467, %v1469
  %vm1473 = vc.u32 %v1467, %v1469
  %v1474 = vadd.s32 %v1470, 1
  %v1475 = vsel %vm1473, %v1474, %v1470
  %v1476 = vadd.s32 %v1471, %v1475
  %v1477 = vadd.s32 %v1476, 536870912
  %v1478 = vshrl.u32 %v1477, 30
  %v1479 = vshll.u32 %v1478, 30
  %v1480 = vsub.s32 %v1476, %v1479
  %vm1481 = vcmp.lt.s32.totalorder %v1480, 0
  %v1482 = vsub.s32 0, %v1480
  %v1483 = vsel %vm1481, %v1482, %v1480
  %v1484 = vclz %v1483
  %v1485 = vsub.s32 %v1484, 2
  %vm1486 = vcmp.gt.s32.totalorder 0, %v1485
  %v1487 = vsel %vm1486, 0, %v1485
  %v1488 = vsub.s32 32, %v1487
  %v1489 = vshll.u32 %v1480, %v1487
  %v1490 = vshrl.u32 %v1472, %v1488
  %v1491 = vor.u32 %v1489, %v1490
  %v1492 = vsub.s32 4294967266, %v1487
  %v1493 = vadd.s32 %v1492, 127
  %v1494 = vshll.u32 %v1493, 23
  %v1495 = vor.u32 4788187, %v1494
  %v1496 = vand.u32 2147483647, %v1495
  %v1498 = vcvt.s32.f32 %v1491
  %v1499 = vmul.f32 %v1498, %v1496
  %v1500 = vxor.u32 %v1499, 2147483648
  %v1501 = vsel %vm1418, %v1500, %v1499
  %v1502 = vsub.s32 4, %v1478
  %v1503 = vsel %vm1418, %v1502, %v1478
  %v1504 = vsel %vm1417, %v267, %v1501
  %v1505 = vsel %vm1417, 0, %v1503
  %v1506 = vcosq.f32.pop %v1504
  %v1507 = vsinq.f32.pop %v1504
  %vm1508 = vweird.f32 %v267
  %v1509 = vadd.s32 %v1505, 3
  %v1510 = vand.u32 %v1509, 3
  %vm1511 = vcmp.lt.s32.totalorder %v1510, 2
  %vm1512 = vcmp.eq.s32.totalorder %v1510, 0
  %v1513 = vxor.u32 %v1507, 2147483648
  %v1514 = vsel %vm1512, %v1506, %v1513
  %vm1515 = vcmp.eq.s32.totalorder %v1510, 2
  %v1516 = vxor.u32 %v1506, 2147483648
  %v1517 = vsel %vm1515, %v1516, %v1507
  %v1518 = vsel %vm1511, %v1514, %v1517
  %v1519 = vsel %vm1508, nan, %v1518
  %v1520 = vand.u32 2147483647, %v268
  %vm1521 = vcmp.le.f32.partialorder %v1520, 0.7853982
  %vm1522 = vcmp.lt.s32.totalorder %v268, 0
  %v1523 = vand.u32 %v268, 2139095040
  %v1524 = vshrl.u32 %v1523, 23
  %v1525 = vsub.s32 %v1524, 127
  %v1526 = vand.u32 2147483647, %v268
  %v1527 = vand.u32 %v1526, 8388607
  %v1528 = vor.u32 %v1527, 8388608
  %v1529 = vsub.s32 0, %v1528
  %v1530 = vadd.s32 %v1525, 1
  %vm1531 = vcmp.gt.s32.totalorder %v1530, 0
  %v1532 = vsel %vm1531, %v1530, 0
  %v1533 = vshrl.u32 %v1532, 5
  %v1534 = vand.u32 %v1532, 31
  %v1535 = vsub.s32 32, %v1534
  %v1536 = vshrl.u32 683565275, %v1535
  %v1537 = vshll.u32 683565275, %v1534
  %v1538 = vshrl.u32 2475754826, %v1535
  %v1539 = vor.u32 %v1537, %v1538
  %v1540 = vshll.u32 2475754826, %v1534
  %v1541 = vshrl.u32 2131351028, %v1535
  %v1542 = vor.u32 %v1540, %v1541
  %v1543 = vshll.u32 2131351028, %v1534
  %v1544 = vshrl.u32 2102212464, %v1535
  %v1545 = vor.u32 %v1543, %v1544
  %v1546 = vshll.u32 2102212464, %v1534
  %v1547 = vshrl.u32 920167782, %v1535
  %v1548 = vor.u32 %v1546, %v1547
  %v1549 = vshll.u32 920167782, %v1534
  %v1550 = vshrl.u32 1326507024, %v1535
  %v1551 = vor.u32 %v1549, %v1550
  %vm1552 = vcmp.lt.s32.totalorder %v1533, 1
  %vm1553 = vcmp.lt.s32.totalorder %v1533, 2
  %vm1554 = vcmp.lt.s32.totalorder %v1533, 3
  %vm1555 = vcmp.lt.s32.totalorder %v1533, 4
  %v1556 = vsel %vm1552, %v1536, %v1539
  %v1557 = vsel %vm1555, %v1545, 2102212464
  %v1558 = vsel %vm1554, %v1542, %v1557
  %v1559 = vsel %vm1553, %v1556, %v1558
  %v1560 = vsel %vm1552, %v1539, %v1542
  %v1561 = vsel %vm1555, %v1548, 920167782
  %v1562 = vsel %vm1554, %v1545, %v1561
  %v1563 = vsel %vm1553, %v1560, %v1562
  %v1564 = vsel %vm1552, %v1542, %v1545
  %v1565 = vsel %vm1555, %v1551, 1326507024
  %v1566 = vsel %vm1554, %v1548, %v1565
  %v1567 = vsel %vm1553, %v1564, %v1566
  %v1568 = vshll.u32 %v1528, 8
  %v1569 = vmul.u32.u64.compose %v1568, %v1567
  %v1570 = vextract.low.u32 %v1569
  %v1571 = vextract.high.u32 %v1569
  %v1572 = vmul.u32.u64.compose %v1568, %v1563
  %v1573 = vextract.low.u32 %v1572
  %v1574 = vextract.high.u32 %v1572
  %v1575 = vmul.u32 %v1568, %v1559
  %v1576 = vadd.s32 %v1571, %v1573
  %vm1577 = vc.u32 %v1571, %v1573
  %v1578 = vadd.s32 %v1574, 1
  %v1579 = vsel %vm1577, %v1578, %v1574
  %v1580 = vadd.s32 %v1575, %v1579
  %v1581 = vadd.s32 %v1580, 536870912
  %v1582 = vshrl.u32 %v1581, 30
  %v1583 = vshll.u32 %v1582, 30
  %v1584 = vsub.s32 %v1580, %v1583
  %vm1585 = vcmp.lt.s32.totalorder %v1584, 0
  %v1586 = vsub.s32 0, %v1584
  %v1587 = vsel %vm1585, %v1586, %v1584
  %v1588 = vclz %v1587
  %v1589 = vsub.s32 %v1588, 2
  %vm1590 = vcmp.gt.s32.totalorder 0, %v1589
  %v1591 = vsel %vm1590, 0, %v1589
  %v1592 = vsub.s32 32, %v1591
  %v1593 = vshll.u32 %v1584, %v1591
  %v1594 = vshrl.u32 %v1576, %v1592
  %v1595 = vor.u32 %v1593, %v1594
  %v1596 = vsub.s32 4294967266, %v1591
  %v1597 = vadd.s32 %v1596, 127
  %v1598 = vshll.u32 %v1597, 23
  %v1599 = vor.u32 4788187, %v1598
  %v1600 = vand.u32 2147483647, %v1599
  %v1602 = vcvt.s32.f32 %v1595
  %v1603 = vmul.f32 %v1602, %v1600
  %v1604 = vxor.u32 %v1603, 2147483648
  %v1605 = vsel %vm1522, %v1604, %v1603
  %v1606 = vsub.s32 4, %v1582
  %v1607 = vsel %vm1522, %v1606, %v1582
  %v1608 = vsel %vm1521, %v268, %v1605
  %v1609 = vsel %vm1521, 0, %v1607
  %v1610 = vcosq.f32.pop %v1608
  %v1611 = vsinq.f32.pop %v1608
  %vm1612 = vweird.f32 %v268
  %v1613 = vadd.s32 %v1609, 3
  %v1614 = vand.u32 %v1613, 3
  %vm1615 = vcmp.lt.s32.totalorder %v1614, 2
  %vm1616 = vcmp.eq.s32.totalorder %v1614, 0
  %v1617 = vxor.u32 %v1611, 2147483648
  %v1618 = vsel %vm1616, %v1610, %v1617
  %vm1619 = vcmp.eq.s32.totalorder %v1614, 2
  %v1620 = vxor.u32 %v1610, 2147483648
  %v1621 = vsel %vm1619, %v1620, %v1611
  %v1622 = vsel %vm1615, %v1618, %v1621
  %v1623 = vsel %vm1612, nan, %v1622
  %v1624 = vand.u32 2147483647, %v269
  %vm1625 = vcmp.le.f32.partialorder %v1624, 0.7853982
  %vm1626 = vcmp.lt.s32.totalorder %v269, 0
  %v1627 = vand.u32 %v269, 2139095040
  %v1628 = vshrl.u32 %v1627, 23
  %v1629 = vsub.s32 %v1628, 127
  %v1630 = vand.u32 2147483647, %v269
  %v1631 = vand.u32 %v1630, 8388607
  %v1632 = vor.u32 %v1631, 8388608
  %v1633 = vsub.s32 0, %v1632
  %v1634 = vadd.s32 %v1629, 1
  %vm1635 = vcmp.gt.s32.totalorder %v1634, 0
  %v1636 = vsel %vm1635, %v1634, 0
  %v1637 = vshrl.u32 %v1636, 5
  %v1638 = vand.u32 %v1636, 31
  %v1639 = vsub.s32 32, %v1638
  %v1640 = vshrl.u32 683565275, %v1639
  %v1641 = vshll.u32 683565275, %v1638
  %v1642 = vshrl.u32 2475754826, %v1639
  %v1643 = vor.u32 %v1641, %v1642
  %v1644 = vshll.u32 2475754826, %v1638
  %v1645 = vshrl.u32 2131351028, %v1639
  %v1646 = vor.u32 %v1644, %v1645
  %v1647 = vshll.u32 2131351028, %v1638
  %v1648 = vshrl.u32 2102212464, %v1639
  %v1649 = vor.u32 %v1647, %v1648
  %v1650 = vshll.u32 2102212464, %v1638
  %v1651 = vshrl.u32 920167782, %v1639
  %v1652 = vor.u32 %v1650, %v1651
  %v1653 = vshll.u32 920167782, %v1638
  %v1654 = vshrl.u32 1326507024, %v1639
  %v1655 = vor.u32 %v1653, %v1654
  %vm1656 = vcmp.lt.s32.totalorder %v1637, 1
  %vm1657 = vcmp.lt.s32.totalorder %v1637, 2
  %vm1658 = vcmp.lt.s32.totalorder %v1637, 3
  %vm1659 = vcmp.lt.s32.totalorder %v1637, 4
  %v1660 = vsel %vm1656, %v1640, %v1643
  %v1661 = vsel %vm1659, %v1649, 2102212464
  %v1662 = vsel %vm1658, %v1646, %v1661
  %v1663 = vsel %vm1657, %v1660, %v1662
  %v1664 = vsel %vm1656, %v1643, %v1646
  %v1665 = vsel %vm1659, %v1652, 920167782
  %v1666 = vsel %vm1658, %v1649, %v1665
  %v1667 = vsel %vm1657, %v1664, %v1666
  %v1668 = vsel %vm1656, %v1646, %v1649
  %v1669 = vsel %vm1659, %v1655, 1326507024
  %v1670 = vsel %vm1658, %v1652, %v1669
  %v1671 = vsel %vm1657, %v1668, %v1670
  %v1672 = vshll.u32 %v1632, 8
  %v1673 = vmul.u32.u64.compose %v1672, %v1671
  %v1674 = vextract.low.u32 %v1673
  %v1675 = vextract.high.u32 %v1673
  %v1676 = vmul.u32.u64.compose %v1672, %v1667
  %v1677 = vextract.low.u32 %v1676
  %v1678 = vextract.high.u32 %v1676
  %v1679 = vmul.u32 %v1672, %v1663
  %v1680 = vadd.s32 %v1675, %v1677
  %vm1681 = vc.u32 %v1675, %v1677
  %v1682 = vadd.s32 %v1678, 1
  %v1683 = vsel %vm1681, %v1682, %v1678
  %v1684 = vadd.s32 %v1679, %v1683
  %v1685 = vadd.s32 %v1684, 536870912
  %v1686 = vshrl.u32 %v1685, 30
  %v1687 = vshll.u32 %v1686, 30
  %v1688 = vsub.s32 %v1684, %v1687
  %vm1689 = vcmp.lt.s32.totalorder %v1688, 0
  %v1690 = vsub.s32 0, %v1688
  %v1691 = vsel %vm1689, %v1690, %v1688
  %v1692 = vclz %v1691
  %v1693 = vsub.s32 %v1692, 2
  %vm1694 = vcmp.gt.s32.totalorder 0, %v1693
  %v1695 = vsel %vm1694, 0, %v1693
  %v1696 = vsub.s32 32, %v1695
  %v1697 = vshll.u32 %v1688, %v1695
  %v1698 = vshrl.u32 %v1680, %v1696
  %v1699 = vor.u32 %v1697, %v1698
  %v1700 = vsub.s32 4294967266, %v1695
  %v1701 = vadd.s32 %v1700, 127
  %v1702 = vshll.u32 %v1701, 23
  %v1703 = vor.u32 4788187, %v1702
  %v1704 = vand.u32 2147483647, %v1703
  %v1706 = vcvt.s32.f32 %v1699
  %v1707 = vmul.f32 %v1706, %v1704
  %v1708 = vxor.u32 %v1707, 2147483648
  %v1709 = vsel %vm1626, %v1708, %v1707
  %v1710 = vsub.s32 4, %v1686
  %v1711 = vsel %vm1626, %v1710, %v1686
  %v1712 = vsel %vm1625, %v269, %v1709
  %v1713 = vsel %vm1625, 0, %v1711
  %v1714 = vcosq.f32.pop %v1712
  %v1715 = vsinq.f32.pop %v1712
  %vm1716 = vweird.f32 %v269
  %v1717 = vadd.s32 %v1713, 3
  %v1718 = vand.u32 %v1717, 3
  %vm1719 = vcmp.lt.s32.totalorder %v1718, 2
  %vm1720 = vcmp.eq.s32.totalorder %v1718, 0
  %v1721 = vxor.u32 %v1715, 2147483648
  %v1722 = vsel %vm1720, %v1714, %v1721
  %vm1723 = vcmp.eq.s32.totalorder %v1718, 2
  %v1724 = vxor.u32 %v1714, 2147483648
  %v1725 = vsel %vm1723, %v1724, %v1715
  %v1726 = vsel %vm1719, %v1722, %v1725
  %v1727 = vsel %vm1716, nan, %v1726
  %v1728 = vand.u32 2147483647, %v270
  %vm1729 = vcmp.le.f32.partialorder %v1728, 0.7853982
  %vm1730 = vcmp.lt.s32.totalorder %v270, 0
  %v1731 = vand.u32 %v270, 2139095040
  %v1732 = vshrl.u32 %v1731, 23
  %v1733 = vsub.s32 %v1732, 127
  %v1734 = vand.u32 2147483647, %v270
  %v1735 = vand.u32 %v1734, 8388607
  %v1736 = vor.u32 %v1735, 8388608
  %v1737 = vsub.s32 0, %v1736
  %v1738 = vadd.s32 %v1733, 1
  %vm1739 = vcmp.gt.s32.totalorder %v1738, 0
  %v1740 = vsel %vm1739, %v1738, 0
  %v1741 = vshrl.u32 %v1740, 5
  %v1742 = vand.u32 %v1740, 31
  %v1743 = vsub.s32 32, %v1742
  %v1744 = vshrl.u32 683565275, %v1743
  %v1745 = vshll.u32 683565275, %v1742
  %v1746 = vshrl.u32 2475754826, %v1743
  %v1747 = vor.u32 %v1745, %v1746
  %v1748 = vshll.u32 2475754826, %v1742
  %v1749 = vshrl.u32 2131351028, %v1743
  %v1750 = vor.u32 %v1748, %v1749
  %v1751 = vshll.u32 2131351028, %v1742
  %v1752 = vshrl.u32 2102212464, %v1743
  %v1753 = vor.u32 %v1751, %v1752
  %v1754 = vshll.u32 2102212464, %v1742
  %v1755 = vshrl.u32 920167782, %v1743
  %v1756 = vor.u32 %v1754, %v1755
  %v1757 = vshll.u32 920167782, %v1742
  %v1758 = vshrl.u32 1326507024, %v1743
  %v1759 = vor.u32 %v1757, %v1758
  %vm1760 = vcmp.lt.s32.totalorder %v1741, 1
  %vm1761 = vcmp.lt.s32.totalorder %v1741, 2
  %vm1762 = vcmp.lt.s32.totalorder %v1741, 3
  %vm1763 = vcmp.lt.s32.totalorder %v1741, 4
  %v1764 = vsel %vm1760, %v1744, %v1747
  %v1765 = vsel %vm1763, %v1753, 2102212464
  %v1766 = vsel %vm1762, %v1750, %v1765
  %v1767 = vsel %vm1761, %v1764, %v1766
  %v1768 = vsel %vm1760, %v1747, %v1750
  %v1769 = vsel %vm1763, %v1756, 920167782
  %v1770 = vsel %vm1762, %v1753, %v1769
  %v1771 = vsel %vm1761, %v1768, %v1770
  %v1772 = vsel %vm1760, %v1750, %v1753
  %v1773 = vsel %vm1763, %v1759, 1326507024
  %v1774 = vsel %vm1762, %v1756, %v1773
  %v1775 = vsel %vm1761, %v1772, %v1774
  %v1776 = vshll.u32 %v1736, 8
  %v1777 = vmul.u32.u64.compose %v1776, %v1775
  %v1778 = vextract.low.u32 %v1777
  %v1779 = vextract.high.u32 %v1777
  %v1780 = vmul.u32.u64.compose %v1776, %v1771
  %v1781 = vextract.low.u32 %v1780
  %v1782 = vextract.high.u32 %v1780
  %v1783 = vmul.u32 %v1776, %v1767
  %v1784 = vadd.s32 %v1779, %v1781
  %vm1785 = vc.u32 %v1779, %v1781
  %v1786 = vadd.s32 %v1782, 1
  %v1787 = vsel %vm1785, %v1786, %v1782
  %v1788 = vadd.s32 %v1783, %v1787
  %v1789 = vadd.s32 %v1788, 536870912
  %v1790 = vshrl.u32 %v1789, 30
  %v1791 = vshll.u32 %v1790, 30
  %v1792 = vsub.s32 %v1788, %v1791
  %vm1793 = vcmp.lt.s32.totalorder %v1792, 0
  %v1794 = vsub.s32 0, %v1792
  %v1795 = vsel %vm1793, %v1794, %v1792
  %v1796 = vclz %v1795
  %v1797 = vsub.s32 %v1796, 2
  %vm1798 = vcmp.gt.s32.totalorder 0, %v1797
  %v1799 = vsel %vm1798, 0, %v1797
  %v1800 = vsub.s32 32, %v1799
  %v1801 = vshll.u32 %v1792, %v1799
  %v1802 = vshrl.u32 %v1784, %v1800
  %v1803 = vor.u32 %v1801, %v1802
  %v1804 = vsub.s32 4294967266, %v1799
  %v1805 = vadd.s32 %v1804, 127
  %v1806 = vshll.u32 %v1805, 23
  %v1807 = vor.u32 4788187, %v1806
  %v1808 = vand.u32 2147483647, %v1807
  %v1810 = vcvt.s32.f32 %v1803
  %v1811 = vmul.f32 %v1810, %v1808
  %v1812 = vxor.u32 %v1811, 2147483648
  %v1813 = vsel %vm1730, %v1812, %v1811
  %v1814 = vsub.s32 4, %v1790
  %v1815 = vsel %vm1730, %v1814, %v1790
  %v1816 = vsel %vm1729, %v270, %v1813
  %v1817 = vsel %vm1729, 0, %v1815
  %v1818 = vcosq.f32.pop %v1816
  %v1819 = vsinq.f32.pop %v1816
  %vm1820 = vweird.f32 %v270
  %v1821 = vadd.s32 %v1817, 3
  %v1822 = vand.u32 %v1821, 3
  %vm1823 = vcmp.lt.s32.totalorder %v1822, 2
  %vm1824 = vcmp.eq.s32.totalorder %v1822, 0
  %v1825 = vxor.u32 %v1819, 2147483648
  %v1826 = vsel %vm1824, %v1818, %v1825
  %vm1827 = vcmp.eq.s32.totalorder %v1822, 2
  %v1828 = vxor.u32 %v1818, 2147483648
  %v1829 = vsel %vm1827, %v1828, %v1819
  %v1830 = vsel %vm1823, %v1826, %v1829
  %v1831 = vsel %vm1820, nan, %v1830
  %v1832 = vand.u32 2147483647, %v271
  %vm1833 = vcmp.le.f32.partialorder %v1832, 0.7853982
  %vm1834 = vcmp.lt.s32.totalorder %v271, 0
  %v1835 = vand.u32 %v271, 2139095040
  %v1836 = vshrl.u32 %v1835, 23
  %v1837 = vsub.s32 %v1836, 127
  %v1838 = vand.u32 2147483647, %v271
  %v1839 = vand.u32 %v1838, 8388607
  %v1840 = vor.u32 %v1839, 8388608
  %v1841 = vsub.s32 0, %v1840
  %v1842 = vadd.s32 %v1837, 1
  %vm1843 = vcmp.gt.s32.totalorder %v1842, 0
  %v1844 = vsel %vm1843, %v1842, 0
  %v1845 = vshrl.u32 %v1844, 5
  %v1846 = vand.u32 %v1844, 31
  %v1847 = vsub.s32 32, %v1846
  %v1848 = vshrl.u32 683565275, %v1847
  %v1849 = vshll.u32 683565275, %v1846
  %v1850 = vshrl.u32 2475754826, %v1847
  %v1851 = vor.u32 %v1849, %v1850
  %v1852 = vshll.u32 2475754826, %v1846
  %v1853 = vshrl.u32 2131351028, %v1847
  %v1854 = vor.u32 %v1852, %v1853
  %v1855 = vshll.u32 2131351028, %v1846
  %v1856 = vshrl.u32 2102212464, %v1847
  %v1857 = vor.u32 %v1855, %v1856
  %v1858 = vshll.u32 2102212464, %v1846
  %v1859 = vshrl.u32 920167782, %v1847
  %v1860 = vor.u32 %v1858, %v1859
  %v1861 = vshll.u32 920167782, %v1846
  %v1862 = vshrl.u32 1326507024, %v1847
  %v1863 = vor.u32 %v1861, %v1862
  %vm1864 = vcmp.lt.s32.totalorder %v1845, 1
  %vm1865 = vcmp.lt.s32.totalorder %v1845, 2
  %vm1866 = vcmp.lt.s32.totalorder %v1845, 3
  %vm1867 = vcmp.lt.s32.totalorder %v1845, 4
  %v1868 = vsel %vm1864, %v1848, %v1851
  %v1869 = vsel %vm1867, %v1857, 2102212464
  %v1870 = vsel %vm1866, %v1854, %v1869
  %v1871 = vsel %vm1865, %v1868, %v1870
  %v1872 = vsel %vm1864, %v1851, %v1854
  %v1873 = vsel %vm1867, %v1860, 920167782
  %v1874 = vsel %vm1866, %v1857, %v1873
  %v1875 = vsel %vm1865, %v1872, %v1874
  %v1876 = vsel %vm1864, %v1854, %v1857
  %v1877 = vsel %vm1867, %v1863, 1326507024
  %v1878 = vsel %vm1866, %v1860, %v1877
  %v1879 = vsel %vm1865, %v1876, %v1878
  %v1880 = vshll.u32 %v1840, 8
  %v1881 = vmul.u32.u64.compose %v1880, %v1879
  %v1882 = vextract.low.u32 %v1881
  %v1883 = vextract.high.u32 %v1881
  %v1884 = vmul.u32.u64.compose %v1880, %v1875
  %v1885 = vextract.low.u32 %v1884
  %v1886 = vextract.high.u32 %v1884
  %v1887 = vmul.u32 %v1880, %v1871
  %v1888 = vadd.s32 %v1883, %v1885
  %vm1889 = vc.u32 %v1883, %v1885
  %v1890 = vadd.s32 %v1886, 1
  %v1891 = vsel %vm1889, %v1890, %v1886
  %v1892 = vadd.s32 %v1887, %v1891
  %v1893 = vadd.s32 %v1892, 536870912
  %v1894 = vshrl.u32 %v1893, 30
  %v1895 = vshll.u32 %v1894, 30
  %v1896 = vsub.s32 %v1892, %v1895
  %vm1897 = vcmp.lt.s32.totalorder %v1896, 0
  %v1898 = vsub.s32 0, %v1896
  %v1899 = vsel %vm1897, %v1898, %v1896
  %v1900 = vclz %v1899
  %v1901 = vsub.s32 %v1900, 2
  %vm1902 = vcmp.gt.s32.totalorder 0, %v1901
  %v1903 = vsel %vm1902, 0, %v1901
  %v1904 = vsub.s32 32, %v1903
  %v1905 = vshll.u32 %v1896, %v1903
  %v1906 = vshrl.u32 %v1888, %v1904
  %v1907 = vor.u32 %v1905, %v1906
  %v1908 = vsub.s32 4294967266, %v1903
  %v1909 = vadd.s32 %v1908, 127
  %v1910 = vshll.u32 %v1909, 23
  %v1911 = vor.u32 4788187, %v1910
  %v1912 = vand.u32 2147483647, %v1911
  %v1914 = vcvt.s32.f32 %v1907
  %v1915 = vmul.f32 %v1914, %v1912
  %v1916 = vxor.u32 %v1915, 2147483648
  %v1917 = vsel %vm1834, %v1916, %v1915
  %v1918 = vsub.s32 4, %v1894
  %v1919 = vsel %vm1834, %v1918, %v1894
  %v1920 = vsel %vm1833, %v271, %v1917
  %v1921 = vsel %vm1833, 0, %v1919
  %v1922 = vcosq.f32.pop %v1920
  %v1923 = vsinq.f32.pop %v1920
  %vm1924 = vweird.f32 %v271
  %v1925 = vadd.s32 %v1921, 3
  %v1926 = vand.u32 %v1925, 3
  %vm1927 = vcmp.lt.s32.totalorder %v1926, 2
  %vm1928 = vcmp.eq.s32.totalorder %v1926, 0
  %v1929 = vxor.u32 %v1923, 2147483648
  %v1930 = vsel %vm1928, %v1922, %v1929
  %vm1931 = vcmp.eq.s32.totalorder %v1926, 2
  %v1932 = vxor.u32 %v1922, 2147483648
  %v1933 = vsel %vm1931, %v1932, %v1923
  %v1934 = vsel %vm1927, %v1930, %v1933
  %v1935 = vsel %vm1924, nan, %v1934
  %v1936 = vld [vmem:[%s3] sm:$0xff]
  %v1937 = vld [vmem:[%s3 + $0x8] sm:$0x3]
  %v1938 = vld [vmem:[%s4] sm:$0xff]
  %v1939 = vld [vmem:[%s4 + $0x8] sm:$0x3]
  %1941 = vset.pattern.permute.xlu0 0
  %1942 = vperm.xlu0 %1941, %v1938
  %v1943 = vpop.permute.xlu0 %1942
  %1946 = vset.pattern.permute.xlu0 0
  %1947 = vperm.xlu0 %1946, %v1939
  %v1948 = vpop.permute.xlu0 %1947
  %vm1950 = vcmask 80896
  %v1952 = vsel %vm1950, %v1936, 0
  %v1955 = vsel %vm1950, %v1937, 0
  %vm1957 = vcmask 1041408
  %v1959 = vsel %vm1957, %v1207, 0
  %v1962 = vsel %vm1957, %v1311, 0
  %v1965 = vsel %vm1957, %v1415, 0
  %v1968 = vsel %vm1957, %v1519, 0
  %v1971 = vsel %vm1957, %v1623, 0
  %v1974 = vsel %vm1957, %v1727, 0
  %v1977 = vsel %vm1957, %v1831, 0
  %v1980 = vsel %vm1957, %v1935, 0
  %1982 = vmatprep.subr.mxu0 %v479
  %1983 = vmatpush1.msra.mxu0 %v375
  %1984 = vmatprep.subr.mxu0 %v1962
  %1985 = vmatpush1.msra.mxu0 %v1959
  %1986 = vmatprep.subr.mxu0 0.0
  %1987 = vmatpush1.msra.mxu0 0.0
  %1988 = vmatprep.subr.mxu0 0.0
  %1989 = vmatpush1.msra.mxu0 0.0
  %1990 = vmatprep.subr.mxu0 0.0
  %1991 = vmatpush1.msra.mxu0 0.0
  %1992 = vmatprep.subr.mxu0 0.0
  %1993 = vmatpush1.msra.mxu0 0.0
  %1994 = vmatprep.subr.mxu0 0.0
  %1995 = vmatpush1.msra.mxu0 0.0
  %1996 = vmatprep.subr.mxu0 0.0
  %1997 = vmatpush1.msra.mxu0 0.0
  %1998 = vmatprep.subr.mxu0 0.0
  %1999 = vmatpush1.msra.mxu0 0.0
  %2000 = vmatprep.subr.mxu0 0.0
  %2001 = vmatpush1.msra.mxu0 0.0
  %2002 = vmatprep.subr.mxu0 0.0
  %2003 = vmatpush1.msra.mxu0 0.0
  %2004 = vmatprep.subr.mxu0 0.0
  %2005 = vmatpush1.msra.mxu0 0.0
  %2006 = vmatprep.subr.mxu0 0.0
  %2007 = vmatpush1.msra.mxu0 0.0
  %2008 = vmatprep.subr.mxu0 0.0
  %2009 = vmatpush1.msra.mxu0 0.0
  %2010 = vmatprep.subr.mxu0 0.0
  %2011 = vmatpush1.msra.mxu0 0.0
  %2012 = vmatprep.subr.mxu0 0.0
  %2013 = vmatpush1.msra.mxu0 0.0
  %2014 = vmatprep.subr.mxu0 0.0
  %2015 = vmatpush1.msra.mxu0 0.0
  %2016 = vmatprep.subr.mxu0 0.0
  %2017 = vmatpush1.msra.mxu0 0.0
  %2018 = vmatprep.subr.mxu0 0.0
  %2019 = vmatpush1.msra.mxu0 0.0
  %2020 = vmatprep.subr.mxu0 0.0
  %2021 = vmatpush1.msra.mxu0 0.0
  %2022 = vmatprep.subr.mxu0 0.0
  %2023 = vmatpush1.msra.mxu0 0.0
  %2024 = vmatprep.subr.mxu0 0.0
  %2025 = vmatpush1.msra.mxu0 0.0
  %2026 = vmatprep.subr.mxu0 0.0
  %2027 = vmatpush1.msra.mxu0 0.0
  %2028 = vmatprep.subr.mxu0 0.0
  %2029 = vmatpush1.msra.mxu0 0.0
  %2030 = vmatprep.subr.mxu0 0.0
  %2031 = vmatpush1.msra.mxu0 0.0
  %2032 = vmatprep.subr.mxu0 0.0
  %2033 = vmatpush1.msra.mxu0 0.0
  %2034 = vmatprep.subr.mxu0 0.0
  %2035 = vmatpush1.msra.mxu0 0.0
  %2036 = vmatprep.subr.mxu0 0.0
  %2037 = vmatpush1.msra.mxu0 0.0
  %2038 = vmatprep.subr.mxu0 0.0
  %2039 = vmatpush1.msra.mxu0 0.0
  %2040 = vmatprep.subr.mxu0 0.0
  %2041 = vmatpush1.msra.mxu0 0.0
  %2042 = vmatprep.subr.mxu0 0.0
  %2043 = vmatpush1.msra.mxu0 0.0
  %2044 = vmatprep.subr.mxu0 0.0
  %2045 = vmatpush1.msra.mxu0 0.0
  %2046 = vmatprep.mubr.f32.mxu0 0.0
  %2047 = vmatmul.mubr.f32.gmra.mrb[0].mxu0 %v1952
  %v2048 = vpop.f32.mrb[0].mxu0
  %v2049 = vadd.f32 %v1943, %v2048
  %v2050 = vpop.f32.mrb[0].mxu0
  %v2051 = vadd.f32 %v1943, %v2050
  %2052 = vmatprep.mubr.f32.mxu0 0.0
  %2053 = vmatmul.mubr.f32.gmra.mrb[0].mxu0 %v1955
  %v2054 = vpop.f32.mrb[0].mxu0
  %v2055 = vadd.f32 %v1948, %v2054
  %v2056 = vpop.f32.mrb[0].mxu0
  %v2057 = vadd.f32 %v1948, %v2056
  %2058 = vdwg.mxu0
  %2059 = vmatprep.subr.mxu0 %v687
  %2060 = vmatpush1.msra.mxu0 %v583
  %2061 = vmatprep.subr.mxu0 %v1968
  %2062 = vmatpush1.msra.mxu0 %v1965
  %2063 = vmatprep.subr.mxu0 0.0
  %2064 = vmatpush1.msra.mxu0 0.0
  %2065 = vmatprep.subr.mxu0 0.0
  %2066 = vmatpush1.msra.mxu0 0.0
  %2067 = vmatprep.subr.mxu0 0.0
  %2068 = vmatpush1.msra.mxu0 0.0
  %2069 = vmatprep.subr.mxu0 0.0
  %2070 = vmatpush1.msra.mxu0 0.0
  %2071 = vmatprep.subr.mxu0 0.0
  %2072 = vmatpush1.msra.mxu0 0.0
  %2073 = vmatprep.subr.mxu0 0.0
  %2074 = vmatpush1.msra.mxu0 0.0
  %2075 = vmatprep.subr.mxu0 0.0
  %2076 = vmatpush1.msra.mxu0 0.0
  %2077 = vmatprep.subr.mxu0 0.0
  %2078 = vmatpush1.msra.mxu0 0.0
  %2079 = vmatprep.subr.mxu0 0.0
  %2080 = vmatpush1.msra.mxu0 0.0
  %2081 = vmatprep.subr.mxu0 0.0
  %2082 = vmatpush1.msra.mxu0 0.0
  %2083 = vmatprep.subr.mxu0 0.0
  %2084 = vmatpush1.msra.mxu0 0.0
  %2085 = vmatprep.subr.mxu0 0.0
  %2086 = vmatpush1.msra.mxu0 0.0
  %2087 = vmatprep.subr.mxu0 0.0
  %2088 = vmatpush1.msra.mxu0 0.0
  %2089 = vmatprep.subr.mxu0 0.0
  %2090 = vmatpush1.msra.mxu0 0.0
  %2091 = vmatprep.subr.mxu0 0.0
  %2092 = vmatpush1.msra.mxu0 0.0
  %2093 = vmatprep.subr.mxu0 0.0
  %2094 = vmatpush1.msra.mxu0 0.0
  %2095 = vmatprep.subr.mxu0 0.0
  %2096 = vmatpush1.msra.mxu0 0.0
  %2097 = vmatprep.subr.mxu0 0.0
  %2098 = vmatpush1.msra.mxu0 0.0
  %2099 = vmatprep.subr.mxu0 0.0
  %2100 = vmatpush1.msra.mxu0 0.0
  %2101 = vmatprep.subr.mxu0 0.0
  %2102 = vmatpush1.msra.mxu0 0.0
  %2103 = vmatprep.subr.mxu0 0.0
  %2104 = vmatpush1.msra.mxu0 0.0
  %2105 = vmatprep.subr.mxu0 0.0
  %2106 = vmatpush1.msra.mxu0 0.0
  %2107 = vmatprep.subr.mxu0 0.0
  %2108 = vmatpush1.msra.mxu0 0.0
  %2109 = vmatprep.subr.mxu0 0.0
  %2110 = vmatpush1.msra.mxu0 0.0
  %2111 = vmatprep.subr.mxu0 0.0
  %2112 = vmatpush1.msra.mxu0 0.0
  %2113 = vmatprep.subr.mxu0 0.0
  %2114 = vmatpush1.msra.mxu0 0.0
  %2115 = vmatprep.subr.mxu0 0.0
  %2116 = vmatpush1.msra.mxu0 0.0
  %2117 = vmatprep.subr.mxu0 0.0
  %2118 = vmatpush1.msra.mxu0 0.0
  %2119 = vmatprep.subr.mxu0 0.0
  %2120 = vmatpush1.msra.mxu0 0.0
  %2121 = vmatprep.subr.mxu0 0.0
  %2122 = vmatpush1.msra.mxu0 0.0
  %2123 = vmatprep.mubr.f32.mxu0 0.0
  %2124 = vmatmul.mubr.f32.gmra.mrb[0].mxu0 %v1952
  %v2125 = vpop.f32.mrb[0].mxu0
  %v2126 = vadd.f32 %v1943, %v2125
  %v2127 = vpop.f32.mrb[0].mxu0
  %v2128 = vadd.f32 %v1943, %v2127
  %2129 = vmatprep.mubr.f32.mxu0 0.0
  %2130 = vmatmul.mubr.f32.gmra.mrb[0].mxu0 %v1955
  %v2131 = vpop.f32.mrb[0].mxu0
  %v2132 = vadd.f32 %v1948, %v2131
  %v2133 = vpop.f32.mrb[0].mxu0
  %v2134 = vadd.f32 %v1948, %v2133
  %2135 = vdwg.mxu0
  %2136 = vmatprep.subr.mxu0 %v895
  %2137 = vmatpush1.msra.mxu0 %v791
  %2138 = vmatprep.subr.mxu0 %v1974
  %2139 = vmatpush1.msra.mxu0 %v1971
  %2140 = vmatprep.subr.mxu0 0.0
  %2141 = vmatpush1.msra.mxu0 0.0
  %2142 = vmatprep.subr.mxu0 0.0
  %2143 = vmatpush1.msra.mxu0 0.0
  %2144 = vmatprep.subr.mxu0 0.0
  %2145 = vmatpush1.msra.mxu0 0.0
  %2146 = vmatprep.subr.mxu0 0.0
  %2147 = vmatpush1.msra.mxu0 0.0
  %2148 = vmatprep.subr.mxu0 0.0
  %2149 = vmatpush1.msra.mxu0 0.0
  %2150 = vmatprep.subr.mxu0 0.0
  %2151 = vmatpush1.msra.mxu0 0.0
  %2152 = vmatprep.subr.mxu0 0.0
  %2153 = vmatpush1.msra.mxu0 0.0
  %2154 = vmatprep.subr.mxu0 0.0
  %2155 = vmatpush1.msra.mxu0 0.0
  %2156 = vmatprep.subr.mxu0 0.0
  %2157 = vmatpush1.msra.mxu0 0.0
  %2158 = vmatprep.subr.mxu0 0.0
  %2159 = vmatpush1.msra.mxu0 0.0
  %2160 = vmatprep.subr.mxu0 0.0
  %2161 = vmatpush1.msra.mxu0 0.0
  %2162 = vmatprep.subr.mxu0 0.0
  %2163 = vmatpush1.msra.mxu0 0.0
  %2164 = vmatprep.subr.mxu0 0.0
  %2165 = vmatpush1.msra.mxu0 0.0
  %2166 = vmatprep.subr.mxu0 0.0
  %2167 = vmatpush1.msra.mxu0 0.0
  %2168 = vmatprep.subr.mxu0 0.0
  %2169 = vmatpush1.msra.mxu0 0.0
  %2170 = vmatprep.subr.mxu0 0.0
  %2171 = vmatpush1.msra.mxu0 0.0
  %2172 = vmatprep.subr.mxu0 0.0
  %2173 = vmatpush1.msra.mxu0 0.0
  %2174 = vmatprep.subr.mxu0 0.0
  %2175 = vmatpush1.msra.mxu0 0.0
  %2176 = vmatprep.subr.mxu0 0.0
  %2177 = vmatpush1.msra.mxu0 0.0
  %2178 = vmatprep.subr.mxu0 0.0
  %2179 = vmatpush1.msra.mxu0 0.0
  %2180 = vmatprep.subr.mxu0 0.0
  %2181 = vmatpush1.msra.mxu0 0.0
  %2182 = vmatprep.subr.mxu0 0.0
  %2183 = vmatpush1.msra.mxu0 0.0
  %2184 = vmatprep.subr.mxu0 0.0
  %2185 = vmatpush1.msra.mxu0 0.0
  %2186 = vmatprep.subr.mxu0 0.0
  %2187 = vmatpush1.msra.mxu0 0.0
  %2188 = vmatprep.subr.mxu0 0.0
  %2189 = vmatpush1.msra.mxu0 0.0
  %2190 = vmatprep.subr.mxu0 0.0
  %2191 = vmatpush1.msra.mxu0 0.0
  %2192 = vmatprep.subr.mxu0 0.0
  %2193 = vmatpush1.msra.mxu0 0.0
  %2194 = vmatprep.subr.mxu0 0.0
  %2195 = vmatpush1.msra.mxu0 0.0
  %2196 = vmatprep.subr.mxu0 0.0
  %2197 = vmatpush1.msra.mxu0 0.0
  %2198 = vmatprep.subr.mxu0 0.0
  %2199 = vmatpush1.msra.mxu0 0.0
  %2200 = vmatprep.mubr.f32.mxu0 0.0
  %2201 = vmatmul.mubr.f32.gmra.mrb[0].mxu0 %v1952
  %v2202 = vpop.f32.mrb[0].mxu0
  %v2203 = vadd.f32 %v1943, %v2202
  %v2204 = vpop.f32.mrb[0].mxu0
  %v2205 = vadd.f32 %v1943, %v2204
  %2206 = vmatprep.mubr.f32.mxu0 0.0
  %2207 = vmatmul.mubr.f32.gmra.mrb[0].mxu0 %v1955
  %v2208 = vpop.f32.mrb[0].mxu0
  %v2209 = vadd.f32 %v1948, %v2208
  %v2210 = vpop.f32.mrb[0].mxu0
  %v2211 = vadd.f32 %v1948, %v2210
  %2212 = vdwg.mxu0
  %2213 = vmatprep.subr.mxu0 %v1103
  %2214 = vmatpush1.msra.mxu0 %v999
  %2215 = vmatprep.subr.mxu0 %v1980
  %2216 = vmatpush1.msra.mxu0 %v1977
  %2217 = vmatprep.subr.mxu0 0.0
  %2218 = vmatpush1.msra.mxu0 0.0
  %2219 = vmatprep.subr.mxu0 0.0
  %2220 = vmatpush1.msra.mxu0 0.0
  %2221 = vmatprep.subr.mxu0 0.0
  %2222 = vmatpush1.msra.mxu0 0.0
  %2223 = vmatprep.subr.mxu0 0.0
  %2224 = vmatpush1.msra.mxu0 0.0
  %2225 = vmatprep.subr.mxu0 0.0
  %2226 = vmatpush1.msra.mxu0 0.0
  %2227 = vmatprep.subr.mxu0 0.0
  %2228 = vmatpush1.msra.mxu0 0.0
  %2229 = vmatprep.subr.mxu0 0.0
  %2230 = vmatpush1.msra.mxu0 0.0
  %2231 = vmatprep.subr.mxu0 0.0
  %2232 = vmatpush1.msra.mxu0 0.0
  %2233 = vmatprep.subr.mxu0 0.0
  %2234 = vmatpush1.msra.mxu0 0.0
  %2235 = vmatprep.subr.mxu0 0.0
  %2236 = vmatpush1.msra.mxu0 0.0
  %2237 = vmatprep.subr.mxu0 0.0
  %2238 = vmatpush1.msra.mxu0 0.0
  %2239 = vmatprep.subr.mxu0 0.0
  %2240 = vmatpush1.msra.mxu0 0.0
  %2241 = vmatprep.subr.mxu0 0.0
  %2242 = vmatpush1.msra.mxu0 0.0
  %2243 = vmatprep.subr.mxu0 0.0
  %2244 = vmatpush1.msra.mxu0 0.0
  %2245 = vmatprep.subr.mxu0 0.0
  %2246 = vmatpush1.msra.mxu0 0.0
  %2247 = vmatprep.subr.mxu0 0.0
  %2248 = vmatpush1.msra.mxu0 0.0
  %2249 = vmatprep.subr.mxu0 0.0
  %2250 = vmatpush1.msra.mxu0 0.0
  %2251 = vmatprep.subr.mxu0 0.0
  %2252 = vmatpush1.msra.mxu0 0.0
  %2253 = vmatprep.subr.mxu0 0.0
  %2254 = vmatpush1.msra.mxu0 0.0
  %2255 = vmatprep.subr.mxu0 0.0
  %2256 = vmatpush1.msra.mxu0 0.0
  %2257 = vmatprep.subr.mxu0 0.0
  %2258 = vmatpush1.msra.mxu0 0.0
  %2259 = vmatprep.subr.mxu0 0.0
  %2260 = vmatpush1.msra.mxu0 0.0
  %2261 = vmatprep.subr.mxu0 0.0
  %2262 = vmatpush1.msra.mxu0 0.0
  %2263 = vmatprep.subr.mxu0 0.0
  %2264 = vmatpush1.msra.mxu0 0.0
  %2265 = vmatprep.subr.mxu0 0.0
  %2266 = vmatpush1.msra.mxu0 0.0
  %2267 = vmatprep.subr.mxu0 0.0
  %2268 = vmatpush1.msra.mxu0 0.0
  %2269 = vmatprep.subr.mxu0 0.0
  %2270 = vmatpush1.msra.mxu0 0.0
  %2271 = vmatprep.subr.mxu0 0.0
  %2272 = vmatpush1.msra.mxu0 0.0
  %2273 = vmatprep.subr.mxu0 0.0
  %2274 = vmatpush1.msra.mxu0 0.0
  %2275 = vmatprep.subr.mxu0 0.0
  %2276 = vmatpush1.msra.mxu0 0.0
  %2277 = vmatprep.mubr.f32.mxu0 0.0
  %2278 = vmatmul.mubr.f32.gmra.mrb[0].mxu0 %v1952
  %v2279 = vpop.f32.mrb[0].mxu0
  %v2280 = vadd.f32 %v1943, %v2279
  %v2281 = vpop.f32.mrb[0].mxu0
  %v2282 = vadd.f32 %v1943, %v2281
  %2283 = vmatprep.mubr.f32.mxu0 0.0
  %2284 = vmatmul.mubr.f32.gmra.mrb[0].mxu0 %v1955
  %v2285 = vpop.f32.mrb[0].mxu0
  %v2286 = vadd.f32 %v1948, %v2285
  %v2287 = vpop.f32.mrb[0].mxu0
  %v2288 = vadd.f32 %v1948, %v2287
  %2289 = vdwg.mxu0
  %v2290 = vand.u32 2147483647, %v2049
  %vm2291 = vcmp.le.f32.partialorder %v2290, 0.7853982
  %vm2292 = vcmp.lt.s32.totalorder %v2049, 0
  %v2293 = vand.u32 %v2049, 2139095040
  %v2294 = vshrl.u32 %v2293, 23
  %v2295 = vsub.s32 %v2294, 127
  %v2296 = vand.u32 2147483647, %v2049
  %v2297 = vand.u32 %v2296, 8388607
  %v2298 = vor.u32 %v2297, 8388608
  %v2299 = vsub.s32 0, %v2298
  %v2300 = vadd.s32 %v2295, 1
  %vm2301 = vcmp.gt.s32.totalorder %v2300, 0
  %v2302 = vsel %vm2301, %v2300, 0
  %v2303 = vshrl.u32 %v2302, 5
  %v2304 = vand.u32 %v2302, 31
  %v2305 = vsub.s32 32, %v2304
  %v2306 = vshrl.u32 683565275, %v2305
  %v2307 = vshll.u32 683565275, %v2304
  %v2308 = vshrl.u32 2475754826, %v2305
  %v2309 = vor.u32 %v2307, %v2308
  %v2310 = vshll.u32 2475754826, %v2304
  %v2311 = vshrl.u32 2131351028, %v2305
  %v2312 = vor.u32 %v2310, %v2311
  %v2313 = vshll.u32 2131351028, %v2304
  %v2314 = vshrl.u32 2102212464, %v2305
  %v2315 = vor.u32 %v2313, %v2314
  %v2316 = vshll.u32 2102212464, %v2304
  %v2317 = vshrl.u32 920167782, %v2305
  %v2318 = vor.u32 %v2316, %v2317
  %v2319 = vshll.u32 920167782, %v2304
  %v2320 = vshrl.u32 1326507024, %v2305
  %v2321 = vor.u32 %v2319, %v2320
  %vm2322 = vcmp.lt.s32.totalorder %v2303, 1
  %vm2323 = vcmp.lt.s32.totalorder %v2303, 2
  %vm2324 = vcmp.lt.s32.totalorder %v2303, 3
  %vm2325 = vcmp.lt.s32.totalorder %v2303, 4
  %v2326 = vsel %vm2322, %v2306, %v2309
  %v2327 = vsel %vm2325, %v2315, 2102212464
  %v2328 = vsel %vm2324, %v2312, %v2327
  %v2329 = vsel %vm2323, %v2326, %v2328
  %v2330 = vsel %vm2322, %v2309, %v2312
  %v2331 = vsel %vm2325, %v2318, 920167782
  %v2332 = vsel %vm2324, %v2315, %v2331
  %v2333 = vsel %vm2323, %v2330, %v2332
  %v2334 = vsel %vm2322, %v2312, %v2315
  %v2335 = vsel %vm2325, %v2321, 1326507024
  %v2336 = vsel %vm2324, %v2318, %v2335
  %v2337 = vsel %vm2323, %v2334, %v2336
  %v2338 = vshll.u32 %v2298, 8
  %v2339 = vmul.u32.u64.compose %v2338, %v2337
  %v2340 = vextract.low.u32 %v2339
  %v2341 = vextract.high.u32 %v2339
  %v2342 = vmul.u32.u64.compose %v2338, %v2333
  %v2343 = vextract.low.u32 %v2342
  %v2344 = vextract.high.u32 %v2342
  %v2345 = vmul.u32 %v2338, %v2329
  %v2346 = vadd.s32 %v2341, %v2343
  %vm2347 = vc.u32 %v2341, %v2343
  %v2348 = vadd.s32 %v2344, 1
  %v2349 = vsel %vm2347, %v2348, %v2344
  %v2350 = vadd.s32 %v2345, %v2349
  %v2351 = vadd.s32 %v2350, 536870912
  %v2352 = vshrl.u32 %v2351, 30
  %v2353 = vshll.u32 %v2352, 30
  %v2354 = vsub.s32 %v2350, %v2353
  %vm2355 = vcmp.lt.s32.totalorder %v2354, 0
  %v2356 = vsub.s32 0, %v2354
  %v2357 = vsel %vm2355, %v2356, %v2354
  %v2358 = vclz %v2357
  %v2359 = vsub.s32 %v2358, 2
  %vm2360 = vcmp.gt.s32.totalorder 0, %v2359
  %v2361 = vsel %vm2360, 0, %v2359
  %v2362 = vsub.s32 32, %v2361
  %v2363 = vshll.u32 %v2354, %v2361
  %v2364 = vshrl.u32 %v2346, %v2362
  %v2365 = vor.u32 %v2363, %v2364
  %v2366 = vsub.s32 4294967266, %v2361
  %v2367 = vadd.s32 %v2366, 127
  %v2368 = vshll.u32 %v2367, 23
  %v2369 = vor.u32 4788187, %v2368
  %v2370 = vand.u32 2147483647, %v2369
  %v2372 = vcvt.s32.f32 %v2365
  %v2373 = vmul.f32 %v2372, %v2370
  %v2374 = vxor.u32 %v2373, 2147483648
  %v2375 = vsel %vm2292, %v2374, %v2373
  %v2376 = vsub.s32 4, %v2352
  %v2377 = vsel %vm2292, %v2376, %v2352
  %v2378 = vsel %vm2291, %v2049, %v2375
  %v2379 = vsel %vm2291, 0, %v2377
  %v2380 = vcosq.f32.pop %v2378
  %v2381 = vsinq.f32.pop %v2378
  %vm2382 = vweird.f32 %v2049
  %v2383 = vadd.s32 %v2379, 3
  %v2384 = vand.u32 %v2383, 3
  %vm2385 = vcmp.lt.s32.totalorder %v2384, 2
  %vm2386 = vcmp.eq.s32.totalorder %v2384, 0
  %v2387 = vxor.u32 %v2381, 2147483648
  %v2388 = vsel %vm2386, %v2380, %v2387
  %vm2389 = vcmp.eq.s32.totalorder %v2384, 2
  %v2390 = vxor.u32 %v2380, 2147483648
  %v2391 = vsel %vm2389, %v2390, %v2381
  %v2392 = vsel %vm2385, %v2388, %v2391
  %v2393 = vsel %vm2382, nan, %v2392
  %v2394 = vand.u32 2147483647, %v2051
  %vm2395 = vcmp.le.f32.partialorder %v2394, 0.7853982
  %vm2396 = vcmp.lt.s32.totalorder %v2051, 0
  %v2397 = vand.u32 %v2051, 2139095040
  %v2398 = vshrl.u32 %v2397, 23
  %v2399 = vsub.s32 %v2398, 127
  %v2400 = vand.u32 2147483647, %v2051
  %v2401 = vand.u32 %v2400, 8388607
  %v2402 = vor.u32 %v2401, 8388608
  %v2403 = vsub.s32 0, %v2402
  %v2404 = vadd.s32 %v2399, 1
  %vm2405 = vcmp.gt.s32.totalorder %v2404, 0
  %v2406 = vsel %vm2405, %v2404, 0
  %v2407 = vshrl.u32 %v2406, 5
  %v2408 = vand.u32 %v2406, 31
  %v2409 = vsub.s32 32, %v2408
  %v2410 = vshrl.u32 683565275, %v2409
  %v2411 = vshll.u32 683565275, %v2408
  %v2412 = vshrl.u32 2475754826, %v2409
  %v2413 = vor.u32 %v2411, %v2412
  %v2414 = vshll.u32 2475754826, %v2408
  %v2415 = vshrl.u32 2131351028, %v2409
  %v2416 = vor.u32 %v2414, %v2415
  %v2417 = vshll.u32 2131351028, %v2408
  %v2418 = vshrl.u32 2102212464, %v2409
  %v2419 = vor.u32 %v2417, %v2418
  %v2420 = vshll.u32 2102212464, %v2408
  %v2421 = vshrl.u32 920167782, %v2409
  %v2422 = vor.u32 %v2420, %v2421
  %v2423 = vshll.u32 920167782, %v2408
  %v2424 = vshrl.u32 1326507024, %v2409
  %v2425 = vor.u32 %v2423, %v2424
  %vm2426 = vcmp.lt.s32.totalorder %v2407, 1
  %vm2427 = vcmp.lt.s32.totalorder %v2407, 2
  %vm2428 = vcmp.lt.s32.totalorder %v2407, 3
  %vm2429 = vcmp.lt.s32.totalorder %v2407, 4
  %v2430 = vsel %vm2426, %v2410, %v2413
  %v2431 = vsel %vm2429, %v2419, 2102212464
  %v2432 = vsel %vm2428, %v2416, %v2431
  %v2433 = vsel %vm2427, %v2430, %v2432
  %v2434 = vsel %vm2426, %v2413, %v2416
  %v2435 = vsel %vm2429, %v2422, 920167782
  %v2436 = vsel %vm2428, %v2419, %v2435
  %v2437 = vsel %vm2427, %v2434, %v2436
  %v2438 = vsel %vm2426, %v2416, %v2419
  %v2439 = vsel %vm2429, %v2425, 1326507024
  %v2440 = vsel %vm2428, %v2422, %v2439
  %v2441 = vsel %vm2427, %v2438, %v2440
  %v2442 = vshll.u32 %v2402, 8
  %v2443 = vmul.u32.u64.compose %v2442, %v2441
  %v2444 = vextract.low.u32 %v2443
  %v2445 = vextract.high.u32 %v2443
  %v2446 = vmul.u32.u64.compose %v2442, %v2437
  %v2447 = vextract.low.u32 %v2446
  %v2448 = vextract.high.u32 %v2446
  %v2449 = vmul.u32 %v2442, %v2433
  %v2450 = vadd.s32 %v2445, %v2447
  %vm2451 = vc.u32 %v2445, %v2447
  %v2452 = vadd.s32 %v2448, 1
  %v2453 = vsel %vm2451, %v2452, %v2448
  %v2454 = vadd.s32 %v2449, %v2453
  %v2455 = vadd.s32 %v2454, 536870912
  %v2456 = vshrl.u32 %v2455, 30
  %v2457 = vshll.u32 %v2456, 30
  %v2458 = vsub.s32 %v2454, %v2457
  %vm2459 = vcmp.lt.s32.totalorder %v2458, 0
  %v2460 = vsub.s32 0, %v2458
  %v2461 = vsel %vm2459, %v2460, %v2458
  %v2462 = vclz %v2461
  %v2463 = vsub.s32 %v2462, 2
  %vm2464 = vcmp.gt.s32.totalorder 0, %v2463
  %v2465 = vsel %vm2464, 0, %v2463
  %v2466 = vsub.s32 32, %v2465
  %v2467 = vshll.u32 %v2458, %v2465
  %v2468 = vshrl.u32 %v2450, %v2466
  %v2469 = vor.u32 %v2467, %v2468
  %v2470 = vsub.s32 4294967266, %v2465
  %v2471 = vadd.s32 %v2470, 127
  %v2472 = vshll.u32 %v2471, 23
  %v2473 = vor.u32 4788187, %v2472
  %v2474 = vand.u32 2147483647, %v2473
  %v2476 = vcvt.s32.f32 %v2469
  %v2477 = vmul.f32 %v2476, %v2474
  %v2478 = vxor.u32 %v2477, 2147483648
  %v2479 = vsel %vm2396, %v2478, %v2477
  %v2480 = vsub.s32 4, %v2456
  %v2481 = vsel %vm2396, %v2480, %v2456
  %v2482 = vsel %vm2395, %v2051, %v2479
  %v2483 = vsel %vm2395, 0, %v2481
  %v2484 = vcosq.f32.pop %v2482
  %v2485 = vsinq.f32.pop %v2482
  %vm2486 = vweird.f32 %v2051
  %v2487 = vadd.s32 %v2483, 3
  %v2488 = vand.u32 %v2487, 3
  %vm2489 = vcmp.lt.s32.totalorder %v2488, 2
  %vm2490 = vcmp.eq.s32.totalorder %v2488, 0
  %v2491 = vxor.u32 %v2485, 2147483648
  %v2492 = vsel %vm2490, %v2484, %v2491
  %vm2493 = vcmp.eq.s32.totalorder %v2488, 2
  %v2494 = vxor.u32 %v2484, 2147483648
  %v2495 = vsel %vm2493, %v2494, %v2485
  %v2496 = vsel %vm2489, %v2492, %v2495
  %v2497 = vsel %vm2486, nan, %v2496
  %v2498 = vand.u32 2147483647, %v2126
  %vm2499 = vcmp.le.f32.partialorder %v2498, 0.7853982
  %vm2500 = vcmp.lt.s32.totalorder %v2126, 0
  %v2501 = vand.u32 %v2126, 2139095040
  %v2502 = vshrl.u32 %v2501, 23
  %v2503 = vsub.s32 %v2502, 127
  %v2504 = vand.u32 2147483647, %v2126
  %v2505 = vand.u32 %v2504, 8388607
  %v2506 = vor.u32 %v2505, 8388608
  %v2507 = vsub.s32 0, %v2506
  %v2508 = vadd.s32 %v2503, 1
  %vm2509 = vcmp.gt.s32.totalorder %v2508, 0
  %v2510 = vsel %vm2509, %v2508, 0
  %v2511 = vshrl.u32 %v2510, 5
  %v2512 = vand.u32 %v2510, 31
  %v2513 = vsub.s32 32, %v2512
  %v2514 = vshrl.u32 683565275, %v2513
  %v2515 = vshll.u32 683565275, %v2512
  %v2516 = vshrl.u32 2475754826, %v2513
  %v2517 = vor.u32 %v2515, %v2516
  %v2518 = vshll.u32 2475754826, %v2512
  %v2519 = vshrl.u32 2131351028, %v2513
  %v2520 = vor.u32 %v2518, %v2519
  %v2521 = vshll.u32 2131351028, %v2512
  %v2522 = vshrl.u32 2102212464, %v2513
  %v2523 = vor.u32 %v2521, %v2522
  %v2524 = vshll.u32 2102212464, %v2512
  %v2525 = vshrl.u32 920167782, %v2513
  %v2526 = vor.u32 %v2524, %v2525
  %v2527 = vshll.u32 920167782, %v2512
  %v2528 = vshrl.u32 1326507024, %v2513
  %v2529 = vor.u32 %v2527, %v2528
  %vm2530 = vcmp.lt.s32.totalorder %v2511, 1
  %vm2531 = vcmp.lt.s32.totalorder %v2511, 2
  %vm2532 = vcmp.lt.s32.totalorder %v2511, 3
  %vm2533 = vcmp.lt.s32.totalorder %v2511, 4
  %v2534 = vsel %vm2530, %v2514, %v2517
  %v2535 = vsel %vm2533, %v2523, 2102212464
  %v2536 = vsel %vm2532, %v2520, %v2535
  %v2537 = vsel %vm2531, %v2534, %v2536
  %v2538 = vsel %vm2530, %v2517, %v2520
  %v2539 = vsel %vm2533, %v2526, 920167782
  %v2540 = vsel %vm2532, %v2523, %v2539
  %v2541 = vsel %vm2531, %v2538, %v2540
  %v2542 = vsel %vm2530, %v2520, %v2523
  %v2543 = vsel %vm2533, %v2529, 1326507024
  %v2544 = vsel %vm2532, %v2526, %v2543
  %v2545 = vsel %vm2531, %v2542, %v2544
  %v2546 = vshll.u32 %v2506, 8
  %v2547 = vmul.u32.u64.compose %v2546, %v2545
  %v2548 = vextract.low.u32 %v2547
  %v2549 = vextract.high.u32 %v2547
  %v2550 = vmul.u32.u64.compose %v2546, %v2541
  %v2551 = vextract.low.u32 %v2550
  %v2552 = vextract.high.u32 %v2550
  %v2553 = vmul.u32 %v2546, %v2537
  %v2554 = vadd.s32 %v2549, %v2551
  %vm2555 = vc.u32 %v2549, %v2551
  %v2556 = vadd.s32 %v2552, 1
  %v2557 = vsel %vm2555, %v2556, %v2552
  %v2558 = vadd.s32 %v2553, %v2557
  %v2559 = vadd.s32 %v2558, 536870912
  %v2560 = vshrl.u32 %v2559, 30
  %v2561 = vshll.u32 %v2560, 30
  %v2562 = vsub.s32 %v2558, %v2561
  %vm2563 = vcmp.lt.s32.totalorder %v2562, 0
  %v2564 = vsub.s32 0, %v2562
  %v2565 = vsel %vm2563, %v2564, %v2562
  %v2566 = vclz %v2565
  %v2567 = vsub.s32 %v2566, 2
  %vm2568 = vcmp.gt.s32.totalorder 0, %v2567
  %v2569 = vsel %vm2568, 0, %v2567
  %v2570 = vsub.s32 32, %v2569
  %v2571 = vshll.u32 %v2562, %v2569
  %v2572 = vshrl.u32 %v2554, %v2570
  %v2573 = vor.u32 %v2571, %v2572
  %v2574 = vsub.s32 4294967266, %v2569
  %v2575 = vadd.s32 %v2574, 127
  %v2576 = vshll.u32 %v2575, 23
  %v2577 = vor.u32 4788187, %v2576
  %v2578 = vand.u32 2147483647, %v2577
  %v2580 = vcvt.s32.f32 %v2573
  %v2581 = vmul.f32 %v2580, %v2578
  %v2582 = vxor.u32 %v2581, 2147483648
  %v2583 = vsel %vm2500, %v2582, %v2581
  %v2584 = vsub.s32 4, %v2560
  %v2585 = vsel %vm2500, %v2584, %v2560
  %v2586 = vsel %vm2499, %v2126, %v2583
  %v2587 = vsel %vm2499, 0, %v2585
  %v2588 = vcosq.f32.pop %v2586
  %v2589 = vsinq.f32.pop %v2586
  %vm2590 = vweird.f32 %v2126
  %v2591 = vadd.s32 %v2587, 3
  %v2592 = vand.u32 %v2591, 3
  %vm2593 = vcmp.lt.s32.totalorder %v2592, 2
  %vm2594 = vcmp.eq.s32.totalorder %v2592, 0
  %v2595 = vxor.u32 %v2589, 2147483648
  %v2596 = vsel %vm2594, %v2588, %v2595
  %vm2597 = vcmp.eq.s32.totalorder %v2592, 2
  %v2598 = vxor.u32 %v2588, 2147483648
  %v2599 = vsel %vm2597, %v2598, %v2589
  %v2600 = vsel %vm2593, %v2596, %v2599
  %v2601 = vsel %vm2590, nan, %v2600
  %v2602 = vand.u32 2147483647, %v2128
  %vm2603 = vcmp.le.f32.partialorder %v2602, 0.7853982
  %vm2604 = vcmp.lt.s32.totalorder %v2128, 0
  %v2605 = vand.u32 %v2128, 2139095040
  %v2606 = vshrl.u32 %v2605, 23
  %v2607 = vsub.s32 %v2606, 127
  %v2608 = vand.u32 2147483647, %v2128
  %v2609 = vand.u32 %v2608, 8388607
  %v2610 = vor.u32 %v2609, 8388608
  %v2611 = vsub.s32 0, %v2610
  %v2612 = vadd.s32 %v2607, 1
  %vm2613 = vcmp.gt.s32.totalorder %v2612, 0
  %v2614 = vsel %vm2613, %v2612, 0
  %v2615 = vshrl.u32 %v2614, 5
  %v2616 = vand.u32 %v2614, 31
  %v2617 = vsub.s32 32, %v2616
  %v2618 = vshrl.u32 683565275, %v2617
  %v2619 = vshll.u32 683565275, %v2616
  %v2620 = vshrl.u32 2475754826, %v2617
  %v2621 = vor.u32 %v2619, %v2620
  %v2622 = vshll.u32 2475754826, %v2616
  %v2623 = vshrl.u32 2131351028, %v2617
  %v2624 = vor.u32 %v2622, %v2623
  %v2625 = vshll.u32 2131351028, %v2616
  %v2626 = vshrl.u32 2102212464, %v2617
  %v2627 = vor.u32 %v2625, %v2626
  %v2628 = vshll.u32 2102212464, %v2616
  %v2629 = vshrl.u32 920167782, %v2617
  %v2630 = vor.u32 %v2628, %v2629
  %v2631 = vshll.u32 920167782, %v2616
  %v2632 = vshrl.u32 1326507024, %v2617
  %v2633 = vor.u32 %v2631, %v2632
  %vm2634 = vcmp.lt.s32.totalorder %v2615, 1
  %vm2635 = vcmp.lt.s32.totalorder %v2615, 2
  %vm2636 = vcmp.lt.s32.totalorder %v2615, 3
  %vm2637 = vcmp.lt.s32.totalorder %v2615, 4
  %v2638 = vsel %vm2634, %v2618, %v2621
  %v2639 = vsel %vm2637, %v2627, 2102212464
  %v2640 = vsel %vm2636, %v2624, %v2639
  %v2641 = vsel %vm2635, %v2638, %v2640
  %v2642 = vsel %vm2634, %v2621, %v2624
  %v2643 = vsel %vm2637, %v2630, 920167782
  %v2644 = vsel %vm2636, %v2627, %v2643
  %v2645 = vsel %vm2635, %v2642, %v2644
  %v2646 = vsel %vm2634, %v2624, %v2627
  %v2647 = vsel %vm2637, %v2633, 1326507024
  %v2648 = vsel %vm2636, %v2630, %v2647
  %v2649 = vsel %vm2635, %v2646, %v2648
  %v2650 = vshll.u32 %v2610, 8
  %v2651 = vmul.u32.u64.compose %v2650, %v2649
  %v2652 = vextract.low.u32 %v2651
  %v2653 = vextract.high.u32 %v2651
  %v2654 = vmul.u32.u64.compose %v2650, %v2645
  %v2655 = vextract.low.u32 %v2654
  %v2656 = vextract.high.u32 %v2654
  %v2657 = vmul.u32 %v2650, %v2641
  %v2658 = vadd.s32 %v2653, %v2655
  %vm2659 = vc.u32 %v2653, %v2655
  %v2660 = vadd.s32 %v2656, 1
  %v2661 = vsel %vm2659, %v2660, %v2656
  %v2662 = vadd.s32 %v2657, %v2661
  %v2663 = vadd.s32 %v2662, 536870912
  %v2664 = vshrl.u32 %v2663, 30
  %v2665 = vshll.u32 %v2664, 30
  %v2666 = vsub.s32 %v2662, %v2665
  %vm2667 = vcmp.lt.s32.totalorder %v2666, 0
  %v2668 = vsub.s32 0, %v2666
  %v2669 = vsel %vm2667, %v2668, %v2666
  %v2670 = vclz %v2669
  %v2671 = vsub.s32 %v2670, 2
  %vm2672 = vcmp.gt.s32.totalorder 0, %v2671
  %v2673 = vsel %vm2672, 0, %v2671
  %v2674 = vsub.s32 32, %v2673
  %v2675 = vshll.u32 %v2666, %v2673
  %v2676 = vshrl.u32 %v2658, %v2674
  %v2677 = vor.u32 %v2675, %v2676
  %v2678 = vsub.s32 4294967266, %v2673
  %v2679 = vadd.s32 %v2678, 127
  %v2680 = vshll.u32 %v2679, 23
  %v2681 = vor.u32 4788187, %v2680
  %v2682 = vand.u32 2147483647, %v2681
  %v2684 = vcvt.s32.f32 %v2677
  %v2685 = vmul.f32 %v2684, %v2682
  %v2686 = vxor.u32 %v2685, 2147483648
  %v2687 = vsel %vm2604, %v2686, %v2685
  %v2688 = vsub.s32 4, %v2664
  %v2689 = vsel %vm2604, %v2688, %v2664
  %v2690 = vsel %vm2603, %v2128, %v2687
  %v2691 = vsel %vm2603, 0, %v2689
  %v2692 = vcosq.f32.pop %v2690
  %v2693 = vsinq.f32.pop %v2690
  %vm2694 = vweird.f32 %v2128
  %v2695 = vadd.s32 %v2691, 3
  %v2696 = vand.u32 %v2695, 3
  %vm2697 = vcmp.lt.s32.totalorder %v2696, 2
  %vm2698 = vcmp.eq.s32.totalorder %v2696, 0
  %v2699 = vxor.u32 %v2693, 2147483648
  %v2700 = vsel %vm2698, %v2692, %v2699
  %vm2701 = vcmp.eq.s32.totalorder %v2696, 2
  %v2702 = vxor.u32 %v2692, 2147483648
  %v2703 = vsel %vm2701, %v2702, %v2693
  %v2704 = vsel %vm2697, %v2700, %v2703
  %v2705 = vsel %vm2694, nan, %v2704
  %v2706 = vand.u32 2147483647, %v2203
  %vm2707 = vcmp.le.f32.partialorder %v2706, 0.7853982
  %vm2708 = vcmp.lt.s32.totalorder %v2203, 0
  %v2709 = vand.u32 %v2203, 2139095040
  %v2710 = vshrl.u32 %v2709, 23
  %v2711 = vsub.s32 %v2710, 127
  %v2712 = vand.u32 2147483647, %v2203
  %v2713 = vand.u32 %v2712, 8388607
  %v2714 = vor.u32 %v2713, 8388608
  %v2715 = vsub.s32 0, %v2714
  %v2716 = vadd.s32 %v2711, 1
  %vm2717 = vcmp.gt.s32.totalorder %v2716, 0
  %v2718 = vsel %vm2717, %v2716, 0
  %v2719 = vshrl.u32 %v2718, 5
  %v2720 = vand.u32 %v2718, 31
  %v2721 = vsub.s32 32, %v2720
  %v2722 = vshrl.u32 683565275, %v2721
  %v2723 = vshll.u32 683565275, %v2720
  %v2724 = vshrl.u32 2475754826, %v2721
  %v2725 = vor.u32 %v2723, %v2724
  %v2726 = vshll.u32 2475754826, %v2720
  %v2727 = vshrl.u32 2131351028, %v2721
  %v2728 = vor.u32 %v2726, %v2727
  %v2729 = vshll.u32 2131351028, %v2720
  %v2730 = vshrl.u32 2102212464, %v2721
  %v2731 = vor.u32 %v2729, %v2730
  %v2732 = vshll.u32 2102212464, %v2720
  %v2733 = vshrl.u32 920167782, %v2721
  %v2734 = vor.u32 %v2732, %v2733
  %v2735 = vshll.u32 920167782, %v2720
  %v2736 = vshrl.u32 1326507024, %v2721
  %v2737 = vor.u32 %v2735, %v2736
  %vm2738 = vcmp.lt.s32.totalorder %v2719, 1
  %vm2739 = vcmp.lt.s32.totalorder %v2719, 2
  %vm2740 = vcmp.lt.s32.totalorder %v2719, 3
  %vm2741 = vcmp.lt.s32.totalorder %v2719, 4
  %v2742 = vsel %vm2738, %v2722, %v2725
  %v2743 = vsel %vm2741, %v2731, 2102212464
  %v2744 = vsel %vm2740, %v2728, %v2743
  %v2745 = vsel %vm2739, %v2742, %v2744
  %v2746 = vsel %vm2738, %v2725, %v2728
  %v2747 = vsel %vm2741, %v2734, 920167782
  %v2748 = vsel %vm2740, %v2731, %v2747
  %v2749 = vsel %vm2739, %v2746, %v2748
  %v2750 = vsel %vm2738, %v2728, %v2731
  %v2751 = vsel %vm2741, %v2737, 1326507024
  %v2752 = vsel %vm2740, %v2734, %v2751
  %v2753 = vsel %vm2739, %v2750, %v2752
  %v2754 = vshll.u32 %v2714, 8
  %v2755 = vmul.u32.u64.compose %v2754, %v2753
  %v2756 = vextract.low.u32 %v2755
  %v2757 = vextract.high.u32 %v2755
  %v2758 = vmul.u32.u64.compose %v2754, %v2749
  %v2759 = vextract.low.u32 %v2758
  %v2760 = vextract.high.u32 %v2758
  %v2761 = vmul.u32 %v2754, %v2745
  %v2762 = vadd.s32 %v2757, %v2759
  %vm2763 = vc.u32 %v2757, %v2759
  %v2764 = vadd.s32 %v2760, 1
  %v2765 = vsel %vm2763, %v2764, %v2760
  %v2766 = vadd.s32 %v2761, %v2765
  %v2767 = vadd.s32 %v2766, 536870912
  %v2768 = vshrl.u32 %v2767, 30
  %v2769 = vshll.u32 %v2768, 30
  %v2770 = vsub.s32 %v2766, %v2769
  %vm2771 = vcmp.lt.s32.totalorder %v2770, 0
  %v2772 = vsub.s32 0, %v2770
  %v2773 = vsel %vm2771, %v2772, %v2770
  %v2774 = vclz %v2773
  %v2775 = vsub.s32 %v2774, 2
  %vm2776 = vcmp.gt.s32.totalorder 0, %v2775
  %v2777 = vsel %vm2776, 0, %v2775
  %v2778 = vsub.s32 32, %v2777
  %v2779 = vshll.u32 %v2770, %v2777
  %v2780 = vshrl.u32 %v2762, %v2778
  %v2781 = vor.u32 %v2779, %v2780
  %v2782 = vsub.s32 4294967266, %v2777
  %v2783 = vadd.s32 %v2782, 127
  %v2784 = vshll.u32 %v2783, 23
  %v2785 = vor.u32 4788187, %v2784
  %v2786 = vand.u32 2147483647, %v2785
  %v2788 = vcvt.s32.f32 %v2781
  %v2789 = vmul.f32 %v2788, %v2786
  %v2790 = vxor.u32 %v2789, 2147483648
  %v2791 = vsel %vm2708, %v2790, %v2789
  %v2792 = vsub.s32 4, %v2768
  %v2793 = vsel %vm2708, %v2792, %v2768
  %v2794 = vsel %vm2707, %v2203, %v2791
  %v2795 = vsel %vm2707, 0, %v2793
  %v2796 = vcosq.f32.pop %v2794
  %v2797 = vsinq.f32.pop %v2794
  %vm2798 = vweird.f32 %v2203
  %v2799 = vadd.s32 %v2795, 3
  %v2800 = vand.u32 %v2799, 3
  %vm2801 = vcmp.lt.s32.totalorder %v2800, 2
  %vm2802 = vcmp.eq.s32.totalorder %v2800, 0
  %v2803 = vxor.u32 %v2797, 2147483648
  %v2804 = vsel %vm2802, %v2796, %v2803
  %vm2805 = vcmp.eq.s32.totalorder %v2800, 2
  %v2806 = vxor.u32 %v2796, 2147483648
  %v2807 = vsel %vm2805, %v2806, %v2797
  %v2808 = vsel %vm2801, %v2804, %v2807
  %v2809 = vsel %vm2798, nan, %v2808
  %v2810 = vand.u32 2147483647, %v2205
  %vm2811 = vcmp.le.f32.partialorder %v2810, 0.7853982
  %vm2812 = vcmp.lt.s32.totalorder %v2205, 0
  %v2813 = vand.u32 %v2205, 2139095040
  %v2814 = vshrl.u32 %v2813, 23
  %v2815 = vsub.s32 %v2814, 127
  %v2816 = vand.u32 2147483647, %v2205
  %v2817 = vand.u32 %v2816, 8388607
  %v2818 = vor.u32 %v2817, 8388608
  %v2819 = vsub.s32 0, %v2818
  %v2820 = vadd.s32 %v2815, 1
  %vm2821 = vcmp.gt.s32.totalorder %v2820, 0
  %v2822 = vsel %vm2821, %v2820, 0
  %v2823 = vshrl.u32 %v2822, 5
  %v2824 = vand.u32 %v2822, 31
  %v2825 = vsub.s32 32, %v2824
  %v2826 = vshrl.u32 683565275, %v2825
  %v2827 = vshll.u32 683565275, %v2824
  %v2828 = vshrl.u32 2475754826, %v2825
  %v2829 = vor.u32 %v2827, %v2828
  %v2830 = vshll.u32 2475754826, %v2824
  %v2831 = vshrl.u32 2131351028, %v2825
  %v2832 = vor.u32 %v2830, %v2831
  %v2833 = vshll.u32 2131351028, %v2824
  %v2834 = vshrl.u32 2102212464, %v2825
  %v2835 = vor.u32 %v2833, %v2834
  %v2836 = vshll.u32 2102212464, %v2824
  %v2837 = vshrl.u32 920167782, %v2825
  %v2838 = vor.u32 %v2836, %v2837
  %v2839 = vshll.u32 920167782, %v2824
  %v2840 = vshrl.u32 1326507024, %v2825
  %v2841 = vor.u32 %v2839, %v2840
  %vm2842 = vcmp.lt.s32.totalorder %v2823, 1
  %vm2843 = vcmp.lt.s32.totalorder %v2823, 2
  %vm2844 = vcmp.lt.s32.totalorder %v2823, 3
  %vm2845 = vcmp.lt.s32.totalorder %v2823, 4
  %v2846 = vsel %vm2842, %v2826, %v2829
  %v2847 = vsel %vm2845, %v2835, 2102212464
  %v2848 = vsel %vm2844, %v2832, %v2847
  %v2849 = vsel %vm2843, %v2846, %v2848
  %v2850 = vsel %vm2842, %v2829, %v2832
  %v2851 = vsel %vm2845, %v2838, 920167782
  %v2852 = vsel %vm2844, %v2835, %v2851
  %v2853 = vsel %vm2843, %v2850, %v2852
  %v2854 = vsel %vm2842, %v2832, %v2835
  %v2855 = vsel %vm2845, %v2841, 1326507024
  %v2856 = vsel %vm2844, %v2838, %v2855
  %v2857 = vsel %vm2843, %v2854, %v2856
  %v2858 = vshll.u32 %v2818, 8
  %v2859 = vmul.u32.u64.compose %v2858, %v2857
  %v2860 = vextract.low.u32 %v2859
  %v2861 = vextract.high.u32 %v2859
  %v2862 = vmul.u32.u64.compose %v2858, %v2853
  %v2863 = vextract.low.u32 %v2862
  %v2864 = vextract.high.u32 %v2862
  %v2865 = vmul.u32 %v2858, %v2849
  %v2866 = vadd.s32 %v2861, %v2863
  %vm2867 = vc.u32 %v2861, %v2863
  %v2868 = vadd.s32 %v2864, 1
  %v2869 = vsel %vm2867, %v2868, %v2864
  %v2870 = vadd.s32 %v2865, %v2869
  %v2871 = vadd.s32 %v2870, 536870912
  %v2872 = vshrl.u32 %v2871, 30
  %v2873 = vshll.u32 %v2872, 30
  %v2874 = vsub.s32 %v2870, %v2873
  %vm2875 = vcmp.lt.s32.totalorder %v2874, 0
  %v2876 = vsub.s32 0, %v2874
  %v2877 = vsel %vm2875, %v2876, %v2874
  %v2878 = vclz %v2877
  %v2879 = vsub.s32 %v2878, 2
  %vm2880 = vcmp.gt.s32.totalorder 0, %v2879
  %v2881 = vsel %vm2880, 0, %v2879
  %v2882 = vsub.s32 32, %v2881
  %v2883 = vshll.u32 %v2874, %v2881
  %v2884 = vshrl.u32 %v2866, %v2882
  %v2885 = vor.u32 %v2883, %v2884
  %v2886 = vsub.s32 4294967266, %v2881
  %v2887 = vadd.s32 %v2886, 127
  %v2888 = vshll.u32 %v2887, 23
  %v2889 = vor.u32 4788187, %v2888
  %v2890 = vand.u32 2147483647, %v2889
  %v2892 = vcvt.s32.f32 %v2885
  %v2893 = vmul.f32 %v2892, %v2890
  %v2894 = vxor.u32 %v2893, 2147483648
  %v2895 = vsel %vm2812, %v2894, %v2893
  %v2896 = vsub.s32 4, %v2872
  %v2897 = vsel %vm2812, %v2896, %v2872
  %v2898 = vsel %vm2811, %v2205, %v2895
  %v2899 = vsel %vm2811, 0, %v2897
  %v2900 = vcosq.f32.pop %v2898
  %v2901 = vsinq.f32.pop %v2898
  %vm2902 = vweird.f32 %v2205
  %v2903 = vadd.s32 %v2899, 3
  %v2904 = vand.u32 %v2903, 3
  %vm2905 = vcmp.lt.s32.totalorder %v2904, 2
  %vm2906 = vcmp.eq.s32.totalorder %v2904, 0
  %v2907 = vxor.u32 %v2901, 2147483648
  %v2908 = vsel %vm2906, %v2900, %v2907
  %vm2909 = vcmp.eq.s32.totalorder %v2904, 2
  %v2910 = vxor.u32 %v2900, 2147483648
  %v2911 = vsel %vm2909, %v2910, %v2901
  %v2912 = vsel %vm2905, %v2908, %v2911
  %v2913 = vsel %vm2902, nan, %v2912
  %v2914 = vand.u32 2147483647, %v2280
  %vm2915 = vcmp.le.f32.partialorder %v2914, 0.7853982
  %vm2916 = vcmp.lt.s32.totalorder %v2280, 0
  %v2917 = vand.u32 %v2280, 2139095040
  %v2918 = vshrl.u32 %v2917, 23
  %v2919 = vsub.s32 %v2918, 127
  %v2920 = vand.u32 2147483647, %v2280
  %v2921 = vand.u32 %v2920, 8388607
  %v2922 = vor.u32 %v2921, 8388608
  %v2923 = vsub.s32 0, %v2922
  %v2924 = vadd.s32 %v2919, 1
  %vm2925 = vcmp.gt.s32.totalorder %v2924, 0
  %v2926 = vsel %vm2925, %v2924, 0
  %v2927 = vshrl.u32 %v2926, 5
  %v2928 = vand.u32 %v2926, 31
  %v2929 = vsub.s32 32, %v2928
  %v2930 = vshrl.u32 683565275, %v2929
  %v2931 = vshll.u32 683565275, %v2928
  %v2932 = vshrl.u32 2475754826, %v2929
  %v2933 = vor.u32 %v2931, %v2932
  %v2934 = vshll.u32 2475754826, %v2928
  %v2935 = vshrl.u32 2131351028, %v2929
  %v2936 = vor.u32 %v2934, %v2935
  %v2937 = vshll.u32 2131351028, %v2928
  %v2938 = vshrl.u32 2102212464, %v2929
  %v2939 = vor.u32 %v2937, %v2938
  %v2940 = vshll.u32 2102212464, %v2928
  %v2941 = vshrl.u32 920167782, %v2929
  %v2942 = vor.u32 %v2940, %v2941
  %v2943 = vshll.u32 920167782, %v2928
  %v2944 = vshrl.u32 1326507024, %v2929
  %v2945 = vor.u32 %v2943, %v2944
  %vm2946 = vcmp.lt.s32.totalorder %v2927, 1
  %vm2947 = vcmp.lt.s32.totalorder %v2927, 2
  %vm2948 = vcmp.lt.s32.totalorder %v2927, 3
  %vm2949 = vcmp.lt.s32.totalorder %v2927, 4
  %v2950 = vsel %vm2946, %v2930, %v2933
  %v2951 = vsel %vm2949, %v2939, 2102212464
  %v2952 = vsel %vm2948, %v2936, %v2951
  %v2953 = vsel %vm2947, %v2950, %v2952
  %v2954 = vsel %vm2946, %v2933, %v2936
  %v2955 = vsel %vm2949, %v2942, 920167782
  %v2956 = vsel %vm2948, %v2939, %v2955
  %v2957 = vsel %vm2947, %v2954, %v2956
  %v2958 = vsel %vm2946, %v2936, %v2939
  %v2959 = vsel %vm2949, %v2945, 1326507024
  %v2960 = vsel %vm2948, %v2942, %v2959
  %v2961 = vsel %vm2947, %v2958, %v2960
  %v2962 = vshll.u32 %v2922, 8
  %v2963 = vmul.u32.u64.compose %v2962, %v2961
  %v2964 = vextract.low.u32 %v2963
  %v2965 = vextract.high.u32 %v2963
  %v2966 = vmul.u32.u64.compose %v2962, %v2957
  %v2967 = vextract.low.u32 %v2966
  %v2968 = vextract.high.u32 %v2966
  %v2969 = vmul.u32 %v2962, %v2953
  %v2970 = vadd.s32 %v2965, %v2967
  %vm2971 = vc.u32 %v2965, %v2967
  %v2972 = vadd.s32 %v2968, 1
  %v2973 = vsel %vm2971, %v2972, %v2968
  %v2974 = vadd.s32 %v2969, %v2973
  %v2975 = vadd.s32 %v2974, 536870912
  %v2976 = vshrl.u32 %v2975, 30
  %v2977 = vshll.u32 %v2976, 30
  %v2978 = vsub.s32 %v2974, %v2977
  %vm2979 = vcmp.lt.s32.totalorder %v2978, 0
  %v2980 = vsub.s32 0, %v2978
  %v2981 = vsel %vm2979, %v2980, %v2978
  %v2982 = vclz %v2981
  %v2983 = vsub.s32 %v2982, 2
  %vm2984 = vcmp.gt.s32.totalorder 0, %v2983
  %v2985 = vsel %vm2984, 0, %v2983
  %v2986 = vsub.s32 32, %v2985
  %v2987 = vshll.u32 %v2978, %v2985
  %v2988 = vshrl.u32 %v2970, %v2986
  %v2989 = vor.u32 %v2987, %v2988
  %v2990 = vsub.s32 4294967266, %v2985
  %v2991 = vadd.s32 %v2990, 127
  %v2992 = vshll.u32 %v2991, 23
  %v2993 = vor.u32 4788187, %v2992
  %v2994 = vand.u32 2147483647, %v2993
  %v2996 = vcvt.s32.f32 %v2989
  %v2997 = vmul.f32 %v2996, %v2994
  %v2998 = vxor.u32 %v2997, 2147483648
  %v2999 = vsel %vm2916, %v2998, %v2997
  %v3000 = vsub.s32 4, %v2976
  %v3001 = vsel %vm2916, %v3000, %v2976
  %v3002 = vsel %vm2915, %v2280, %v2999
  %v3003 = vsel %vm2915, 0, %v3001
  %v3004 = vcosq.f32.pop %v3002
  %v3005 = vsinq.f32.pop %v3002
  %vm3006 = vweird.f32 %v2280
  %v3007 = vadd.s32 %v3003, 3
  %v3008 = vand.u32 %v3007, 3
  %vm3009 = vcmp.lt.s32.totalorder %v3008, 2
  %vm3010 = vcmp.eq.s32.totalorder %v3008, 0
  %v3011 = vxor.u32 %v3005, 2147483648
  %v3012 = vsel %vm3010, %v3004, %v3011
  %vm3013 = vcmp.eq.s32.totalorder %v3008, 2
  %v3014 = vxor.u32 %v3004, 2147483648
  %v3015 = vsel %vm3013, %v3014, %v3005
  %v3016 = vsel %vm3009, %v3012, %v3015
  %v3017 = vsel %vm3006, nan, %v3016
  %v3018 = vand.u32 2147483647, %v2282
  %vm3019 = vcmp.le.f32.partialorder %v3018, 0.7853982
  %vm3020 = vcmp.lt.s32.totalorder %v2282, 0
  %v3021 = vand.u32 %v2282, 2139095040
  %v3022 = vshrl.u32 %v3021, 23
  %v3023 = vsub.s32 %v3022, 127
  %v3024 = vand.u32 2147483647, %v2282
  %v3025 = vand.u32 %v3024, 8388607
  %v3026 = vor.u32 %v3025, 8388608
  %v3027 = vsub.s32 0, %v3026
  %v3028 = vadd.s32 %v3023, 1
  %vm3029 = vcmp.gt.s32.totalorder %v3028, 0
  %v3030 = vsel %vm3029, %v3028, 0
  %v3031 = vshrl.u32 %v3030, 5
  %v3032 = vand.u32 %v3030, 31
  %v3033 = vsub.s32 32, %v3032
  %v3034 = vshrl.u32 683565275, %v3033
  %v3035 = vshll.u32 683565275, %v3032
  %v3036 = vshrl.u32 2475754826, %v3033
  %v3037 = vor.u32 %v3035, %v3036
  %v3038 = vshll.u32 2475754826, %v3032
  %v3039 = vshrl.u32 2131351028, %v3033
  %v3040 = vor.u32 %v3038, %v3039
  %v3041 = vshll.u32 2131351028, %v3032
  %v3042 = vshrl.u32 2102212464, %v3033
  %v3043 = vor.u32 %v3041, %v3042
  %v3044 = vshll.u32 2102212464, %v3032
  %v3045 = vshrl.u32 920167782, %v3033
  %v3046 = vor.u32 %v3044, %v3045
  %v3047 = vshll.u32 920167782, %v3032
  %v3048 = vshrl.u32 1326507024, %v3033
  %v3049 = vor.u32 %v3047, %v3048
  %vm3050 = vcmp.lt.s32.totalorder %v3031, 1
  %vm3051 = vcmp.lt.s32.totalorder %v3031, 2
  %vm3052 = vcmp.lt.s32.totalorder %v3031, 3
  %vm3053 = vcmp.lt.s32.totalorder %v3031, 4
  %v3054 = vsel %vm3050, %v3034, %v3037
  %v3055 = vsel %vm3053, %v3043, 2102212464
  %v3056 = vsel %vm3052, %v3040, %v3055
  %v3057 = vsel %vm3051, %v3054, %v3056
  %v3058 = vsel %vm3050, %v3037, %v3040
  %v3059 = vsel %vm3053, %v3046, 920167782
  %v3060 = vsel %vm3052, %v3043, %v3059
  %v3061 = vsel %vm3051, %v3058, %v3060
  %v3062 = vsel %vm3050, %v3040, %v3043
  %v3063 = vsel %vm3053, %v3049, 1326507024
  %v3064 = vsel %vm3052, %v3046, %v3063
  %v3065 = vsel %vm3051, %v3062, %v3064
  %v3066 = vshll.u32 %v3026, 8
  %v3067 = vmul.u32.u64.compose %v3066, %v3065
  %v3068 = vextract.low.u32 %v3067
  %v3069 = vextract.high.u32 %v3067
  %v3070 = vmul.u32.u64.compose %v3066, %v3061
  %v3071 = vextract.low.u32 %v3070
  %v3072 = vextract.high.u32 %v3070
  %v3073 = vmul.u32 %v3066, %v3057
  %v3074 = vadd.s32 %v3069, %v3071
  %vm3075 = vc.u32 %v3069, %v3071
  %v3076 = vadd.s32 %v3072, 1
  %v3077 = vsel %vm3075, %v3076, %v3072
  %v3078 = vadd.s32 %v3073, %v3077
  %v3079 = vadd.s32 %v3078, 536870912
  %v3080 = vshrl.u32 %v3079, 30
  %v3081 = vshll.u32 %v3080, 30
  %v3082 = vsub.s32 %v3078, %v3081
  %vm3083 = vcmp.lt.s32.totalorder %v3082, 0
  %v3084 = vsub.s32 0, %v3082
  %v3085 = vsel %vm3083, %v3084, %v3082
  %v3086 = vclz %v3085
  %v3087 = vsub.s32 %v3086, 2
  %vm3088 = vcmp.gt.s32.totalorder 0, %v3087
  %v3089 = vsel %vm3088, 0, %v3087
  %v3090 = vsub.s32 32, %v3089
  %v3091 = vshll.u32 %v3082, %v3089
  %v3092 = vshrl.u32 %v3074, %v3090
  %v3093 = vor.u32 %v3091, %v3092
  %v3094 = vsub.s32 4294967266, %v3089
  %v3095 = vadd.s32 %v3094, 127
  %v3096 = vshll.u32 %v3095, 23
  %v3097 = vor.u32 4788187, %v3096
  %v3098 = vand.u32 2147483647, %v3097
  %v3100 = vcvt.s32.f32 %v3093
  %v3101 = vmul.f32 %v3100, %v3098
  %v3102 = vxor.u32 %v3101, 2147483648
  %v3103 = vsel %vm3020, %v3102, %v3101
  %v3104 = vsub.s32 4, %v3080
  %v3105 = vsel %vm3020, %v3104, %v3080
  %v3106 = vsel %vm3019, %v2282, %v3103
  %v3107 = vsel %vm3019, 0, %v3105
  %v3108 = vcosq.f32.pop %v3106
  %v3109 = vsinq.f32.pop %v3106
  %vm3110 = vweird.f32 %v2282
  %v3111 = vadd.s32 %v3107, 3
  %v3112 = vand.u32 %v3111, 3
  %vm3113 = vcmp.lt.s32.totalorder %v3112, 2
  %vm3114 = vcmp.eq.s32.totalorder %v3112, 0
  %v3115 = vxor.u32 %v3109, 2147483648
  %v3116 = vsel %vm3114, %v3108, %v3115
  %vm3117 = vcmp.eq.s32.totalorder %v3112, 2
  %v3118 = vxor.u32 %v3108, 2147483648
  %v3119 = vsel %vm3117, %v3118, %v3109
  %v3120 = vsel %vm3113, %v3116, %v3119
  %v3121 = vsel %vm3110, nan, %v3120
  %v3122 = vand.u32 2147483647, %v2055
  %vm3123 = vcmp.le.f32.partialorder %v3122, 0.7853982
  %vm3124 = vcmp.lt.s32.totalorder %v2055, 0
  %v3125 = vand.u32 %v2055, 2139095040
  %v3126 = vshrl.u32 %v3125, 23
  %v3127 = vsub.s32 %v3126, 127
  %v3128 = vand.u32 2147483647, %v2055
  %v3129 = vand.u32 %v3128, 8388607
  %v3130 = vor.u32 %v3129, 8388608
  %v3131 = vsub.s32 0, %v3130
  %v3132 = vadd.s32 %v3127, 1
  %vm3133 = vcmp.gt.s32.totalorder %v3132, 0
  %v3134 = vsel %vm3133, %v3132, 0
  %v3135 = vshrl.u32 %v3134, 5
  %v3136 = vand.u32 %v3134, 31
  %v3137 = vsub.s32 32, %v3136
  %v3138 = vshrl.u32 683565275, %v3137
  %v3139 = vshll.u32 683565275, %v3136
  %v3140 = vshrl.u32 2475754826, %v3137
  %v3141 = vor.u32 %v3139, %v3140
  %v3142 = vshll.u32 2475754826, %v3136
  %v3143 = vshrl.u32 2131351028, %v3137
  %v3144 = vor.u32 %v3142, %v3143
  %v3145 = vshll.u32 2131351028, %v3136
  %v3146 = vshrl.u32 2102212464, %v3137
  %v3147 = vor.u32 %v3145, %v3146
  %v3148 = vshll.u32 2102212464, %v3136
  %v3149 = vshrl.u32 920167782, %v3137
  %v3150 = vor.u32 %v3148, %v3149
  %v3151 = vshll.u32 920167782, %v3136
  %v3152 = vshrl.u32 1326507024, %v3137
  %v3153 = vor.u32 %v3151, %v3152
  %vm3154 = vcmp.lt.s32.totalorder %v3135, 1
  %vm3155 = vcmp.lt.s32.totalorder %v3135, 2
  %vm3156 = vcmp.lt.s32.totalorder %v3135, 3
  %vm3157 = vcmp.lt.s32.totalorder %v3135, 4
  %v3158 = vsel %vm3154, %v3138, %v3141
  %v3159 = vsel %vm3157, %v3147, 2102212464
  %v3160 = vsel %vm3156, %v3144, %v3159
  %v3161 = vsel %vm3155, %v3158, %v3160
  %v3162 = vsel %vm3154, %v3141, %v3144
  %v3163 = vsel %vm3157, %v3150, 920167782
  %v3164 = vsel %vm3156, %v3147, %v3163
  %v3165 = vsel %vm3155, %v3162, %v3164
  %v3166 = vsel %vm3154, %v3144, %v3147
  %v3167 = vsel %vm3157, %v3153, 1326507024
  %v3168 = vsel %vm3156, %v3150, %v3167
  %v3169 = vsel %vm3155, %v3166, %v3168
  %v3170 = vshll.u32 %v3130, 8
  %v3171 = vmul.u32.u64.compose %v3170, %v3169
  %v3172 = vextract.low.u32 %v3171
  %v3173 = vextract.high.u32 %v3171
  %v3174 = vmul.u32.u64.compose %v3170, %v3165
  %v3175 = vextract.low.u32 %v3174
  %v3176 = vextract.high.u32 %v3174
  %v3177 = vmul.u32 %v3170, %v3161
  %v3178 = vadd.s32 %v3173, %v3175
  %vm3179 = vc.u32 %v3173, %v3175
  %v3180 = vadd.s32 %v3176, 1
  %v3181 = vsel %vm3179, %v3180, %v3176
  %v3182 = vadd.s32 %v3177, %v3181
  %v3183 = vadd.s32 %v3182, 536870912
  %v3184 = vshrl.u32 %v3183, 30
  %v3185 = vshll.u32 %v3184, 30
  %v3186 = vsub.s32 %v3182, %v3185
  %vm3187 = vcmp.lt.s32.totalorder %v3186, 0
  %v3188 = vsub.s32 0, %v3186
  %v3189 = vsel %vm3187, %v3188, %v3186
  %v3190 = vclz %v3189
  %v3191 = vsub.s32 %v3190, 2
  %vm3192 = vcmp.gt.s32.totalorder 0, %v3191
  %v3193 = vsel %vm3192, 0, %v3191
  %v3194 = vsub.s32 32, %v3193
  %v3195 = vshll.u32 %v3186, %v3193
  %v3196 = vshrl.u32 %v3178, %v3194
  %v3197 = vor.u32 %v3195, %v3196
  %v3198 = vsub.s32 4294967266, %v3193
  %v3199 = vadd.s32 %v3198, 127
  %v3200 = vshll.u32 %v3199, 23
  %v3201 = vor.u32 4788187, %v3200
  %v3202 = vand.u32 2147483647, %v3201
  %v3204 = vcvt.s32.f32 %v3197
  %v3205 = vmul.f32 %v3204, %v3202
  %v3206 = vxor.u32 %v3205, 2147483648
  %v3207 = vsel %vm3124, %v3206, %v3205
  %v3208 = vsub.s32 4, %v3184
  %v3209 = vsel %vm3124, %v3208, %v3184
  %v3210 = vsel %vm3123, %v2055, %v3207
  %v3211 = vsel %vm3123, 0, %v3209
  %v3212 = vcosq.f32.pop %v3210
  %v3213 = vsinq.f32.pop %v3210
  %vm3214 = vweird.f32 %v2055
  %v3215 = vadd.s32 %v3211, 3
  %v3216 = vand.u32 %v3215, 3
  %vm3217 = vcmp.lt.s32.totalorder %v3216, 2
  %vm3218 = vcmp.eq.s32.totalorder %v3216, 0
  %v3219 = vxor.u32 %v3213, 2147483648
  %v3220 = vsel %vm3218, %v3212, %v3219
  %vm3221 = vcmp.eq.s32.totalorder %v3216, 2
  %v3222 = vxor.u32 %v3212, 2147483648
  %v3223 = vsel %vm3221, %v3222, %v3213
  %v3224 = vsel %vm3217, %v3220, %v3223
  %v3225 = vsel %vm3214, nan, %v3224
  %v3226 = vand.u32 2147483647, %v2057
  %vm3227 = vcmp.le.f32.partialorder %v3226, 0.7853982
  %vm3228 = vcmp.lt.s32.totalorder %v2057, 0
  %v3229 = vand.u32 %v2057, 2139095040
  %v3230 = vshrl.u32 %v3229, 23
  %v3231 = vsub.s32 %v3230, 127
  %v3232 = vand.u32 2147483647, %v2057
  %v3233 = vand.u32 %v3232, 8388607
  %v3234 = vor.u32 %v3233, 8388608
  %v3235 = vsub.s32 0, %v3234
  %v3236 = vadd.s32 %v3231, 1
  %vm3237 = vcmp.gt.s32.totalorder %v3236, 0
  %v3238 = vsel %vm3237, %v3236, 0
  %v3239 = vshrl.u32 %v3238, 5
  %v3240 = vand.u32 %v3238, 31
  %v3241 = vsub.s32 32, %v3240
  %v3242 = vshrl.u32 683565275, %v3241
  %v3243 = vshll.u32 683565275, %v3240
  %v3244 = vshrl.u32 2475754826, %v3241
  %v3245 = vor.u32 %v3243, %v3244
  %v3246 = vshll.u32 2475754826, %v3240
  %v3247 = vshrl.u32 2131351028, %v3241
  %v3248 = vor.u32 %v3246, %v3247
  %v3249 = vshll.u32 2131351028, %v3240
  %v3250 = vshrl.u32 2102212464, %v3241
  %v3251 = vor.u32 %v3249, %v3250
  %v3252 = vshll.u32 2102212464, %v3240
  %v3253 = vshrl.u32 920167782, %v3241
  %v3254 = vor.u32 %v3252, %v3253
  %v3255 = vshll.u32 920167782, %v3240
  %v3256 = vshrl.u32 1326507024, %v3241
  %v3257 = vor.u32 %v3255, %v3256
  %vm3258 = vcmp.lt.s32.totalorder %v3239, 1
  %vm3259 = vcmp.lt.s32.totalorder %v3239, 2
  %vm3260 = vcmp.lt.s32.totalorder %v3239, 3
  %vm3261 = vcmp.lt.s32.totalorder %v3239, 4
  %v3262 = vsel %vm3258, %v3242, %v3245
  %v3263 = vsel %vm3261, %v3251, 2102212464
  %v3264 = vsel %vm3260, %v3248, %v3263
  %v3265 = vsel %vm3259, %v3262, %v3264
  %v3266 = vsel %vm3258, %v3245, %v3248
  %v3267 = vsel %vm3261, %v3254, 920167782
  %v3268 = vsel %vm3260, %v3251, %v3267
  %v3269 = vsel %vm3259, %v3266, %v3268
  %v3270 = vsel %vm3258, %v3248, %v3251
  %v3271 = vsel %vm3261, %v3257, 1326507024
  %v3272 = vsel %vm3260, %v3254, %v3271
  %v3273 = vsel %vm3259, %v3270, %v3272
  %v3274 = vshll.u32 %v3234, 8
  %v3275 = vmul.u32.u64.compose %v3274, %v3273
  %v3276 = vextract.low.u32 %v3275
  %v3277 = vextract.high.u32 %v3275
  %v3278 = vmul.u32.u64.compose %v3274, %v3269
  %v3279 = vextract.low.u32 %v3278
  %v3280 = vextract.high.u32 %v3278
  %v3281 = vmul.u32 %v3274, %v3265
  %v3282 = vadd.s32 %v3277, %v3279
  %vm3283 = vc.u32 %v3277, %v3279
  %v3284 = vadd.s32 %v3280, 1
  %v3285 = vsel %vm3283, %v3284, %v3280
  %v3286 = vadd.s32 %v3281, %v3285
  %v3287 = vadd.s32 %v3286, 536870912
  %v3288 = vshrl.u32 %v3287, 30
  %v3289 = vshll.u32 %v3288, 30
  %v3290 = vsub.s32 %v3286, %v3289
  %vm3291 = vcmp.lt.s32.totalorder %v3290, 0
  %v3292 = vsub.s32 0, %v3290
  %v3293 = vsel %vm3291, %v3292, %v3290
  %v3294 = vclz %v3293
  %v3295 = vsub.s32 %v3294, 2
  %vm3296 = vcmp.gt.s32.totalorder 0, %v3295
  %v3297 = vsel %vm3296, 0, %v3295
  %v3298 = vsub.s32 32, %v3297
  %v3299 = vshll.u32 %v3290, %v3297
  %v3300 = vshrl.u32 %v3282, %v3298
  %v3301 = vor.u32 %v3299, %v3300
  %v3302 = vsub.s32 4294967266, %v3297
  %v3303 = vadd.s32 %v3302, 127
  %v3304 = vshll.u32 %v3303, 23
  %v3305 = vor.u32 4788187, %v3304
  %v3306 = vand.u32 2147483647, %v3305
  %v3308 = vcvt.s32.f32 %v3301
  %v3309 = vmul.f32 %v3308, %v3306
  %v3310 = vxor.u32 %v3309, 2147483648
  %v3311 = vsel %vm3228, %v3310, %v3309
  %v3312 = vsub.s32 4, %v3288
  %v3313 = vsel %vm3228, %v3312, %v3288
  %v3314 = vsel %vm3227, %v2057, %v3311
  %v3315 = vsel %vm3227, 0, %v3313
  %v3316 = vcosq.f32.pop %v3314
  %v3317 = vsinq.f32.pop %v3314
  %vm3318 = vweird.f32 %v2057
  %v3319 = vadd.s32 %v3315, 3
  %v3320 = vand.u32 %v3319, 3
  %vm3321 = vcmp.lt.s32.totalorder %v3320, 2
  %vm3322 = vcmp.eq.s32.totalorder %v3320, 0
  %v3323 = vxor.u32 %v3317, 2147483648
  %v3324 = vsel %vm3322, %v3316, %v3323
  %vm3325 = vcmp.eq.s32.totalorder %v3320, 2
  %v3326 = vxor.u32 %v3316, 2147483648
  %v3327 = vsel %vm3325, %v3326, %v3317
  %v3328 = vsel %vm3321, %v3324, %v3327
  %v3329 = vsel %vm3318, nan, %v3328
  %v3330 = vand.u32 2147483647, %v2132
  %vm3331 = vcmp.le.f32.partialorder %v3330, 0.7853982
  %vm3332 = vcmp.lt.s32.totalorder %v2132, 0
  %v3333 = vand.u32 %v2132, 2139095040
  %v3334 = vshrl.u32 %v3333, 23
  %v3335 = vsub.s32 %v3334, 127
  %v3336 = vand.u32 2147483647, %v2132
  %v3337 = vand.u32 %v3336, 8388607
  %v3338 = vor.u32 %v3337, 8388608
  %v3339 = vsub.s32 0, %v3338
  %v3340 = vadd.s32 %v3335, 1
  %vm3341 = vcmp.gt.s32.totalorder %v3340, 0
  %v3342 = vsel %vm3341, %v3340, 0
  %v3343 = vshrl.u32 %v3342, 5
  %v3344 = vand.u32 %v3342, 31
  %v3345 = vsub.s32 32, %v3344
  %v3346 = vshrl.u32 683565275, %v3345
  %v3347 = vshll.u32 683565275, %v3344
  %v3348 = vshrl.u32 2475754826, %v3345
  %v3349 = vor.u32 %v3347, %v3348
  %v3350 = vshll.u32 2475754826, %v3344
  %v3351 = vshrl.u32 2131351028, %v3345
  %v3352 = vor.u32 %v3350, %v3351
  %v3353 = vshll.u32 2131351028, %v3344
  %v3354 = vshrl.u32 2102212464, %v3345
  %v3355 = vor.u32 %v3353, %v3354
  %v3356 = vshll.u32 2102212464, %v3344
  %v3357 = vshrl.u32 920167782, %v3345
  %v3358 = vor.u32 %v3356, %v3357
  %v3359 = vshll.u32 920167782, %v3344
  %v3360 = vshrl.u32 1326507024, %v3345
  %v3361 = vor.u32 %v3359, %v3360
  %vm3362 = vcmp.lt.s32.totalorder %v3343, 1
  %vm3363 = vcmp.lt.s32.totalorder %v3343, 2
  %vm3364 = vcmp.lt.s32.totalorder %v3343, 3
  %vm3365 = vcmp.lt.s32.totalorder %v3343, 4
  %v3366 = vsel %vm3362, %v3346, %v3349
  %v3367 = vsel %vm3365, %v3355, 2102212464
  %v3368 = vsel %vm3364, %v3352, %v3367
  %v3369 = vsel %vm3363, %v3366, %v3368
  %v3370 = vsel %vm3362, %v3349, %v3352
  %v3371 = vsel %vm3365, %v3358, 920167782
  %v3372 = vsel %vm3364, %v3355, %v3371
  %v3373 = vsel %vm3363, %v3370, %v3372
  %v3374 = vsel %vm3362, %v3352, %v3355
  %v3375 = vsel %vm3365, %v3361, 1326507024
  %v3376 = vsel %vm3364, %v3358, %v3375
  %v3377 = vsel %vm3363, %v3374, %v3376
  %v3378 = vshll.u32 %v3338, 8
  %v3379 = vmul.u32.u64.compose %v3378, %v3377
  %v3380 = vextract.low.u32 %v3379
  %v3381 = vextract.high.u32 %v3379
  %v3382 = vmul.u32.u64.compose %v3378, %v3373
  %v3383 = vextract.low.u32 %v3382
  %v3384 = vextract.high.u32 %v3382
  %v3385 = vmul.u32 %v3378, %v3369
  %v3386 = vadd.s32 %v3381, %v3383
  %vm3387 = vc.u32 %v3381, %v3383
  %v3388 = vadd.s32 %v3384, 1
  %v3389 = vsel %vm3387, %v3388, %v3384
  %v3390 = vadd.s32 %v3385, %v3389
  %v3391 = vadd.s32 %v3390, 536870912
  %v3392 = vshrl.u32 %v3391, 30
  %v3393 = vshll.u32 %v3392, 30
  %v3394 = vsub.s32 %v3390, %v3393
  %vm3395 = vcmp.lt.s32.totalorder %v3394, 0
  %v3396 = vsub.s32 0, %v3394
  %v3397 = vsel %vm3395, %v3396, %v3394
  %v3398 = vclz %v3397
  %v3399 = vsub.s32 %v3398, 2
  %vm3400 = vcmp.gt.s32.totalorder 0, %v3399
  %v3401 = vsel %vm3400, 0, %v3399
  %v3402 = vsub.s32 32, %v3401
  %v3403 = vshll.u32 %v3394, %v3401
  %v3404 = vshrl.u32 %v3386, %v3402
  %v3405 = vor.u32 %v3403, %v3404
  %v3406 = vsub.s32 4294967266, %v3401
  %v3407 = vadd.s32 %v3406, 127
  %v3408 = vshll.u32 %v3407, 23
  %v3409 = vor.u32 4788187, %v3408
  %v3410 = vand.u32 2147483647, %v3409
  %v3412 = vcvt.s32.f32 %v3405
  %v3413 = vmul.f32 %v3412, %v3410
  %v3414 = vxor.u32 %v3413, 2147483648
  %v3415 = vsel %vm3332, %v3414, %v3413
  %v3416 = vsub.s32 4, %v3392
  %v3417 = vsel %vm3332, %v3416, %v3392
  %v3418 = vsel %vm3331, %v2132, %v3415
  %v3419 = vsel %vm3331, 0, %v3417
  %v3420 = vcosq.f32.pop %v3418
  %v3421 = vsinq.f32.pop %v3418
  %vm3422 = vweird.f32 %v2132
  %v3423 = vadd.s32 %v3419, 3
  %v3424 = vand.u32 %v3423, 3
  %vm3425 = vcmp.lt.s32.totalorder %v3424, 2
  %vm3426 = vcmp.eq.s32.totalorder %v3424, 0
  %v3427 = vxor.u32 %v3421, 2147483648
  %v3428 = vsel %vm3426, %v3420, %v3427
  %vm3429 = vcmp.eq.s32.totalorder %v3424, 2
  %v3430 = vxor.u32 %v3420, 2147483648
  %v3431 = vsel %vm3429, %v3430, %v3421
  %v3432 = vsel %vm3425, %v3428, %v3431
  %v3433 = vsel %vm3422, nan, %v3432
  %v3434 = vand.u32 2147483647, %v2134
  %vm3435 = vcmp.le.f32.partialorder %v3434, 0.7853982
  %vm3436 = vcmp.lt.s32.totalorder %v2134, 0
  %v3437 = vand.u32 %v2134, 2139095040
  %v3438 = vshrl.u32 %v3437, 23
  %v3439 = vsub.s32 %v3438, 127
  %v3440 = vand.u32 2147483647, %v2134
  %v3441 = vand.u32 %v3440, 8388607
  %v3442 = vor.u32 %v3441, 8388608
  %v3443 = vsub.s32 0, %v3442
  %v3444 = vadd.s32 %v3439, 1
  %vm3445 = vcmp.gt.s32.totalorder %v3444, 0
  %v3446 = vsel %vm3445, %v3444, 0
  %v3447 = vshrl.u32 %v3446, 5
  %v3448 = vand.u32 %v3446, 31
  %v3449 = vsub.s32 32, %v3448
  %v3450 = vshrl.u32 683565275, %v3449
  %v3451 = vshll.u32 683565275, %v3448
  %v3452 = vshrl.u32 2475754826, %v3449
  %v3453 = vor.u32 %v3451, %v3452
  %v3454 = vshll.u32 2475754826, %v3448
  %v3455 = vshrl.u32 2131351028, %v3449
  %v3456 = vor.u32 %v3454, %v3455
  %v3457 = vshll.u32 2131351028, %v3448
  %v3458 = vshrl.u32 2102212464, %v3449
  %v3459 = vor.u32 %v3457, %v3458
  %v3460 = vshll.u32 2102212464, %v3448
  %v3461 = vshrl.u32 920167782, %v3449
  %v3462 = vor.u32 %v3460, %v3461
  %v3463 = vshll.u32 920167782, %v3448
  %v3464 = vshrl.u32 1326507024, %v3449
  %v3465 = vor.u32 %v3463, %v3464
  %vm3466 = vcmp.lt.s32.totalorder %v3447, 1
  %vm3467 = vcmp.lt.s32.totalorder %v3447, 2
  %vm3468 = vcmp.lt.s32.totalorder %v3447, 3
  %vm3469 = vcmp.lt.s32.totalorder %v3447, 4
  %v3470 = vsel %vm3466, %v3450, %v3453
  %v3471 = vsel %vm3469, %v3459, 2102212464
  %v3472 = vsel %vm3468, %v3456, %v3471
  %v3473 = vsel %vm3467, %v3470, %v3472
  %v3474 = vsel %vm3466, %v3453, %v3456
  %v3475 = vsel %vm3469, %v3462, 920167782
  %v3476 = vsel %vm3468, %v3459, %v3475
  %v3477 = vsel %vm3467, %v3474, %v3476
  %v3478 = vsel %vm3466, %v3456, %v3459
  %v3479 = vsel %vm3469, %v3465, 1326507024
  %v3480 = vsel %vm3468, %v3462, %v3479
  %v3481 = vsel %vm3467, %v3478, %v3480
  %v3482 = vshll.u32 %v3442, 8
  %v3483 = vmul.u32.u64.compose %v3482, %v3481
  %v3484 = vextract.low.u32 %v3483
  %v3485 = vextract.high.u32 %v3483
  %v3486 = vmul.u32.u64.compose %v3482, %v3477
  %v3487 = vextract.low.u32 %v3486
  %v3488 = vextract.high.u32 %v3486
  %v3489 = vmul.u32 %v3482, %v3473
  %v3490 = vadd.s32 %v3485, %v3487
  %vm3491 = vc.u32 %v3485, %v3487
  %v3492 = vadd.s32 %v3488, 1
  %v3493 = vsel %vm3491, %v3492, %v3488
  %v3494 = vadd.s32 %v3489, %v3493
  %v3495 = vadd.s32 %v3494, 536870912
  %v3496 = vshrl.u32 %v3495, 30
  %v3497 = vshll.u32 %v3496, 30
  %v3498 = vsub.s32 %v3494, %v3497
  %vm3499 = vcmp.lt.s32.totalorder %v3498, 0
  %v3500 = vsub.s32 0, %v3498
  %v3501 = vsel %vm3499, %v3500, %v3498
  %v3502 = vclz %v3501
  %v3503 = vsub.s32 %v3502, 2
  %vm3504 = vcmp.gt.s32.totalorder 0, %v3503
  %v3505 = vsel %vm3504, 0, %v3503
  %v3506 = vsub.s32 32, %v3505
  %v3507 = vshll.u32 %v3498, %v3505
  %v3508 = vshrl.u32 %v3490, %v3506
  %v3509 = vor.u32 %v3507, %v3508
  %v3510 = vsub.s32 4294967266, %v3505
  %v3511 = vadd.s32 %v3510, 127
  %v3512 = vshll.u32 %v3511, 23
  %v3513 = vor.u32 4788187, %v3512
  %v3514 = vand.u32 2147483647, %v3513
  %v3516 = vcvt.s32.f32 %v3509
  %v3517 = vmul.f32 %v3516, %v3514
  %v3518 = vxor.u32 %v3517, 2147483648
  %v3519 = vsel %vm3436, %v3518, %v3517
  %v3520 = vsub.s32 4, %v3496
  %v3521 = vsel %vm3436, %v3520, %v3496
  %v3522 = vsel %vm3435, %v2134, %v3519
  %v3523 = vsel %vm3435, 0, %v3521
  %v3524 = vcosq.f32.pop %v3522
  %v3525 = vsinq.f32.pop %v3522
  %vm3526 = vweird.f32 %v2134
  %v3527 = vadd.s32 %v3523, 3
  %v3528 = vand.u32 %v3527, 3
  %vm3529 = vcmp.lt.s32.totalorder %v3528, 2
  %vm3530 = vcmp.eq.s32.totalorder %v3528, 0
  %v3531 = vxor.u32 %v3525, 2147483648
  %v3532 = vsel %vm3530, %v3524, %v3531
  %vm3533 = vcmp.eq.s32.totalorder %v3528, 2
  %v3534 = vxor.u32 %v3524, 2147483648
  %v3535 = vsel %vm3533, %v3534, %v3525
  %v3536 = vsel %vm3529, %v3532, %v3535
  %v3537 = vsel %vm3526, nan, %v3536
  %v3538 = vand.u32 2147483647, %v2209
  %vm3539 = vcmp.le.f32.partialorder %v3538, 0.7853982
  %vm3540 = vcmp.lt.s32.totalorder %v2209, 0
  %v3541 = vand.u32 %v2209, 2139095040
  %v3542 = vshrl.u32 %v3541, 23
  %v3543 = vsub.s32 %v3542, 127
  %v3544 = vand.u32 2147483647, %v2209
  %v3545 = vand.u32 %v3544, 8388607
  %v3546 = vor.u32 %v3545, 8388608
  %v3547 = vsub.s32 0, %v3546
  %v3548 = vadd.s32 %v3543, 1
  %vm3549 = vcmp.gt.s32.totalorder %v3548, 0
  %v3550 = vsel %vm3549, %v3548, 0
  %v3551 = vshrl.u32 %v3550, 5
  %v3552 = vand.u32 %v3550, 31
  %v3553 = vsub.s32 32, %v3552
  %v3554 = vshrl.u32 683565275, %v3553
  %v3555 = vshll.u32 683565275, %v3552
  %v3556 = vshrl.u32 2475754826, %v3553
  %v3557 = vor.u32 %v3555, %v3556
  %v3558 = vshll.u32 2475754826, %v3552
  %v3559 = vshrl.u32 2131351028, %v3553
  %v3560 = vor.u32 %v3558, %v3559
  %v3561 = vshll.u32 2131351028, %v3552
  %v3562 = vshrl.u32 2102212464, %v3553
  %v3563 = vor.u32 %v3561, %v3562
  %v3564 = vshll.u32 2102212464, %v3552
  %v3565 = vshrl.u32 920167782, %v3553
  %v3566 = vor.u32 %v3564, %v3565
  %v3567 = vshll.u32 920167782, %v3552
  %v3568 = vshrl.u32 1326507024, %v3553
  %v3569 = vor.u32 %v3567, %v3568
  %vm3570 = vcmp.lt.s32.totalorder %v3551, 1
  %vm3571 = vcmp.lt.s32.totalorder %v3551, 2
  %vm3572 = vcmp.lt.s32.totalorder %v3551, 3
  %vm3573 = vcmp.lt.s32.totalorder %v3551, 4
  %v3574 = vsel %vm3570, %v3554, %v3557
  %v3575 = vsel %vm3573, %v3563, 2102212464
  %v3576 = vsel %vm3572, %v3560, %v3575
  %v3577 = vsel %vm3571, %v3574, %v3576
  %v3578 = vsel %vm3570, %v3557, %v3560
  %v3579 = vsel %vm3573, %v3566, 920167782
  %v3580 = vsel %vm3572, %v3563, %v3579
  %v3581 = vsel %vm3571, %v3578, %v3580
  %v3582 = vsel %vm3570, %v3560, %v3563
  %v3583 = vsel %vm3573, %v3569, 1326507024
  %v3584 = vsel %vm3572, %v3566, %v3583
  %v3585 = vsel %vm3571, %v3582, %v3584
  %v3586 = vshll.u32 %v3546, 8
  %v3587 = vmul.u32.u64.compose %v3586, %v3585
  %v3588 = vextract.low.u32 %v3587
  %v3589 = vextract.high.u32 %v3587
  %v3590 = vmul.u32.u64.compose %v3586, %v3581
  %v3591 = vextract.low.u32 %v3590
  %v3592 = vextract.high.u32 %v3590
  %v3593 = vmul.u32 %v3586, %v3577
  %v3594 = vadd.s32 %v3589, %v3591
  %vm3595 = vc.u32 %v3589, %v3591
  %v3596 = vadd.s32 %v3592, 1
  %v3597 = vsel %vm3595, %v3596, %v3592
  %v3598 = vadd.s32 %v3593, %v3597
  %v3599 = vadd.s32 %v3598, 536870912
  %v3600 = vshrl.u32 %v3599, 30
  %v3601 = vshll.u32 %v3600, 30
  %v3602 = vsub.s32 %v3598, %v3601
  %vm3603 = vcmp.lt.s32.totalorder %v3602, 0
  %v3604 = vsub.s32 0, %v3602
  %v3605 = vsel %vm3603, %v3604, %v3602
  %v3606 = vclz %v3605
  %v3607 = vsub.s32 %v3606, 2
  %vm3608 = vcmp.gt.s32.totalorder 0, %v3607
  %v3609 = vsel %vm3608, 0, %v3607
  %v3610 = vsub.s32 32, %v3609
  %v3611 = vshll.u32 %v3602, %v3609
  %v3612 = vshrl.u32 %v3594, %v3610
  %v3613 = vor.u32 %v3611, %v3612
  %v3614 = vsub.s32 4294967266, %v3609
  %v3615 = vadd.s32 %v3614, 127
  %v3616 = vshll.u32 %v3615, 23
  %v3617 = vor.u32 4788187, %v3616
  %v3618 = vand.u32 2147483647, %v3617
  %v3620 = vcvt.s32.f32 %v3613
  %v3621 = vmul.f32 %v3620, %v3618
  %v3622 = vxor.u32 %v3621, 2147483648
  %v3623 = vsel %vm3540, %v3622, %v3621
  %v3624 = vsub.s32 4, %v3600
  %v3625 = vsel %vm3540, %v3624, %v3600
  %v3626 = vsel %vm3539, %v2209, %v3623
  %v3627 = vsel %vm3539, 0, %v3625
  %v3628 = vcosq.f32.pop %v3626
  %v3629 = vsinq.f32.pop %v3626
  %vm3630 = vweird.f32 %v2209
  %v3631 = vadd.s32 %v3627, 3
  %v3632 = vand.u32 %v3631, 3
  %vm3633 = vcmp.lt.s32.totalorder %v3632, 2
  %vm3634 = vcmp.eq.s32.totalorder %v3632, 0
  %v3635 = vxor.u32 %v3629, 2147483648
  %v3636 = vsel %vm3634, %v3628, %v3635
  %vm3637 = vcmp.eq.s32.totalorder %v3632, 2
  %v3638 = vxor.u32 %v3628, 2147483648
  %v3639 = vsel %vm3637, %v3638, %v3629
  %v3640 = vsel %vm3633, %v3636, %v3639
  %v3641 = vsel %vm3630, nan, %v3640
  %v3642 = vand.u32 2147483647, %v2211
  %vm3643 = vcmp.le.f32.partialorder %v3642, 0.7853982
  %vm3644 = vcmp.lt.s32.totalorder %v2211, 0
  %v3645 = vand.u32 %v2211, 2139095040
  %v3646 = vshrl.u32 %v3645, 23
  %v3647 = vsub.s32 %v3646, 127
  %v3648 = vand.u32 2147483647, %v2211
  %v3649 = vand.u32 %v3648, 8388607
  %v3650 = vor.u32 %v3649, 8388608
  %v3651 = vsub.s32 0, %v3650
  %v3652 = vadd.s32 %v3647, 1
  %vm3653 = vcmp.gt.s32.totalorder %v3652, 0
  %v3654 = vsel %vm3653, %v3652, 0
  %v3655 = vshrl.u32 %v3654, 5
  %v3656 = vand.u32 %v3654, 31
  %v3657 = vsub.s32 32, %v3656
  %v3658 = vshrl.u32 683565275, %v3657
  %v3659 = vshll.u32 683565275, %v3656
  %v3660 = vshrl.u32 2475754826, %v3657
  %v3661 = vor.u32 %v3659, %v3660
  %v3662 = vshll.u32 2475754826, %v3656
  %v3663 = vshrl.u32 2131351028, %v3657
  %v3664 = vor.u32 %v3662, %v3663
  %v3665 = vshll.u32 2131351028, %v3656
  %v3666 = vshrl.u32 2102212464, %v3657
  %v3667 = vor.u32 %v3665, %v3666
  %v3668 = vshll.u32 2102212464, %v3656
  %v3669 = vshrl.u32 920167782, %v3657
  %v3670 = vor.u32 %v3668, %v3669
  %v3671 = vshll.u32 920167782, %v3656
  %v3672 = vshrl.u32 1326507024, %v3657
  %v3673 = vor.u32 %v3671, %v3672
  %vm3674 = vcmp.lt.s32.totalorder %v3655, 1
  %vm3675 = vcmp.lt.s32.totalorder %v3655, 2
  %vm3676 = vcmp.lt.s32.totalorder %v3655, 3
  %vm3677 = vcmp.lt.s32.totalorder %v3655, 4
  %v3678 = vsel %vm3674, %v3658, %v3661
  %v3679 = vsel %vm3677, %v3667, 2102212464
  %v3680 = vsel %vm3676, %v3664, %v3679
  %v3681 = vsel %vm3675, %v3678, %v3680
  %v3682 = vsel %vm3674, %v3661, %v3664
  %v3683 = vsel %vm3677, %v3670, 920167782
  %v3684 = vsel %vm3676, %v3667, %v3683
  %v3685 = vsel %vm3675, %v3682, %v3684
  %v3686 = vsel %vm3674, %v3664, %v3667
  %v3687 = vsel %vm3677, %v3673, 1326507024
  %v3688 = vsel %vm3676, %v3670, %v3687
  %v3689 = vsel %vm3675, %v3686, %v3688
  %v3690 = vshll.u32 %v3650, 8
  %v3691 = vmul.u32.u64.compose %v3690, %v3689
  %v3692 = vextract.low.u32 %v3691
  %v3693 = vextract.high.u32 %v3691
  %v3694 = vmul.u32.u64.compose %v3690, %v3685
  %v3695 = vextract.low.u32 %v3694
  %v3696 = vextract.high.u32 %v3694
  %v3697 = vmul.u32 %v3690, %v3681
  %v3698 = vadd.s32 %v3693, %v3695
  %vm3699 = vc.u32 %v3693, %v3695
  %v3700 = vadd.s32 %v3696, 1
  %v3701 = vsel %vm3699, %v3700, %v3696
  %v3702 = vadd.s32 %v3697, %v3701
  %v3703 = vadd.s32 %v3702, 536870912
  %v3704 = vshrl.u32 %v3703, 30
  %v3705 = vshll.u32 %v3704, 30
  %v3706 = vsub.s32 %v3702, %v3705
  %vm3707 = vcmp.lt.s32.totalorder %v3706, 0
  %v3708 = vsub.s32 0, %v3706
  %v3709 = vsel %vm3707, %v3708, %v3706
  %v3710 = vclz %v3709
  %v3711 = vsub.s32 %v3710, 2
  %vm3712 = vcmp.gt.s32.totalorder 0, %v3711
  %v3713 = vsel %vm3712, 0, %v3711
  %v3714 = vsub.s32 32, %v3713
  %v3715 = vshll.u32 %v3706, %v3713
  %v3716 = vshrl.u32 %v3698, %v3714
  %v3717 = vor.u32 %v3715, %v3716
  %v3718 = vsub.s32 4294967266, %v3713
  %v3719 = vadd.s32 %v3718, 127
  %v3720 = vshll.u32 %v3719, 23
  %v3721 = vor.u32 4788187, %v3720
  %v3722 = vand.u32 2147483647, %v3721
  %v3724 = vcvt.s32.f32 %v3717
  %v3725 = vmul.f32 %v3724, %v3722
  %v3726 = vxor.u32 %v3725, 2147483648
  %v3727 = vsel %vm3644, %v3726, %v3725
  %v3728 = vsub.s32 4, %v3704
  %v3729 = vsel %vm3644, %v3728, %v3704
  %v3730 = vsel %vm3643, %v2211, %v3727
  %v3731 = vsel %vm3643, 0, %v3729
  %v3732 = vcosq.f32.pop %v3730
  %v3733 = vsinq.f32.pop %v3730
  %vm3734 = vweird.f32 %v2211
  %v3735 = vadd.s32 %v3731, 3
  %v3736 = vand.u32 %v3735, 3
  %vm3737 = vcmp.lt.s32.totalorder %v3736, 2
  %vm3738 = vcmp.eq.s32.totalorder %v3736, 0
  %v3739 = vxor.u32 %v3733, 2147483648
  %v3740 = vsel %vm3738, %v3732, %v3739
  %vm3741 = vcmp.eq.s32.totalorder %v3736, 2
  %v3742 = vxor.u32 %v3732, 2147483648
  %v3743 = vsel %vm3741, %v3742, %v3733
  %v3744 = vsel %vm3737, %v3740, %v3743
  %v3745 = vsel %vm3734, nan, %v3744
  %v3746 = vand.u32 2147483647, %v2286
  %vm3747 = vcmp.le.f32.partialorder %v3746, 0.7853982
  %vm3748 = vcmp.lt.s32.totalorder %v2286, 0
  %v3749 = vand.u32 %v2286, 2139095040
  %v3750 = vshrl.u32 %v3749, 23
  %v3751 = vsub.s32 %v3750, 127
  %v3752 = vand.u32 2147483647, %v2286
  %v3753 = vand.u32 %v3752, 8388607
  %v3754 = vor.u32 %v3753, 8388608
  %v3755 = vsub.s32 0, %v3754
  %v3756 = vadd.s32 %v3751, 1
  %vm3757 = vcmp.gt.s32.totalorder %v3756, 0
  %v3758 = vsel %vm3757, %v3756, 0
  %v3759 = vshrl.u32 %v3758, 5
  %v3760 = vand.u32 %v3758, 31
  %v3761 = vsub.s32 32, %v3760
  %v3762 = vshrl.u32 683565275, %v3761
  %v3763 = vshll.u32 683565275, %v3760
  %v3764 = vshrl.u32 2475754826, %v3761
  %v3765 = vor.u32 %v3763, %v3764
  %v3766 = vshll.u32 2475754826, %v3760
  %v3767 = vshrl.u32 2131351028, %v3761
  %v3768 = vor.u32 %v3766, %v3767
  %v3769 = vshll.u32 2131351028, %v3760
  %v3770 = vshrl.u32 2102212464, %v3761
  %v3771 = vor.u32 %v3769, %v3770
  %v3772 = vshll.u32 2102212464, %v3760
  %v3773 = vshrl.u32 920167782, %v3761
  %v3774 = vor.u32 %v3772, %v3773
  %v3775 = vshll.u32 920167782, %v3760
  %v3776 = vshrl.u32 1326507024, %v3761
  %v3777 = vor.u32 %v3775, %v3776
  %vm3778 = vcmp.lt.s32.totalorder %v3759, 1
  %vm3779 = vcmp.lt.s32.totalorder %v3759, 2
  %vm3780 = vcmp.lt.s32.totalorder %v3759, 3
  %vm3781 = vcmp.lt.s32.totalorder %v3759, 4
  %v3782 = vsel %vm3778, %v3762, %v3765
  %v3783 = vsel %vm3781, %v3771, 2102212464
  %v3784 = vsel %vm3780, %v3768, %v3783
  %v3785 = vsel %vm3779, %v3782, %v3784
  %v3786 = vsel %vm3778, %v3765, %v3768
  %v3787 = vsel %vm3781, %v3774, 920167782
  %v3788 = vsel %vm3780, %v3771, %v3787
  %v3789 = vsel %vm3779, %v3786, %v3788
  %v3790 = vsel %vm3778, %v3768, %v3771
  %v3791 = vsel %vm3781, %v3777, 1326507024
  %v3792 = vsel %vm3780, %v3774, %v3791
  %v3793 = vsel %vm3779, %v3790, %v3792
  %v3794 = vshll.u32 %v3754, 8
  %v3795 = vmul.u32.u64.compose %v3794, %v3793
  %v3796 = vextract.low.u32 %v3795
  %v3797 = vextract.high.u32 %v3795
  %v3798 = vmul.u32.u64.compose %v3794, %v3789
  %v3799 = vextract.low.u32 %v3798
  %v3800 = vextract.high.u32 %v3798
  %v3801 = vmul.u32 %v3794, %v3785
  %v3802 = vadd.s32 %v3797, %v3799
  %vm3803 = vc.u32 %v3797, %v3799
  %v3804 = vadd.s32 %v3800, 1
  %v3805 = vsel %vm3803, %v3804, %v3800
  %v3806 = vadd.s32 %v3801, %v3805
  %v3807 = vadd.s32 %v3806, 536870912
  %v3808 = vshrl.u32 %v3807, 30
  %v3809 = vshll.u32 %v3808, 30
  %v3810 = vsub.s32 %v3806, %v3809
  %vm3811 = vcmp.lt.s32.totalorder %v3810, 0
  %v3812 = vsub.s32 0, %v3810
  %v3813 = vsel %vm3811, %v3812, %v3810
  %v3814 = vclz %v3813
  %v3815 = vsub.s32 %v3814, 2
  %vm3816 = vcmp.gt.s32.totalorder 0, %v3815
  %v3817 = vsel %vm3816, 0, %v3815
  %v3818 = vsub.s32 32, %v3817
  %v3819 = vshll.u32 %v3810, %v3817
  %v3820 = vshrl.u32 %v3802, %v3818
  %v3821 = vor.u32 %v3819, %v3820
  %v3822 = vsub.s32 4294967266, %v3817
  %v3823 = vadd.s32 %v3822, 127
  %v3824 = vshll.u32 %v3823, 23
  %v3825 = vor.u32 4788187, %v3824
  %v3826 = vand.u32 2147483647, %v3825
  %v3828 = vcvt.s32.f32 %v3821
  %v3829 = vmul.f32 %v3828, %v3826
  %v3830 = vxor.u32 %v3829, 2147483648
  %v3831 = vsel %vm3748, %v3830, %v3829
  %v3832 = vsub.s32 4, %v3808
  %v3833 = vsel %vm3748, %v3832, %v3808
  %v3834 = vsel %vm3747, %v2286, %v3831
  %v3835 = vsel %vm3747, 0, %v3833
  %v3836 = vcosq.f32.pop %v3834
  %v3837 = vsinq.f32.pop %v3834
  %vm3838 = vweird.f32 %v2286
  %v3839 = vadd.s32 %v3835, 3
  %v3840 = vand.u32 %v3839, 3
  %vm3841 = vcmp.lt.s32.totalorder %v3840, 2
  %vm3842 = vcmp.eq.s32.totalorder %v3840, 0
  %v3843 = vxor.u32 %v3837, 2147483648
  %v3844 = vsel %vm3842, %v3836, %v3843
  %vm3845 = vcmp.eq.s32.totalorder %v3840, 2
  %v3846 = vxor.u32 %v3836, 2147483648
  %v3847 = vsel %vm3845, %v3846, %v3837
  %v3848 = vsel %vm3841, %v3844, %v3847
  %v3849 = vsel %vm3838, nan, %v3848
  %v3850 = vand.u32 2147483647, %v2288
  %vm3851 = vcmp.le.f32.partialorder %v3850, 0.7853982
  %vm3852 = vcmp.lt.s32.totalorder %v2288, 0
  %v3853 = vand.u32 %v2288, 2139095040
  %v3854 = vshrl.u32 %v3853, 23
  %v3855 = vsub.s32 %v3854, 127
  %v3856 = vand.u32 2147483647, %v2288
  %v3857 = vand.u32 %v3856, 8388607
  %v3858 = vor.u32 %v3857, 8388608
  %v3859 = vsub.s32 0, %v3858
  %v3860 = vadd.s32 %v3855, 1
  %vm3861 = vcmp.gt.s32.totalorder %v3860, 0
  %v3862 = vsel %vm3861, %v3860, 0
  %v3863 = vshrl.u32 %v3862, 5
  %v3864 = vand.u32 %v3862, 31
  %v3865 = vsub.s32 32, %v3864
  %v3866 = vshrl.u32 683565275, %v3865
  %v3867 = vshll.u32 683565275, %v3864
  %v3868 = vshrl.u32 2475754826, %v3865
  %v3869 = vor.u32 %v3867, %v3868
  %v3870 = vshll.u32 2475754826, %v3864
  %v3871 = vshrl.u32 2131351028, %v3865
  %v3872 = vor.u32 %v3870, %v3871
  %v3873 = vshll.u32 2131351028, %v3864
  %v3874 = vshrl.u32 2102212464, %v3865
  %v3875 = vor.u32 %v3873, %v3874
  %v3876 = vshll.u32 2102212464, %v3864
  %v3877 = vshrl.u32 920167782, %v3865
  %v3878 = vor.u32 %v3876, %v3877
  %v3879 = vshll.u32 920167782, %v3864
  %v3880 = vshrl.u32 1326507024, %v3865
  %v3881 = vor.u32 %v3879, %v3880
  %vm3882 = vcmp.lt.s32.totalorder %v3863, 1
  %vm3883 = vcmp.lt.s32.totalorder %v3863, 2
  %vm3884 = vcmp.lt.s32.totalorder %v3863, 3
  %vm3885 = vcmp.lt.s32.totalorder %v3863, 4
  %v3886 = vsel %vm3882, %v3866, %v3869
  %v3887 = vsel %vm3885, %v3875, 2102212464
  %v3888 = vsel %vm3884, %v3872, %v3887
  %v3889 = vsel %vm3883, %v3886, %v3888
  %v3890 = vsel %vm3882, %v3869, %v3872
  %v3891 = vsel %vm3885, %v3878, 920167782
  %v3892 = vsel %vm3884, %v3875, %v3891
  %v3893 = vsel %vm3883, %v3890, %v3892
  %v3894 = vsel %vm3882, %v3872, %v3875
  %v3895 = vsel %vm3885, %v3881, 1326507024
  %v3896 = vsel %vm3884, %v3878, %v3895
  %v3897 = vsel %vm3883, %v3894, %v3896
  %v3898 = vshll.u32 %v3858, 8
  %v3899 = vmul.u32.u64.compose %v3898, %v3897
  %v3900 = vextract.low.u32 %v3899
  %v3901 = vextract.high.u32 %v3899
  %v3902 = vmul.u32.u64.compose %v3898, %v3893
  %v3903 = vextract.low.u32 %v3902
  %v3904 = vextract.high.u32 %v3902
  %v3905 = vmul.u32 %v3898, %v3889
  %v3906 = vadd.s32 %v3901, %v3903
  %vm3907 = vc.u32 %v3901, %v3903
  %v3908 = vadd.s32 %v3904, 1
  %v3909 = vsel %vm3907, %v3908, %v3904
  %v3910 = vadd.s32 %v3905, %v3909
  %v3911 = vadd.s32 %v3910, 536870912
  %v3912 = vshrl.u32 %v3911, 30
  %v3913 = vshll.u32 %v3912, 30
  %v3914 = vsub.s32 %v3910, %v3913
  %vm3915 = vcmp.lt.s32.totalorder %v3914, 0
  %v3916 = vsub.s32 0, %v3914
  %v3917 = vsel %vm3915, %v3916, %v3914
  %v3918 = vclz %v3917
  %v3919 = vsub.s32 %v3918, 2
  %vm3920 = vcmp.gt.s32.totalorder 0, %v3919
  %v3921 = vsel %vm3920, 0, %v3919
  %v3922 = vsub.s32 32, %v3921
  %v3923 = vshll.u32 %v3914, %v3921
  %v3924 = vshrl.u32 %v3906, %v3922
  %v3925 = vor.u32 %v3923, %v3924
  %v3926 = vsub.s32 4294967266, %v3921
  %v3927 = vadd.s32 %v3926, 127
  %v3928 = vshll.u32 %v3927, 23
  %v3929 = vor.u32 4788187, %v3928
  %v3930 = vand.u32 2147483647, %v3929
  %v3932 = vcvt.s32.f32 %v3925
  %v3933 = vmul.f32 %v3932, %v3930
  %v3934 = vxor.u32 %v3933, 2147483648
  %v3935 = vsel %vm3852, %v3934, %v3933
  %v3936 = vsub.s32 4, %v3912
  %v3937 = vsel %vm3852, %v3936, %v3912
  %v3938 = vsel %vm3851, %v2288, %v3935
  %v3939 = vsel %vm3851, 0, %v3937
  %v3940 = vcosq.f32.pop %v3938
  %v3941 = vsinq.f32.pop %v3938
  %vm3942 = vweird.f32 %v2288
  %v3943 = vadd.s32 %v3939, 3
  %v3944 = vand.u32 %v3943, 3
  %vm3945 = vcmp.lt.s32.totalorder %v3944, 2
  %vm3946 = vcmp.eq.s32.totalorder %v3944, 0
  %v3947 = vxor.u32 %v3941, 2147483648
  %v3948 = vsel %vm3946, %v3940, %v3947
  %vm3949 = vcmp.eq.s32.totalorder %v3944, 2
  %v3950 = vxor.u32 %v3940, 2147483648
  %v3951 = vsel %vm3949, %v3950, %v3941
  %v3952 = vsel %vm3945, %v3948, %v3951
  %v3953 = vsel %vm3942, nan, %v3952
  %v3954 = vld [vmem:[%s5] sm:$0xff]
  %v3955 = vld [vmem:[%s5 + $0x8] sm:$0x3]
  %3957 = vset.pattern.permute.xlu0 0
  %3958 = vperm.xlu0 %3957, %v3954
  %v3959 = vpop.permute.xlu0 %3958
  %3962 = vset.pattern.permute.xlu0 0
  %3963 = vperm.xlu0 %3962, %v3955
  %v3964 = vpop.permute.xlu0 %3963
  %v3966 = vmul.f32 %v3959, %v2393
  %v3967 = vmul.f32 %v3959, %v2497
  %v3968 = vmul.f32 %v3959, %v2601
  %v3969 = vmul.f32 %v3959, %v2705
  %v3970 = vmul.f32 %v3959, %v2809
  %v3971 = vmul.f32 %v3959, %v2913
  %v3972 = vmul.f32 %v3959, %v3017
  %v3973 = vmul.f32 %v3959, %v3121
  %v3974 = vmul.f32 %v3964, %v3225
  %v3975 = vmul.f32 %v3964, %v3329
  %v3976 = vmul.f32 %v3964, %v3433
  %v3977 = vmul.f32 %v3964, %v3537
  %v3978 = vmul.f32 %v3964, %v3641
  %v3979 = vmul.f32 %v3964, %v3745
  %v3980 = vmul.f32 %v3964, %v3849
  %v3981 = vmul.f32 %v3964, %v3953
  %v3982 = vsel %vm1957, %v3974, 0.0
  %v3983 = vadd.f32 %v3966, %v3982
  %v3984 = vrot.slane %v3983, 4
  %v3985 = vadd.f32 %v3983, %v3984
  %v3986 = vrot.slane %v3985, 2
  %v3987 = vadd.f32 %v3985, %v3986
  %v3988 = vrot.slane %v3987, 1
  %v3989 = vadd.f32 %v3987, %v3988
  %v3990 = vsel %vm1957, %v3975, 0.0
  %v3991 = vadd.f32 %v3967, %v3990
  %v3992 = vrot.slane %v3991, 4
  %v3993 = vadd.f32 %v3991, %v3992
  %v3994 = vrot.slane %v3993, 2
  %v3995 = vadd.f32 %v3993, %v3994
  %v3996 = vrot.slane %v3995, 1
  %v3997 = vadd.f32 %v3995, %v3996
  %v3998 = vsel %vm1957, %v3976, 0.0
  %v3999 = vadd.f32 %v3968, %v3998
  %v4000 = vrot.slane %v3999, 4
  %v4001 = vadd.f32 %v3999, %v4000
  %v4002 = vrot.slane %v4001, 2
  %v4003 = vadd.f32 %v4001, %v4002
  %v4004 = vrot.slane %v4003, 1
  %v4005 = vadd.f32 %v4003, %v4004
  %v4006 = vsel %vm1957, %v3977, 0.0
  %v4007 = vadd.f32 %v3969, %v4006
  %v4008 = vrot.slane %v4007, 4
  %v4009 = vadd.f32 %v4007, %v4008
  %v4010 = vrot.slane %v4009, 2
  %v4011 = vadd.f32 %v4009, %v4010
  %v4012 = vrot.slane %v4011, 1
  %v4013 = vadd.f32 %v4011, %v4012
  %v4014 = vsel %vm1957, %v3978, 0.0
  %v4015 = vadd.f32 %v3970, %v4014
  %v4016 = vrot.slane %v4015, 4
  %v4017 = vadd.f32 %v4015, %v4016
  %v4018 = vrot.slane %v4017, 2
  %v4019 = vadd.f32 %v4017, %v4018
  %v4020 = vrot.slane %v4019, 1
  %v4021 = vadd.f32 %v4019, %v4020
  %v4022 = vsel %vm1957, %v3979, 0.0
  %v4023 = vadd.f32 %v3971, %v4022
  %v4024 = vrot.slane %v4023, 4
  %v4025 = vadd.f32 %v4023, %v4024
  %v4026 = vrot.slane %v4025, 2
  %v4027 = vadd.f32 %v4025, %v4026
  %v4028 = vrot.slane %v4027, 1
  %v4029 = vadd.f32 %v4027, %v4028
  %v4030 = vsel %vm1957, %v3980, 0.0
  %v4031 = vadd.f32 %v3972, %v4030
  %v4032 = vrot.slane %v4031, 4
  %v4033 = vadd.f32 %v4031, %v4032
  %v4034 = vrot.slane %v4033, 2
  %v4035 = vadd.f32 %v4033, %v4034
  %v4036 = vrot.slane %v4035, 1
  %v4037 = vadd.f32 %v4035, %v4036
  %v4038 = vsel %vm1957, %v3981, 0.0
  %v4039 = vadd.f32 %v3973, %v4038
  %v4040 = vrot.slane %v4039, 4
  %v4041 = vadd.f32 %v4039, %v4040
  %v4042 = vrot.slane %v4041, 2
  %v4043 = vadd.f32 %v4041, %v4042
  %v4044 = vrot.slane %v4043, 1
  %v4045 = vadd.f32 %v4043, %v4044
  %v4046 = vcombine.high %v28, %v28
  %v4048 = vunpack.c.l.s4 1983009808
  %v4049 = vunpack.c.0.s8 %v4048
  %v4050 = vlaneseq
  %v4051 = vshrl.u32 %v4050, 7
  %v4052 = vsub.s32 %v4049, %v4051
  %v4053 = vrot.slane %v28, %v4052
  %v4055 = vunpack.c.l.s4 1983009808
  %v4056 = vunpack.c.0.s8 %v4055
  %v4057 = vlaneseq
  %v4058 = vshrl.u32 %v4057, 7
  %v4059 = vsub.s32 %v4056, %v4058
  %v4060 = vrot.slane %v4046, %v4059
  %v4061 = vcombine.high %v4053, %v4053
  %v4062 = vcombine.high %v4060, %v4060
  %v4063 = vcombine.high %v29, %v29
  %v4065 = vunpack.c.l.s4 1983009808
  %v4066 = vunpack.c.0.s8 %v4065
  %v4067 = vlaneseq
  %v4068 = vshrl.u32 %v4067, 7
  %v4069 = vsub.s32 %v4066, %v4068
  %v4070 = vrot.slane %v29, %v4069
  %v4072 = vunpack.c.l.s4 1983009808
  %v4073 = vunpack.c.0.s8 %v4072
  %v4074 = vlaneseq
  %v4075 = vshrl.u32 %v4074, 7
  %v4076 = vsub.s32 %v4073, %v4075
  %v4077 = vrot.slane %v4063, %v4076
  %v4078 = vcombine.high %v4070, %v4070
  %v4079 = vcombine.high %v4077, %v4077
  %v4088 = vmul.f32 %v3959, %v4053
  %v4089 = vmul.f32 %v3959, %v4061
  %v4090 = vmul.f32 %v3959, %v4060
  %v4091 = vmul.f32 %v3959, %v4062
  %v4092 = vmul.f32 %v3959, %v4070
  %v4093 = vmul.f32 %v3959, %v4078
  %v4094 = vmul.f32 %v3959, %v4077
  %v4095 = vmul.f32 %v3959, %v4079
  %v4096 = vsel %vm1957, %v4088, 0.0
  %v4097 = vrot.slane %v4096, 4
  %v4098 = vadd.f32 %v4096, %v4097
  %v4099 = vrot.slane %v4098, 2
  %v4100 = vadd.f32 %v4098, %v4099
  %v4101 = vrot.slane %v4100, 1
  %v4102 = vadd.f32 %v4100, %v4101
  %v4103 = vsel %vm1957, %v4089, 0.0
  %v4104 = vrot.slane %v4103, 4
  %v4105 = vadd.f32 %v4103, %v4104
  %v4106 = vrot.slane %v4105, 2
  %v4107 = vadd.f32 %v4105, %v4106
  %v4108 = vrot.slane %v4107, 1
  %v4109 = vadd.f32 %v4107, %v4108
  %v4110 = vsel %vm1957, %v4090, 0.0
  %v4111 = vrot.slane %v4110, 4
  %v4112 = vadd.f32 %v4110, %v4111
  %v4113 = vrot.slane %v4112, 2
  %v4114 = vadd.f32 %v4112, %v4113
  %v4115 = vrot.slane %v4114, 1
  %v4116 = vadd.f32 %v4114, %v4115
  %v4117 = vsel %vm1957, %v4091, 0.0
  %v4118 = vrot.slane %v4117, 4
  %v4119 = vadd.f32 %v4117, %v4118
  %v4120 = vrot.slane %v4119, 2
  %v4121 = vadd.f32 %v4119, %v4120
  %v4122 = vrot.slane %v4121, 1
  %v4123 = vadd.f32 %v4121, %v4122
  %v4124 = vsel %vm1957, %v4092, 0.0
  %v4125 = vrot.slane %v4124, 4
  %v4126 = vadd.f32 %v4124, %v4125
  %v4127 = vrot.slane %v4126, 2
  %v4128 = vadd.f32 %v4126, %v4127
  %v4129 = vrot.slane %v4128, 1
  %v4130 = vadd.f32 %v4128, %v4129
  %v4131 = vsel %vm1957, %v4093, 0.0
  %v4132 = vrot.slane %v4131, 4
  %v4133 = vadd.f32 %v4131, %v4132
  %v4134 = vrot.slane %v4133, 2
  %v4135 = vadd.f32 %v4133, %v4134
  %v4136 = vrot.slane %v4135, 1
  %v4137 = vadd.f32 %v4135, %v4136
  %v4138 = vsel %vm1957, %v4094, 0.0
  %v4139 = vrot.slane %v4138, 4
  %v4140 = vadd.f32 %v4138, %v4139
  %v4141 = vrot.slane %v4140, 2
  %v4142 = vadd.f32 %v4140, %v4141
  %v4143 = vrot.slane %v4142, 1
  %v4144 = vadd.f32 %v4142, %v4143
  %v4145 = vsel %vm1957, %v4095, 0.0
  %v4146 = vrot.slane %v4145, 4
  %v4147 = vadd.f32 %v4145, %v4146
  %v4148 = vrot.slane %v4147, 2
  %v4149 = vadd.f32 %v4147, %v4148
  %v4150 = vrot.slane %v4149, 1
  %v4151 = vadd.f32 %v4149, %v4150
  %v4152 = vadd.f32 %v3989, %v4102
  %v4153 = vadd.f32 %v3997, %v4109
  %v4154 = vadd.f32 %v4005, %v4116
  %v4155 = vadd.f32 %v4013, %v4123
  %v4156 = vadd.f32 %v4021, %v4130
  %v4157 = vadd.f32 %v4029, %v4137
  %v4158 = vadd.f32 %v4037, %v4144
  %v4159 = vadd.f32 %v4045, %v4151
  %v4160 = vld [vmem:[#allocation2] sm:$0x1]
  %4162 = vset.pattern.permute.xlu0 0
  %4163 = vperm.xlu0 %4162, %v4160
  %v4164 = vpop.permute.xlu0 %4163
  %v4166 = vlaneseq
  %v4167 = vshrl.u32 %v4166, 7
  %v4168 = vsub.s32 0, %v4167
  %v4169 = vrot.slane %v4164, %v4168
  %v4170 = vadd.f32 %v4152, %v4169
  %v4171 = vadd.f32 %v4153, %v4169
  %v4172 = vadd.f32 %v4154, %v4169
  %v4173 = vadd.f32 %v4155, %v4169
  %v4174 = vadd.f32 %v4156, %v4169
  %v4175 = vadd.f32 %v4157, %v4169
  %v4176 = vadd.f32 %v4158, %v4169
  %v4177 = vadd.f32 %v4159, %v4169
  %v4186 = vcombine.low %v4170, %v4171
  %v4187 = vcombine.low %v4172, %v4173
  %v4188 = vcombine.low %v4174, %v4175
  %v4189 = vcombine.low %v4176, %v4177
  %v4191 = vunpack.c.l.s4 1966171168
  %v4192 = vunpack.c.0.s8 %v4191
  %v4193 = vlaneseq
  %v4194 = vshrl.u32 %v4193, 7
  %v4195 = vsub.s32 %v4192, %v4194
  %v4196 = vrot.slane %v4186, %v4195
  %v4198 = vunpack.c.l.s4 1966171168
  %v4199 = vunpack.c.0.s8 %v4198
  %v4200 = vlaneseq
  %v4201 = vshrl.u32 %v4200, 7
  %v4202 = vsub.s32 %v4199, %v4201
  %v4203 = vrot.slane %v4187, %v4202
  %v4205 = vunpack.c.l.s4 1966171168
  %v4206 = vunpack.c.0.s8 %v4205
  %v4207 = vlaneseq
  %v4208 = vshrl.u32 %v4207, 7
  %v4209 = vsub.s32 %v4206, %v4208
  %v4210 = vrot.slane %v4188, %v4209
  %v4212 = vunpack.c.l.s4 1966171168
  %v4213 = vunpack.c.0.s8 %v4212
  %v4214 = vlaneseq
  %v4215 = vshrl.u32 %v4214, 7
  %v4216 = vsub.s32 %v4213, %v4215
  %v4217 = vrot.slane %v4189, %v4216
  %v4218 = vcombine.low %v4196, %v4203
  %v4219 = vcombine.low %v4210, %v4217
  %v4221 = vunpack.c.l.s4 1966171168
  %v4222 = vunpack.c.0.s8 %v4221
  %v4223 = vlaneseq
  %v4224 = vshrl.u32 %v4223, 7
  %v4225 = vsub.s32 %v4222, %v4224
  %v4226 = vrot.slane %v4218, %v4225
  %v4228 = vunpack.c.l.s4 1966171168
  %v4229 = vunpack.c.0.s8 %v4228
  %v4230 = vlaneseq
  %v4231 = vshrl.u32 %v4230, 7
  %v4232 = vsub.s32 %v4229, %v4231
  %v4233 = vrot.slane %v4219, %v4232
  %v4234 = vcombine.low %v4226, %v4233
  %4236 = vst [vmem:[%s7] sm:$0xff] %v4234
  // Predicated region
  $region30: #{netf_forward.1} parent=0 // pred_check
    _
  $region31: #{netf_forward.1} parent=0 // pred_check_branch
    %4238 = sbr.rel (0) target = $region33
  $region32: #{netf_forward.1} parent=0 // pred_region
    _
  $region33: #{netf_forward.1} parent=0 // pred_fallthru
    _
  // Predicated region
  $region34: #{netf_forward.1} parent=0 // pred_check
    _
  $region35: #{netf_forward.1} parent=0 // pred_check_branch
    %4240 = sbr.rel (0) target = $region37
  $region36: #{netf_forward.1} parent=0 // pred_region
    _
  $region37: #{netf_forward.1} parent=0 // pred_fallthru
    _

</llo_original>
